<compile_context>
chip_gen: v7x
topology: tpu7x:2x2x1
jax: 0.10.0
libtpu: 0.0.40
codegen_flags: <defaults>
</compile_context>

<pallas_src>
import functools

import jax
import jax.numpy as jnp
from jax.experimental import pallas as pl
from jax.experimental.pallas import tpu as pltpu

# ---- small, module-consistent config -----------------------------------------
VOCAB = 64
EMBED = 32          # embed_size
HIDDEN = 32         # hidden_size (also dim_feedforward of the encoder layer)
NUM_LAYERS = 2      # encoder layers == LSTM layers
NHEAD = 4
PAD_IDX = 0
BATCH = 2
SRC_LEN = 8
TGT_LEN = 8
VOCAB_PAD = 128     # lane-dense padded vocab for the fused output projection
GATE = 4 * HIDDEN   # LSTM gate width

assert EMBED == HIDDEN, "LSTM weight packing assumes embed_size == hidden_size"
assert GATE == VOCAB_PAD == 128, "decoder blob rows share a single 128-lane width"
assert EMBED % NHEAD == 0

_VMEM = pl.BlockSpec(memory_space=pltpu.MemorySpace.VMEM)


def _layernorm(x, g, b, eps=1e-5):
    mean = jnp.mean(x, axis=-1, keepdims=True)
    xc = x - mean
    var = jnp.mean(xc * xc, axis=-1, keepdims=True)
    return xc * jax.lax.rsqrt(var + eps) * g + b


# ---- single fused kernel: encoder (2 layers) + LSTM (T unrolled) + fc ----------
def _fused_forward_kernel(acts_ref, enc_ref, dec_ref, mem_ref, logits_ref, *,
                          num_layers, batch, src_len, tgt_len, embed, hidden):
    f32 = jnp.float32
    E, H, GH = embed, hidden, 4 * hidden
    B, S, T = batch, src_len, tgt_len
    n_src = B * S

    # ----- static slicers into the packed encoder blob -------------------------
    n_w = 6 * num_layers + 2
    bias_base = n_w * E

    def ew(idx):                                   # (E, E) weight matrix
        return enc_ref[idx * E:(idx + 1) * E, :]

    def eb(row):                                   # (1, E) bias / LayerNorm vector
        return enc_ref[bias_base + row:bias_base + row + 1, :]

    gred = ew(6 * num_layers)        # per-head reduce matrix (pre-scaled by 1/sqrt(hd))
    gexp = ew(6 * num_layers + 1)    # per-head expand matrix

    # ------------------ transformer encoder (layers unrolled) ------------------
    # Row layout: row b*S + s  <->  (original batch b = attended position,
    # original src position s = independent attention "batch").  The PyTorch
    # reference feeds batch-first data to a batch_first=False encoder, so the
    # attended axis has length B == 2; softmax over 2 keys is exact closed form.
    x = acts_ref[0:n_src, :]
    for l in range(num_layers):
        wq, wk, wv = ew(6 * l + 0), ew(6 * l + 1), ew(6 * l + 2)
        wo, w1, w2 = ew(6 * l + 3), ew(6 * l + 4), ew(6 * l + 5)
        bq, bk = eb(10 * l + 0), eb(10 * l + 1)
        bv, bo = eb(10 * l + 2), eb(10 * l + 3)
        g1, be1 = eb(10 * l + 4), eb(10 * l + 5)
        b1, b2 = eb(10 * l + 6), eb(10 * l + 7)
        g2, be2 = eb(10 * l + 8), eb(10 * l + 9)

        q = jnp.dot(x, wq, preferred_element_type=f32) + bq
        k = jnp.dot(x, wk, preferred_element_type=f32) + bk
        v = jnp.dot(x, wv, preferred_element_type=f32) + bv
        q0, q1 = q[0:S, :], q[S:2 * S, :]
        k0, k1 = k[0:S, :], k[S:2 * S, :]
        v0, v1 = v[0:S, :], v[S:2 * S, :]

        # All per-head scores with ONE reduce matmul over the head-indicator matrix.
        prods = jnp.concatenate([q0 * k0, q0 * k1, q1 * k0, q1 * k1], axis=0)   # (4S, E)
        sc = jnp.dot(prods, gred, preferred_element_type=f32)                   # (4S, E), head h in col h
        s00, s01 = sc[0:S, :], sc[S:2 * S, :]
        s10, s11 = sc[2 * S:3 * S, :], sc[3 * S:4 * S, :]
        # Closed-form softmax over the 2 attended positions (exact).
        p00 = jax.nn.sigmoid(s00 - s01)
        p10 = jax.nn.sigmoid(s10 - s11)
        pstk = jnp.concatenate([p00, 1.0 - p00, p10, 1.0 - p10], axis=0)        # (4S, E)
        pe = jnp.dot(pstk, gexp, preferred_element_type=f32)                    # broadcast over head lanes
        ctx = jnp.concatenate(
            [pe[0:S, :] * v0 + pe[S:2 * S, :] * v1,
             pe[2 * S:3 * S, :] * v0 + pe[3 * S:4 * S, :] * v1], axis=0)        # (B*S, E)

        attn = jnp.dot(ctx, wo, preferred_element_type=f32) + bo
        y = _layernorm(x + attn, g1, be1)
        ff = jnp.dot(jnp.maximum(jnp.dot(y, w1, preferred_element_type=f32) + b1, 0.0),
                     w2, preferred_element_type=f32) + b2
        x = _layernorm(y + ff, g2, be2)

    mem_ref[...] = x

    # ------------------ LSTM decoder (time loop unrolled) + fused fc -----------
    tgt2d = acts_ref[n_src:n_src + T * B, :]                 # (T*B, E), time-major rows
    w_ih0 = dec_ref[0:E, :]                                  # (E, 4H)
    w_hh0 = dec_ref[E:E + H, :]                              # (H, 4H)
    off = E + H
    w_fused = []
    for _ in range(1, num_layers):                           # [W_ih ; W_hh] stacked -> (2H, 4H)
        w_fused.append(dec_ref[off:off + 2 * H, :])
        off += 2 * H
    bias0 = dec_ref[off:off + 1, :]                          # layer-0 bias (folded into xproj)
    # Pre-broadcast layer>=1 biases ONCE, outside the unrolled time loop.
    b_up = [jnp.broadcast_to(dec_ref[off + l:off + l + 1, :], (B, GH))
            for l in range(1, num_layers)]
    off += num_layers
    off += (-off) % 8                                        # fc weights start 8-row aligned
    fcw = dec_ref[off:off + H, :]                            # (H, VOCAB_PAD)
    fcb = dec_ref[off + H:off + H + 1, :]                    # (1, VOCAB_PAD)

    # Hoisted layer-0 input projection (no dependence on the recurrence).
    xproj = jnp.dot(tgt2d, w_ih0, preferred_element_type=f32) + bias0

    def cell(gates, c_prev):
        # One full-width sigmoid + one full-width tanh (2 EUP passes instead of 4).
        sg = jax.nn.sigmoid(gates)
        th = jnp.tanh(gates)
        i_g, f_g, o_g = sg[:, 0:H], sg[:, H:2 * H], sg[:, 3 * H:4 * H]  # PyTorch order i,f,g,o
        g_g = th[:, 2 * H:3 * H]
        c_new = f_g * c_prev + i_g * g_g
        return o_g * jnp.tanh(c_new), c_new

    h = [jnp.zeros((B, H), f32) for _ in range(num_layers)]
    c = [jnp.zeros((B, H), f32) for _ in range(num_layers)]
    outs = []
    for t in range(T):                                       # fully unrolled recurrence
        g0 = xproj[t * B:(t + 1) * B, :] + jnp.dot(h[0], w_hh0, preferred_element_type=f32)
        h[0], c[0] = cell(g0, c[0])
        x_t = h[0]
        for l in range(1, num_layers):                       # inter-layer dropout = identity (eval)
            gl = jnp.dot(jnp.concatenate([x_t, h[l]], axis=-1), w_fused[l - 1],
                         preferred_element_type=f32) + b_up[l - 1]
            h[l], c[l] = cell(gl, c[l])
            x_t = h[l]
        outs.append(x_t)                                     # stays in registers (no scratch stores)

    out2d = jnp.concatenate(outs, axis=0)                    # (T*B, H)
    # Single lane-dense (T*B, 128) output projection + store.
    logits_ref[...] = jnp.dot(out2d, fcw, preferred_element_type=f32) + fcb


# ---- parameter init (deterministic, synthetic, kernel-ready packed layouts) ----
def init_params(key):
    ks = jax.random.split(key, 6)

    def u(k, shape, scale=0.1):
        return jax.random.uniform(k, shape, jnp.float32, -scale, scale)

    E, H, GH = EMBED, HIDDEN, GATE
    hd = E // NHEAD
    emb = u(ks[0], (VOCAB, E)).at[PAD_IDX].set(0.0)          # nn.Embedding zeroes padding_idx

    # ---- encoder blob: [14 (E,E) weight tiles ; 20 (E,) bias rows] -------------
    weights, biases = [], []
    kiter = iter(jax.random.split(ks[1], 8 * NUM_LAYERS))
    ones = jnp.ones((E,), jnp.float32)
    zeros = jnp.zeros((E,), jnp.float32)
    for _ in range(NUM_LAYERS):
        in_w = u(next(kiter), (3 * E, E))                    # torch in_proj_weight, rows [q;k;v]
        in_b = u(next(kiter), (3 * E,))
        out_w = u(next(kiter), (E, E))
        out_b = u(next(kiter), (E,))
        ff1_w = u(next(kiter), (HIDDEN, E))                  # dim_feedforward = hidden_size
        ff1_b = u(next(kiter), (HIDDEN,))
        ff2_w = u(next(kiter), (E, HIDDEN))
        ff2_b = u(next(kiter), (E,))
        weights += [in_w[:E].T, in_w[E:2 * E].T, in_w[2 * E:].T,
                    out_w.T, ff1_w.T, ff2_w.T]
        biases += [in_b[:E], in_b[E:2 * E], in_b[2 * E:], out_b,
                   ones, zeros, ff1_b, ff2_b, ones, zeros]
    # head indicator: ind[d, h] = 1 iff lane d belongs to head h (h < NHEAD)
    ind = (jnp.arange(E)[:, None] // hd == jnp.arange(E)[None, :]).astype(jnp.float32)
    weights += [ind * (1.0 / float(hd) ** 0.5),              # score reduce (scale folded in)
                ind.T]                                       # probability expand
    enc_blob = jnp.concatenate([jnp.concatenate(weights, axis=0),
                                jnp.stack(biases, axis=0)], axis=0)

    # ---- decoder blob (LSTM + fc), every row 128 lanes wide ---------------------
    klstm = jax.random.split(ks[2], 4 * NUM_LAYERS)
    w_ih = [u(klstm[4 * l + 0], (GH, E if l == 0 else H)).T for l in range(NUM_LAYERS)]
    w_hh = [u(klstm[4 * l + 1], (GH, H)).T for l in range(NUM_LAYERS)]
    bias = [u(klstm[4 * l + 2], (GH,)) + u(klstm[4 * l + 3], (GH,))  # b_ih + b_hh fused
            for l in range(NUM_LAYERS)]
    rows = [w_ih[0], w_hh[0]]
    for l in range(1, NUM_LAYERS):
        rows.append(jnp.concatenate([w_ih[l], w_hh[l]], axis=0))     # fused (2H, 4H)
    rows.append(jnp.stack(bias, axis=0))                             # (L, 4H)
    n_rows = sum(r.shape[0] for r in rows)
    pad = (-n_rows) % 8
    if pad:
        rows.append(jnp.zeros((pad, GH), jnp.float32))               # align fc weights to 8 rows
    fc_w = u(ks[3], (VOCAB, H))
    fc_b = u(ks[4], (VOCAB,))
    rows.append(jnp.zeros((H, VOCAB_PAD), jnp.float32).at[:, :VOCAB].set(fc_w.T))
    rows.append(jnp.zeros((1, VOCAB_PAD), jnp.float32).at[:, :VOCAB].set(fc_b))
    dec_blob = jnp.concatenate(rows, axis=0)

    return dict(embedding=emb, enc_blob=enc_blob, dec_blob=dec_blob)


# ---- full forward (matches Seq2SeqTransformer.forward) -------------------------
def seq2seq_forward(params, src_ids, tgt_ids):
    emb = params['embedding']
    src = emb[src_ids]                                        # (B, S, E) -- plain-JAX gather
    tgt = emb[tgt_ids]                                        # (B, T, E)
    B, S, E = src.shape
    T = tgt.shape[1]
    assert B == 2, "closed-form length-2 attention softmax assumes batch == 2"

    # Encoder activations stay batch-first-flattened (row = b*S + s); LSTM input
    # is time-major (row = t*B + b).  Both packed into ONE kernel input.
    acts = jnp.concatenate(
        [src.reshape(B * S, E),
         jnp.transpose(tgt, (1, 0, 2)).reshape(T * B, E)], axis=0)

    kernel = functools.partial(
        _fused_forward_kernel, num_layers=NUM_LAYERS, batch=B, src_len=S,
        tgt_len=T, embed=E, hidden=HIDDEN)

    mem2d, logits_pad = pl.pallas_call(
        kernel,
        out_shape=(jax.ShapeDtypeStruct((B * S, E), jnp.float32),
                   jax.ShapeDtypeStruct((T * B, VOCAB_PAD), jnp.float32)),
        in_specs=[_VMEM, _VMEM, _VMEM],
        out_specs=(_VMEM, _VMEM),
    )(acts, params['enc_blob'], params['dec_blob'])

    memory = mem2d.reshape(B, S, E)                           # (B, S, E), unused downstream
    logits = jnp.transpose(logits_pad.reshape(T, B, VOCAB_PAD),
                           (1, 0, 2))[..., :VOCAB]            # (B, T, VOCAB)
    return logits, memory


if __name__ == "__main__":
    key = jax.random.PRNGKey(0)
    k_src, k_tgt, k_params = jax.random.split(key, 3)
    src = jax.random.randint(k_src, (BATCH, SRC_LEN), 0, VOCAB, dtype=jnp.int32)
    tgt = jax.random.randint(k_tgt, (BATCH, TGT_LEN), 0, VOCAB, dtype=jnp.int32)
    params = init_params(k_params)

    logits, memory = seq2seq_forward(params, src, tgt)
    jax.block_until_ready(logits)
    jax.block_until_ready(memory)

    assert logits.shape == (BATCH, TGT_LEN, VOCAB), logits.shape
    assert memory.shape == (BATCH, SRC_LEN, EMBED), memory.shape
    print("KERNEL_OK")
</pallas_src>

<mosaic_0001>
module attributes {stable_mosaic.version = 11 : i64} {
  func.func @_fused_forward_kernel(%arg0: memref<32x32xf32, #tpu.memory_space<vmem>>, %arg1: memref<468x32xf32, #tpu.memory_space<vmem>>, %arg2: memref<169x128xf32, #tpu.memory_space<vmem>>, %arg3: memref<16x32xf32, #tpu.memory_space<vmem>>, %arg4: memref<16x128xf32, #tpu.memory_space<vmem>>) attributes {dimension_semantics = [], scalar_prefetch = 0 : i64, scratch_operands = 0 : i64, tpu.core_type = #tpu.core_type<tc>} {
    %c384 = arith.constant 384 : index
    %c0 = arith.constant 0 : index
    %0 = vector.load %arg1[%c384, %c0] : memref<468x32xf32, #tpu.memory_space<vmem>>, vector<32x32xf32>
    %c416 = arith.constant 416 : index
    %c0_0 = arith.constant 0 : index
    %1 = vector.load %arg1[%c416, %c0_0] : memref<468x32xf32, #tpu.memory_space<vmem>>, vector<32x32xf32>
    %c0_1 = arith.constant 0 : index
    %c0_2 = arith.constant 0 : index
    %2 = vector.load %arg0[%c0_1, %c0_2] : memref<32x32xf32, #tpu.memory_space<vmem>>, vector<16x32xf32>
    %c0_3 = arith.constant 0 : index
    %c0_4 = arith.constant 0 : index
    %3 = vector.load %arg1[%c0_3, %c0_4] : memref<468x32xf32, #tpu.memory_space<vmem>>, vector<32x32xf32>
    %c32 = arith.constant 32 : index
    %c0_5 = arith.constant 0 : index
    %4 = vector.load %arg1[%c32, %c0_5] : memref<468x32xf32, #tpu.memory_space<vmem>>, vector<32x32xf32>
    %c64 = arith.constant 64 : index
    %c0_6 = arith.constant 0 : index
    %5 = vector.load %arg1[%c64, %c0_6] : memref<468x32xf32, #tpu.memory_space<vmem>>, vector<32x32xf32>
    %c96 = arith.constant 96 : index
    %c0_7 = arith.constant 0 : index
    %6 = vector.load %arg1[%c96, %c0_7] : memref<468x32xf32, #tpu.memory_space<vmem>>, vector<32x32xf32>
    %c128 = arith.constant 128 : index
    %c0_8 = arith.constant 0 : index
    %7 = vector.load %arg1[%c128, %c0_8] : memref<468x32xf32, #tpu.memory_space<vmem>>, vector<32x32xf32>
    %c160 = arith.constant 160 : index
    %c0_9 = arith.constant 0 : index
    %8 = vector.load %arg1[%c160, %c0_9] : memref<468x32xf32, #tpu.memory_space<vmem>>, vector<32x32xf32>
    %c448 = arith.constant 448 : index
    %c0_10 = arith.constant 0 : index
    %9 = vector.load %arg1[%c448, %c0_10] : memref<468x32xf32, #tpu.memory_space<vmem>>, vector<1x32xf32>
    %c449 = arith.constant 449 : index
    %c0_11 = arith.constant 0 : index
    %10 = vector.load %arg1[%c449, %c0_11] : memref<468x32xf32, #tpu.memory_space<vmem>>, vector<1x32xf32>
    %c450 = arith.constant 450 : index
    %c0_12 = arith.constant 0 : index
    %11 = vector.load %arg1[%c450, %c0_12] : memref<468x32xf32, #tpu.memory_space<vmem>>, vector<1x32xf32>
    %c451 = arith.constant 451 : index
    %c0_13 = arith.constant 0 : index
    %12 = vector.load %arg1[%c451, %c0_13] : memref<468x32xf32, #tpu.memory_space<vmem>>, vector<1x32xf32>
    %c452 = arith.constant 452 : index
    %c0_14 = arith.constant 0 : index
    %13 = vector.load %arg1[%c452, %c0_14] : memref<468x32xf32, #tpu.memory_space<vmem>>, vector<1x32xf32>
    %c453 = arith.constant 453 : index
    %c0_15 = arith.constant 0 : index
    %14 = vector.load %arg1[%c453, %c0_15] : memref<468x32xf32, #tpu.memory_space<vmem>>, vector<1x32xf32>
    %c454 = arith.constant 454 : index
    %c0_16 = arith.constant 0 : index
    %15 = vector.load %arg1[%c454, %c0_16] : memref<468x32xf32, #tpu.memory_space<vmem>>, vector<1x32xf32>
    %c455 = arith.constant 455 : index
    %c0_17 = arith.constant 0 : index
    %16 = vector.load %arg1[%c455, %c0_17] : memref<468x32xf32, #tpu.memory_space<vmem>>, vector<1x32xf32>
    %c456 = arith.constant 456 : index
    %c0_18 = arith.constant 0 : index
    %17 = vector.load %arg1[%c456, %c0_18] : memref<468x32xf32, #tpu.memory_space<vmem>>, vector<1x32xf32>
    %c457 = arith.constant 457 : index
    %c0_19 = arith.constant 0 : index
    %18 = vector.load %arg1[%c457, %c0_19] : memref<468x32xf32, #tpu.memory_space<vmem>>, vector<1x32xf32>
    %cst = arith.constant dense<0.000000e+00> : vector<16x32xf32>
    %19 = tpu.matmul %2, %3, %cst {dimension_numbers = #tpu.dot_dimension_numbers<[1], [0], [0], [1], [0, 0, 1, 1], [], []>} : vector<16x32xf32>, vector<32x32xf32>, vector<16x32xf32> -> vector<16x32xf32>
    %20 = vector.broadcast %9 : vector<1x32xf32> to vector<16x32xf32>
    %21 = arith.addf %19, %20 : vector<16x32xf32>
    %cst_20 = arith.constant dense<0.000000e+00> : vector<16x32xf32>
    %22 = tpu.matmul %2, %4, %cst_20 {dimension_numbers = #tpu.dot_dimension_numbers<[1], [0], [0], [1], [0, 0, 1, 1], [], []>} : vector<16x32xf32>, vector<32x32xf32>, vector<16x32xf32> -> vector<16x32xf32>
    %23 = vector.broadcast %10 : vector<1x32xf32> to vector<16x32xf32>
    %24 = arith.addf %22, %23 : vector<16x32xf32>
    %cst_21 = arith.constant dense<0.000000e+00> : vector<16x32xf32>
    %25 = tpu.matmul %2, %5, %cst_21 {dimension_numbers = #tpu.dot_dimension_numbers<[1], [0], [0], [1], [0, 0, 1, 1], [], []>} : vector<16x32xf32>, vector<32x32xf32>, vector<16x32xf32> -> vector<16x32xf32>
    %26 = vector.broadcast %11 : vector<1x32xf32> to vector<16x32xf32>
    %27 = arith.addf %25, %26 : vector<16x32xf32>
    %28 = vector.extract_strided_slice %21 {offsets = [0, 0], sizes = [8, 32], strides = [1, 1]} : vector<16x32xf32> to vector<8x32xf32>
    %29 = vector.extract_strided_slice %21 {offsets = [8, 0], sizes = [8, 32], strides = [1, 1]} : vector<16x32xf32> to vector<8x32xf32>
    %30 = vector.extract_strided_slice %24 {offsets = [0, 0], sizes = [8, 32], strides = [1, 1]} : vector<16x32xf32> to vector<8x32xf32>
    %31 = vector.extract_strided_slice %24 {offsets = [8, 0], sizes = [8, 32], strides = [1, 1]} : vector<16x32xf32> to vector<8x32xf32>
    %32 = vector.extract_strided_slice %27 {offsets = [0, 0], sizes = [8, 32], strides = [1, 1]} : vector<16x32xf32> to vector<8x32xf32>
    %33 = vector.extract_strided_slice %27 {offsets = [8, 0], sizes = [8, 32], strides = [1, 1]} : vector<16x32xf32> to vector<8x32xf32>
    %34 = arith.mulf %28, %30 : vector<8x32xf32>
    %35 = arith.mulf %28, %31 : vector<8x32xf32>
    %36 = arith.mulf %29, %30 : vector<8x32xf32>
    %37 = arith.mulf %29, %31 : vector<8x32xf32>
    %38 = tpu.concatenate %34, %35, %36, %37 in 0 : vector<8x32xf32>, vector<8x32xf32>, vector<8x32xf32>, vector<8x32xf32> -> vector<32x32xf32>
    %cst_22 = arith.constant dense<0.000000e+00> : vector<32x32xf32>
    %39 = tpu.matmul %38, %0, %cst_22 {dimension_numbers = #tpu.dot_dimension_numbers<[1], [0], [0], [1], [0, 0, 1, 1], [], []>} : vector<32x32xf32>, vector<32x32xf32>, vector<32x32xf32> -> vector<32x32xf32>
    %40 = vector.extract_strided_slice %39 {offsets = [0, 0], sizes = [8, 32], strides = [1, 1]} : vector<32x32xf32> to vector<8x32xf32>
    %41 = vector.extract_strided_slice %39 {offsets = [8, 0], sizes = [8, 32], strides = [1, 1]} : vector<32x32xf32> to vector<8x32xf32>
    %42 = vector.extract_strided_slice %39 {offsets = [16, 0], sizes = [8, 32], strides = [1, 1]} : vector<32x32xf32> to vector<8x32xf32>
    %43 = vector.extract_strided_slice %39 {offsets = [24, 0], sizes = [8, 32], strides = [1, 1]} : vector<32x32xf32> to vector<8x32xf32>
    %44 = arith.subf %40, %41 : vector<8x32xf32>
    %45 = arith.negf %44 : vector<8x32xf32>
    %46 = math.exp %45 : vector<8x32xf32>
    %cst_23 = arith.constant 1.000000e+00 : f32
    %47 = vector.broadcast %cst_23 : f32 to vector<8x32xf32>
    %48 = arith.addf %47, %46 : vector<8x32xf32>
    %49 = arith.divf %47, %48 : vector<8x32xf32>
    %50 = arith.subf %42, %43 : vector<8x32xf32>
    %51 = arith.negf %50 : vector<8x32xf32>
    %52 = math.exp %51 : vector<8x32xf32>
    %cst_24 = arith.constant 1.000000e+00 : f32
    %53 = vector.broadcast %cst_24 : f32 to vector<8x32xf32>
    %54 = arith.addf %53, %52 : vector<8x32xf32>
    %55 = arith.divf %53, %54 : vector<8x32xf32>
    %cst_25 = arith.constant 1.000000e+00 : f32
    %56 = vector.broadcast %cst_25 : f32 to vector<8x32xf32>
    %57 = arith.subf %56, %49 : vector<8x32xf32>
    %cst_26 = arith.constant 1.000000e+00 : f32
    %58 = vector.broadcast %cst_26 : f32 to vector<8x32xf32>
    %59 = arith.subf %58, %55 : vector<8x32xf32>
    %60 = tpu.concatenate %49, %57, %55, %59 in 0 : vector<8x32xf32>, vector<8x32xf32>, vector<8x32xf32>, vector<8x32xf32> -> vector<32x32xf32>
    %cst_27 = arith.constant dense<0.000000e+00> : vector<32x32xf32>
    %61 = tpu.matmul %60, %1, %cst_27 {dimension_numbers = #tpu.dot_dimension_numbers<[1], [0], [0], [1], [0, 0, 1, 1], [], []>} : vector<32x32xf32>, vector<32x32xf32>, vector<32x32xf32> -> vector<32x32xf32>
    %62 = vector.extract_strided_slice %61 {offsets = [0, 0], sizes = [8, 32], strides = [1, 1]} : vector<32x32xf32> to vector<8x32xf32>
    %63 = arith.mulf %62, %32 : vector<8x32xf32>
    %64 = vector.extract_strided_slice %61 {offsets = [8, 0], sizes = [8, 32], strides = [1, 1]} : vector<32x32xf32> to vector<8x32xf32>
    %65 = arith.mulf %64, %33 : vector<8x32xf32>
    %66 = arith.addf %63, %65 : vector<8x32xf32>
    %67 = vector.extract_strided_slice %61 {offsets = [16, 0], sizes = [8, 32], strides = [1, 1]} : vector<32x32xf32> to vector<8x32xf32>
    %68 = arith.mulf %67, %32 : vector<8x32xf32>
    %69 = vector.extract_strided_slice %61 {offsets = [24, 0], sizes = [8, 32], strides = [1, 1]} : vector<32x32xf32> to vector<8x32xf32>
    %70 = arith.mulf %69, %33 : vector<8x32xf32>
    %71 = arith.addf %68, %70 : vector<8x32xf32>
    %72 = tpu.concatenate %66, %71 in 0 : vector<8x32xf32>, vector<8x32xf32> -> vector<16x32xf32>
    %cst_28 = arith.constant dense<0.000000e+00> : vector<16x32xf32>
    %73 = tpu.matmul %72, %6, %cst_28 {dimension_numbers = #tpu.dot_dimension_numbers<[1], [0], [0], [1], [0, 0, 1, 1], [], []>} : vector<16x32xf32>, vector<32x32xf32>, vector<16x32xf32> -> vector<16x32xf32>
    %74 = vector.broadcast %12 : vector<1x32xf32> to vector<16x32xf32>
    %75 = arith.addf %73, %74 : vector<16x32xf32>
    %76 = arith.addf %2, %75 : vector<16x32xf32>
    %cst_29 = arith.constant dense<0.000000e+00> : vector<16xf32>
    %77 = vector.multi_reduction <add>, %76, %cst_29 [1] : vector<16x32xf32> to vector<16xf32>
    %78 = vector.shape_cast %77 : vector<16xf32> to vector<16x1xf32>
    %cst_30 = arith.constant 3.200000e+01 : f32
    %79 = vector.broadcast %cst_30 : f32 to vector<16x1xf32>
    %80 = arith.divf %78, %79 : vector<16x1xf32>
    %81 = vector.broadcast %80 : vector<16x1xf32> to vector<16x32xf32>
    %82 = arith.subf %76, %81 : vector<16x32xf32>
    %83 = arith.mulf %82, %82 : vector<16x32xf32>
    %cst_31 = arith.constant dense<0.000000e+00> : vector<16xf32>
    %84 = vector.multi_reduction <add>, %83, %cst_31 [1] : vector<16x32xf32> to vector<16xf32>
    %85 = vector.shape_cast %84 : vector<16xf32> to vector<16x1xf32>
    %cst_32 = arith.constant 3.200000e+01 : f32
    %86 = vector.broadcast %cst_32 : f32 to vector<16x1xf32>
    %87 = arith.divf %85, %86 : vector<16x1xf32>
    %cst_33 = arith.constant 9.99999974E-6 : f32
    %88 = vector.broadcast %cst_33 : f32 to vector<16x1xf32>
    %89 = arith.addf %87, %88 : vector<16x1xf32>
    %90 = math.rsqrt %89 : vector<16x1xf32>
    %91 = vector.broadcast %90 : vector<16x1xf32> to vector<16x32xf32>
    %92 = arith.mulf %82, %91 : vector<16x32xf32>
    %93 = vector.broadcast %13 : vector<1x32xf32> to vector<16x32xf32>
    %94 = arith.mulf %92, %93 : vector<16x32xf32>
    %95 = vector.broadcast %14 : vector<1x32xf32> to vector<16x32xf32>
    %96 = arith.addf %94, %95 : vector<16x32xf32>
    %cst_34 = arith.constant dense<0.000000e+00> : vector<16x32xf32>
    %97 = tpu.matmul %96, %7, %cst_34 {dimension_numbers = #tpu.dot_dimension_numbers<[1], [0], [0], [1], [0, 0, 1, 1], [], []>} : vector<16x32xf32>, vector<32x32xf32>, vector<16x32xf32> -> vector<16x32xf32>
    %98 = vector.broadcast %15 : vector<1x32xf32> to vector<16x32xf32>
    %99 = arith.addf %97, %98 : vector<16x32xf32>
    %cst_35 = arith.constant 0.000000e+00 : f32
    %100 = vector.broadcast %cst_35 : f32 to vector<16x32xf32>
    %101 = arith.maximumf %99, %100 : vector<16x32xf32>
    %cst_36 = arith.constant dense<0.000000e+00> : vector<16x32xf32>
    %102 = tpu.matmul %101, %8, %cst_36 {dimension_numbers = #tpu.dot_dimension_numbers<[1], [0], [0], [1], [0, 0, 1, 1], [], []>} : vector<16x32xf32>, vector<32x32xf32>, vector<16x32xf32> -> vector<16x32xf32>
    %103 = vector.broadcast %16 : vector<1x32xf32> to vector<16x32xf32>
    %104 = arith.addf %102, %103 : vector<16x32xf32>
    %105 = arith.addf %96, %104 : vector<16x32xf32>
    %cst_37 = arith.constant dense<0.000000e+00> : vector<16xf32>
    %106 = vector.multi_reduction <add>, %105, %cst_37 [1] : vector<16x32xf32> to vector<16xf32>
    %107 = vector.shape_cast %106 : vector<16xf32> to vector<16x1xf32>
    %cst_38 = arith.constant 3.200000e+01 : f32
    %108 = vector.broadcast %cst_38 : f32 to vector<16x1xf32>
    %109 = arith.divf %107, %108 : vector<16x1xf32>
    %110 = vector.broadcast %109 : vector<16x1xf32> to vector<16x32xf32>
    %111 = arith.subf %105, %110 : vector<16x32xf32>
    %112 = arith.mulf %111, %111 : vector<16x32xf32>
    %cst_39 = arith.constant dense<0.000000e+00> : vector<16xf32>
    %113 = vector.multi_reduction <add>, %112, %cst_39 [1] : vector<16x32xf32> to vector<16xf32>
    %114 = vector.shape_cast %113 : vector<16xf32> to vector<16x1xf32>
    %cst_40 = arith.constant 3.200000e+01 : f32
    %115 = vector.broadcast %cst_40 : f32 to vector<16x1xf32>
    %116 = arith.divf %114, %115 : vector<16x1xf32>
    %cst_41 = arith.constant 9.99999974E-6 : f32
    %117 = vector.broadcast %cst_41 : f32 to vector<16x1xf32>
    %118 = arith.addf %116, %117 : vector<16x1xf32>
    %119 = math.rsqrt %118 : vector<16x1xf32>
    %120 = vector.broadcast %119 : vector<16x1xf32> to vector<16x32xf32>
    %121 = arith.mulf %111, %120 : vector<16x32xf32>
    %122 = vector.broadcast %17 : vector<1x32xf32> to vector<16x32xf32>
    %123 = arith.mulf %121, %122 : vector<16x32xf32>
    %124 = vector.broadcast %18 : vector<1x32xf32> to vector<16x32xf32>
    %125 = arith.addf %123, %124 : vector<16x32xf32>
    %c192 = arith.constant 192 : index
    %c0_42 = arith.constant 0 : index
    %126 = vector.load %arg1[%c192, %c0_42] : memref<468x32xf32, #tpu.memory_space<vmem>>, vector<32x32xf32>
    %c224 = arith.constant 224 : index
    %c0_43 = arith.constant 0 : index
    %127 = vector.load %arg1[%c224, %c0_43] : memref<468x32xf32, #tpu.memory_space<vmem>>, vector<32x32xf32>
    %c256 = arith.constant 256 : index
    %c0_44 = arith.constant 0 : index
    %128 = vector.load %arg1[%c256, %c0_44] : memref<468x32xf32, #tpu.memory_space<vmem>>, vector<32x32xf32>
    %c288 = arith.constant 288 : index
    %c0_45 = arith.constant 0 : index
    %129 = vector.load %arg1[%c288, %c0_45] : memref<468x32xf32, #tpu.memory_space<vmem>>, vector<32x32xf32>
    %c320 = arith.constant 320 : index
    %c0_46 = arith.constant 0 : index
    %130 = vector.load %arg1[%c320, %c0_46] : memref<468x32xf32, #tpu.memory_space<vmem>>, vector<32x32xf32>
    %c352 = arith.constant 352 : index
    %c0_47 = arith.constant 0 : index
    %131 = vector.load %arg1[%c352, %c0_47] : memref<468x32xf32, #tpu.memory_space<vmem>>, vector<32x32xf32>
    %c458 = arith.constant 458 : index
    %c0_48 = arith.constant 0 : index
    %132 = vector.load %arg1[%c458, %c0_48] : memref<468x32xf32, #tpu.memory_space<vmem>>, vector<1x32xf32>
    %c459 = arith.constant 459 : index
    %c0_49 = arith.constant 0 : index
    %133 = vector.load %arg1[%c459, %c0_49] : memref<468x32xf32, #tpu.memory_space<vmem>>, vector<1x32xf32>
    %c460 = arith.constant 460 : index
    %c0_50 = arith.constant 0 : index
    %134 = vector.load %arg1[%c460, %c0_50] : memref<468x32xf32, #tpu.memory_space<vmem>>, vector<1x32xf32>
    %c461 = arith.constant 461 : index
    %c0_51 = arith.constant 0 : index
    %135 = vector.load %arg1[%c461, %c0_51] : memref<468x32xf32, #tpu.memory_space<vmem>>, vector<1x32xf32>
    %c462 = arith.constant 462 : index
    %c0_52 = arith.constant 0 : index
    %136 = vector.load %arg1[%c462, %c0_52] : memref<468x32xf32, #tpu.memory_space<vmem>>, vector<1x32xf32>
    %c463 = arith.constant 463 : index
    %c0_53 = arith.constant 0 : index
    %137 = vector.load %arg1[%c463, %c0_53] : memref<468x32xf32, #tpu.memory_space<vmem>>, vector<1x32xf32>
    %c464 = arith.constant 464 : index
    %c0_54 = arith.constant 0 : index
    %138 = vector.load %arg1[%c464, %c0_54] : memref<468x32xf32, #tpu.memory_space<vmem>>, vector<1x32xf32>
    %c465 = arith.constant 465 : index
    %c0_55 = arith.constant 0 : index
    %139 = vector.load %arg1[%c465, %c0_55] : memref<468x32xf32, #tpu.memory_space<vmem>>, vector<1x32xf32>
    %c466 = arith.constant 466 : index
    %c0_56 = arith.constant 0 : index
    %140 = vector.load %arg1[%c466, %c0_56] : memref<468x32xf32, #tpu.memory_space<vmem>>, vector<1x32xf32>
    %c467 = arith.constant 467 : index
    %c0_57 = arith.constant 0 : index
    %141 = vector.load %arg1[%c467, %c0_57] : memref<468x32xf32, #tpu.memory_space<vmem>>, vector<1x32xf32>
    %cst_58 = arith.constant dense<0.000000e+00> : vector<16x32xf32>
    %142 = tpu.matmul %125, %126, %cst_58 {dimension_numbers = #tpu.dot_dimension_numbers<[1], [0], [0], [1], [0, 0, 1, 1], [], []>} : vector<16x32xf32>, vector<32x32xf32>, vector<16x32xf32> -> vector<16x32xf32>
    %143 = vector.broadcast %132 : vector<1x32xf32> to vector<16x32xf32>
    %144 = arith.addf %142, %143 : vector<16x32xf32>
    %cst_59 = arith.constant dense<0.000000e+00> : vector<16x32xf32>
    %145 = tpu.matmul %125, %127, %cst_59 {dimension_numbers = #tpu.dot_dimension_numbers<[1], [0], [0], [1], [0, 0, 1, 1], [], []>} : vector<16x32xf32>, vector<32x32xf32>, vector<16x32xf32> -> vector<16x32xf32>
    %146 = vector.broadcast %133 : vector<1x32xf32> to vector<16x32xf32>
    %147 = arith.addf %145, %146 : vector<16x32xf32>
    %cst_60 = arith.constant dense<0.000000e+00> : vector<16x32xf32>
    %148 = tpu.matmul %125, %128, %cst_60 {dimension_numbers = #tpu.dot_dimension_numbers<[1], [0], [0], [1], [0, 0, 1, 1], [], []>} : vector<16x32xf32>, vector<32x32xf32>, vector<16x32xf32> -> vector<16x32xf32>
    %149 = vector.broadcast %134 : vector<1x32xf32> to vector<16x32xf32>
    %150 = arith.addf %148, %149 : vector<16x32xf32>
    %151 = vector.extract_strided_slice %144 {offsets = [0, 0], sizes = [8, 32], strides = [1, 1]} : vector<16x32xf32> to vector<8x32xf32>
    %152 = vector.extract_strided_slice %144 {offsets = [8, 0], sizes = [8, 32], strides = [1, 1]} : vector<16x32xf32> to vector<8x32xf32>
    %153 = vector.extract_strided_slice %147 {offsets = [0, 0], sizes = [8, 32], strides = [1, 1]} : vector<16x32xf32> to vector<8x32xf32>
    %154 = vector.extract_strided_slice %147 {offsets = [8, 0], sizes = [8, 32], strides = [1, 1]} : vector<16x32xf32> to vector<8x32xf32>
    %155 = vector.extract_strided_slice %150 {offsets = [0, 0], sizes = [8, 32], strides = [1, 1]} : vector<16x32xf32> to vector<8x32xf32>
    %156 = vector.extract_strided_slice %150 {offsets = [8, 0], sizes = [8, 32], strides = [1, 1]} : vector<16x32xf32> to vector<8x32xf32>
    %157 = arith.mulf %151, %153 : vector<8x32xf32>
    %158 = arith.mulf %151, %154 : vector<8x32xf32>
    %159 = arith.mulf %152, %153 : vector<8x32xf32>
    %160 = arith.mulf %152, %154 : vector<8x32xf32>
    %161 = tpu.concatenate %157, %158, %159, %160 in 0 : vector<8x32xf32>, vector<8x32xf32>, vector<8x32xf32>, vector<8x32xf32> -> vector<32x32xf32>
    %cst_61 = arith.constant dense<0.000000e+00> : vector<32x32xf32>
    %162 = tpu.matmul %161, %0, %cst_61 {dimension_numbers = #tpu.dot_dimension_numbers<[1], [0], [0], [1], [0, 0, 1, 1], [], []>} : vector<32x32xf32>, vector<32x32xf32>, vector<32x32xf32> -> vector<32x32xf32>
    %163 = vector.extract_strided_slice %162 {offsets = [0, 0], sizes = [8, 32], strides = [1, 1]} : vector<32x32xf32> to vector<8x32xf32>
    %164 = vector.extract_strided_slice %162 {offsets = [8, 0], sizes = [8, 32], strides = [1, 1]} : vector<32x32xf32> to vector<8x32xf32>
    %165 = vector.extract_strided_slice %162 {offsets = [16, 0], sizes = [8, 32], strides = [1, 1]} : vector<32x32xf32> to vector<8x32xf32>
    %166 = vector.extract_strided_slice %162 {offsets = [24, 0], sizes = [8, 32], strides = [1, 1]} : vector<32x32xf32> to vector<8x32xf32>
    %167 = arith.subf %163, %164 : vector<8x32xf32>
    %168 = arith.negf %167 : vector<8x32xf32>
    %169 = math.exp %168 : vector<8x32xf32>
    %cst_62 = arith.constant 1.000000e+00 : f32
    %170 = vector.broadcast %cst_62 : f32 to vector<8x32xf32>
    %171 = arith.addf %170, %169 : vector<8x32xf32>
    %172 = arith.divf %170, %171 : vector<8x32xf32>
    %173 = arith.subf %165, %166 : vector<8x32xf32>
    %174 = arith.negf %173 : vector<8x32xf32>
    %175 = math.exp %174 : vector<8x32xf32>
    %cst_63 = arith.constant 1.000000e+00 : f32
    %176 = vector.broadcast %cst_63 : f32 to vector<8x32xf32>
    %177 = arith.addf %176, %175 : vector<8x32xf32>
    %178 = arith.divf %176, %177 : vector<8x32xf32>
    %cst_64 = arith.constant 1.000000e+00 : f32
    %179 = vector.broadcast %cst_64 : f32 to vector<8x32xf32>
    %180 = arith.subf %179, %172 : vector<8x32xf32>
    %cst_65 = arith.constant 1.000000e+00 : f32
    %181 = vector.broadcast %cst_65 : f32 to vector<8x32xf32>
    %182 = arith.subf %181, %178 : vector<8x32xf32>
    %183 = tpu.concatenate %172, %180, %178, %182 in 0 : vector<8x32xf32>, vector<8x32xf32>, vector<8x32xf32>, vector<8x32xf32> -> vector<32x32xf32>
    %cst_66 = arith.constant dense<0.000000e+00> : vector<32x32xf32>
    %184 = tpu.matmul %183, %1, %cst_66 {dimension_numbers = #tpu.dot_dimension_numbers<[1], [0], [0], [1], [0, 0, 1, 1], [], []>} : vector<32x32xf32>, vector<32x32xf32>, vector<32x32xf32> -> vector<32x32xf32>
    %185 = vector.extract_strided_slice %184 {offsets = [0, 0], sizes = [8, 32], strides = [1, 1]} : vector<32x32xf32> to vector<8x32xf32>
    %186 = arith.mulf %185, %155 : vector<8x32xf32>
    %187 = vector.extract_strided_slice %184 {offsets = [8, 0], sizes = [8, 32], strides = [1, 1]} : vector<32x32xf32> to vector<8x32xf32>
    %188 = arith.mulf %187, %156 : vector<8x32xf32>
    %189 = arith.addf %186, %188 : vector<8x32xf32>
    %190 = vector.extract_strided_slice %184 {offsets = [16, 0], sizes = [8, 32], strides = [1, 1]} : vector<32x32xf32> to vector<8x32xf32>
    %191 = arith.mulf %190, %155 : vector<8x32xf32>
    %192 = vector.extract_strided_slice %184 {offsets = [24, 0], sizes = [8, 32], strides = [1, 1]} : vector<32x32xf32> to vector<8x32xf32>
    %193 = arith.mulf %192, %156 : vector<8x32xf32>
    %194 = arith.addf %191, %193 : vector<8x32xf32>
    %195 = tpu.concatenate %189, %194 in 0 : vector<8x32xf32>, vector<8x32xf32> -> vector<16x32xf32>
    %cst_67 = arith.constant dense<0.000000e+00> : vector<16x32xf32>
    %196 = tpu.matmul %195, %129, %cst_67 {dimension_numbers = #tpu.dot_dimension_numbers<[1], [0], [0], [1], [0, 0, 1, 1], [], []>} : vector<16x32xf32>, vector<32x32xf32>, vector<16x32xf32> -> vector<16x32xf32>
    %197 = vector.broadcast %135 : vector<1x32xf32> to vector<16x32xf32>
    %198 = arith.addf %196, %197 : vector<16x32xf32>
    %199 = arith.addf %125, %198 : vector<16x32xf32>
    %cst_68 = arith.constant dense<0.000000e+00> : vector<16xf32>
    %200 = vector.multi_reduction <add>, %199, %cst_68 [1] : vector<16x32xf32> to vector<16xf32>
    %201 = vector.shape_cast %200 : vector<16xf32> to vector<16x1xf32>
    %cst_69 = arith.constant 3.200000e+01 : f32
    %202 = vector.broadcast %cst_69 : f32 to vector<16x1xf32>
    %203 = arith.divf %201, %202 : vector<16x1xf32>
    %204 = vector.broadcast %203 : vector<16x1xf32> to vector<16x32xf32>
    %205 = arith.subf %199, %204 : vector<16x32xf32>
    %206 = arith.mulf %205, %205 : vector<16x32xf32>
    %cst_70 = arith.constant dense<0.000000e+00> : vector<16xf32>
    %207 = vector.multi_reduction <add>, %206, %cst_70 [1] : vector<16x32xf32> to vector<16xf32>
    %208 = vector.shape_cast %207 : vector<16xf32> to vector<16x1xf32>
    %cst_71 = arith.constant 3.200000e+01 : f32
    %209 = vector.broadcast %cst_71 : f32 to vector<16x1xf32>
    %210 = arith.divf %208, %209 : vector<16x1xf32>
    %cst_72 = arith.constant 9.99999974E-6 : f32
    %211 = vector.broadcast %cst_72 : f32 to vector<16x1xf32>
    %212 = arith.addf %210, %211 : vector<16x1xf32>
    %213 = math.rsqrt %212 : vector<16x1xf32>
    %214 = vector.broadcast %213 : vector<16x1xf32> to vector<16x32xf32>
    %215 = arith.mulf %205, %214 : vector<16x32xf32>
    %216 = vector.broadcast %136 : vector<1x32xf32> to vector<16x32xf32>
    %217 = arith.mulf %215, %216 : vector<16x32xf32>
    %218 = vector.broadcast %137 : vector<1x32xf32> to vector<16x32xf32>
    %219 = arith.addf %217, %218 : vector<16x32xf32>
    %cst_73 = arith.constant dense<0.000000e+00> : vector<16x32xf32>
    %220 = tpu.matmul %219, %130, %cst_73 {dimension_numbers = #tpu.dot_dimension_numbers<[1], [0], [0], [1], [0, 0, 1, 1], [], []>} : vector<16x32xf32>, vector<32x32xf32>, vector<16x32xf32> -> vector<16x32xf32>
    %221 = vector.broadcast %138 : vector<1x32xf32> to vector<16x32xf32>
    %222 = arith.addf %220, %221 : vector<16x32xf32>
    %cst_74 = arith.constant 0.000000e+00 : f32
    %223 = vector.broadcast %cst_74 : f32 to vector<16x32xf32>
    %224 = arith.maximumf %222, %223 : vector<16x32xf32>
    %cst_75 = arith.constant dense<0.000000e+00> : vector<16x32xf32>
    %225 = tpu.matmul %224, %131, %cst_75 {dimension_numbers = #tpu.dot_dimension_numbers<[1], [0], [0], [1], [0, 0, 1, 1], [], []>} : vector<16x32xf32>, vector<32x32xf32>, vector<16x32xf32> -> vector<16x32xf32>
    %226 = vector.broadcast %139 : vector<1x32xf32> to vector<16x32xf32>
    %227 = arith.addf %225, %226 : vector<16x32xf32>
    %228 = arith.addf %219, %227 : vector<16x32xf32>
    %cst_76 = arith.constant dense<0.000000e+00> : vector<16xf32>
    %229 = vector.multi_reduction <add>, %228, %cst_76 [1] : vector<16x32xf32> to vector<16xf32>
    %230 = vector.shape_cast %229 : vector<16xf32> to vector<16x1xf32>
    %cst_77 = arith.constant 3.200000e+01 : f32
    %231 = vector.broadcast %cst_77 : f32 to vector<16x1xf32>
    %232 = arith.divf %230, %231 : vector<16x1xf32>
    %233 = vector.broadcast %232 : vector<16x1xf32> to vector<16x32xf32>
    %234 = arith.subf %228, %233 : vector<16x32xf32>
    %235 = arith.mulf %234, %234 : vector<16x32xf32>
    %cst_78 = arith.constant dense<0.000000e+00> : vector<16xf32>
    %236 = vector.multi_reduction <add>, %235, %cst_78 [1] : vector<16x32xf32> to vector<16xf32>
    %237 = vector.shape_cast %236 : vector<16xf32> to vector<16x1xf32>
    %cst_79 = arith.constant 3.200000e+01 : f32
    %238 = vector.broadcast %cst_79 : f32 to vector<16x1xf32>
    %239 = arith.divf %237, %238 : vector<16x1xf32>
    %cst_80 = arith.constant 9.99999974E-6 : f32
    %240 = vector.broadcast %cst_80 : f32 to vector<16x1xf32>
    %241 = arith.addf %239, %240 : vector<16x1xf32>
    %242 = math.rsqrt %241 : vector<16x1xf32>
    %243 = vector.broadcast %242 : vector<16x1xf32> to vector<16x32xf32>
    %244 = arith.mulf %234, %243 : vector<16x32xf32>
    %245 = vector.broadcast %140 : vector<1x32xf32> to vector<16x32xf32>
    %246 = arith.mulf %244, %245 : vector<16x32xf32>
    %247 = vector.broadcast %141 : vector<1x32xf32> to vector<16x32xf32>
    %248 = arith.addf %246, %247 : vector<16x32xf32>
    %c0_81 = arith.constant 0 : index
    %c0_82 = arith.constant 0 : index
    %249 = vector.load %arg3[%c0_81, %c0_82] : memref<16x32xf32, #tpu.memory_space<vmem>>, vector<16x32xf32>
    tpu.vector_store %arg3[%c0_81, %c0_82], %248 {strides = array<i32>} : memref<16x32xf32, #tpu.memory_space<vmem>>, vector<16x32xf32>,
    %c16 = arith.constant 16 : index
    %c0_83 = arith.constant 0 : index
    %250 = vector.load %arg0[%c16, %c0_83] : memref<32x32xf32, #tpu.memory_space<vmem>>, vector<16x32xf32>
    %c0_84 = arith.constant 0 : index
    %c0_85 = arith.constant 0 : index
    %251 = vector.load %arg2[%c0_84, %c0_85] : memref<169x128xf32, #tpu.memory_space<vmem>>, vector<32x128xf32>
    %c32_86 = arith.constant 32 : index
    %c0_87 = arith.constant 0 : index
    %252 = vector.load %arg2[%c32_86, %c0_87] : memref<169x128xf32, #tpu.memory_space<vmem>>, vector<32x128xf32>
    %c64_88 = arith.constant 64 : index
    %c0_89 = arith.constant 0 : index
    %253 = vector.load %arg2[%c64_88, %c0_89] : memref<169x128xf32, #tpu.memory_space<vmem>>, vector<64x128xf32>
    %c128_90 = arith.constant 128 : index
    %c0_91 = arith.constant 0 : index
    %254 = vector.load %arg2[%c128_90, %c0_91] : memref<169x128xf32, #tpu.memory_space<vmem>>, vector<1x128xf32>
    %c129 = arith.constant 129 : index
    %c0_92 = arith.constant 0 : index
    %255 = vector.load %arg2[%c129, %c0_92] : memref<169x128xf32, #tpu.memory_space<vmem>>, vector<1x128xf32>
    %256 = vector.shape_cast %255 : vector<1x128xf32> to vector<1x128xf32>
    %257 = vector.broadcast %256 : vector<1x128xf32> to vector<2x128xf32>
    %c136 = arith.constant 136 : index
    %c0_93 = arith.constant 0 : index
    %258 = vector.load %arg2[%c136, %c0_93] : memref<169x128xf32, #tpu.memory_space<vmem>>, vector<32x128xf32>
    %c168 = arith.constant 168 : index
    %c0_94 = arith.constant 0 : index
    %259 = vector.load %arg2[%c168, %c0_94] : memref<169x128xf32, #tpu.memory_space<vmem>>, vector<1x128xf32>
    %cst_95 = arith.constant dense<0.000000e+00> : vector<16x128xf32>
    %260 = tpu.matmul %250, %251, %cst_95 {dimension_numbers = #tpu.dot_dimension_numbers<[1], [0], [0], [1], [0, 0, 1, 1], [], []>} : vector<16x32xf32>, vector<32x128xf32>, vector<16x128xf32> -> vector<16x128xf32>
    %261 = vector.broadcast %254 : vector<1x128xf32> to vector<16x128xf32>
    %262 = arith.addf %260, %261 : vector<16x128xf32>
    %cst_96 = arith.constant 0.000000e+00 : f32
    %263 = vector.broadcast %cst_96 : f32 to vector<2x32xf32>
    %cst_97 = arith.constant 0.000000e+00 : f32
    %264 = vector.broadcast %cst_97 : f32 to vector<2x32xf32>
    %cst_98 = arith.constant 0.000000e+00 : f32
    %265 = vector.broadcast %cst_98 : f32 to vector<2x32xf32>
    %cst_99 = arith.constant 0.000000e+00 : f32
    %266 = vector.broadcast %cst_99 : f32 to vector<2x32xf32>
    %267 = vector.extract_strided_slice %262 {offsets = [0, 0], sizes = [2, 128], strides = [1, 1]} : vector<16x128xf32> to vector<2x128xf32>
    %cst_100 = arith.constant dense<0.000000e+00> : vector<2x128xf32>
    %268 = tpu.matmul %263, %252, %cst_100 {dimension_numbers = #tpu.dot_dimension_numbers<[1], [0], [0], [1], [0, 0, 1, 1], [], []>} : vector<2x32xf32>, vector<32x128xf32>, vector<2x128xf32> -> vector<2x128xf32>
    %269 = arith.addf %267, %268 : vector<2x128xf32>
    %270 = arith.negf %269 : vector<2x128xf32>
    %271 = math.exp %270 : vector<2x128xf32>
    %cst_101 = arith.constant 1.000000e+00 : f32
    %272 = vector.broadcast %cst_101 : f32 to vector<2x128xf32>
    %273 = arith.addf %272, %271 : vector<2x128xf32>
    %274 = arith.divf %272, %273 : vector<2x128xf32>
    %275 = math.tanh %269 : vector<2x128xf32>
    %276 = vector.extract_strided_slice %274 {offsets = [0, 0], sizes = [2, 32], strides = [1, 1]} : vector<2x128xf32> to vector<2x32xf32>
    %277 = vector.extract_strided_slice %274 {offsets = [0, 32], sizes = [2, 32], strides = [1, 1]} : vector<2x128xf32> to vector<2x32xf32>
    %278 = vector.extract_strided_slice %274 {offsets = [0, 96], sizes = [2, 32], strides = [1, 1]} : vector<2x128xf32> to vector<2x32xf32>
    %279 = vector.extract_strided_slice %275 {offsets = [0, 64], sizes = [2, 32], strides = [1, 1]} : vector<2x128xf32> to vector<2x32xf32>
    %280 = arith.mulf %277, %265 : vector<2x32xf32>
    %281 = arith.mulf %276, %279 : vector<2x32xf32>
    %282 = arith.addf %280, %281 : vector<2x32xf32>
    %283 = math.tanh %282 : vector<2x32xf32>
    %284 = arith.mulf %278, %283 : vector<2x32xf32>
    %285 = tpu.concatenate %284, %264 in 1 : vector<2x32xf32>, vector<2x32xf32> -> vector<2x64xf32>
    %cst_102 = arith.constant dense<0.000000e+00> : vector<2x128xf32>
    %286 = tpu.matmul %285, %253, %cst_102 {dimension_numbers = #tpu.dot_dimension_numbers<[1], [0], [0], [1], [0, 0, 1, 1], [], []>} : vector<2x64xf32>, vector<64x128xf32>, vector<2x128xf32> -> vector<2x128xf32>
    %287 = arith.addf %286, %257 : vector<2x128xf32>
    %288 = arith.negf %287 : vector<2x128xf32>
    %289 = math.exp %288 : vector<2x128xf32>
    %cst_103 = arith.constant 1.000000e+00 : f32
    %290 = vector.broadcast %cst_103 : f32 to vector<2x128xf32>
    %291 = arith.addf %290, %289 : vector<2x128xf32>
    %292 = arith.divf %290, %291 : vector<2x128xf32>
    %293 = math.tanh %287 : vector<2x128xf32>
    %294 = vector.extract_strided_slice %292 {offsets = [0, 0], sizes = [2, 32], strides = [1, 1]} : vector<2x128xf32> to vector<2x32xf32>
    %295 = vector.extract_strided_slice %292 {offsets = [0, 32], sizes = [2, 32], strides = [1, 1]} : vector<2x128xf32> to vector<2x32xf32>
    %296 = vector.extract_strided_slice %292 {offsets = [0, 96], sizes = [2, 32], strides = [1, 1]} : vector<2x128xf32> to vector<2x32xf32>
    %297 = vector.extract_strided_slice %293 {offsets = [0, 64], sizes = [2, 32], strides = [1, 1]} : vector<2x128xf32> to vector<2x32xf32>
    %298 = arith.mulf %295, %266 : vector<2x32xf32>
    %299 = arith.mulf %294, %297 : vector<2x32xf32>
    %300 = arith.addf %298, %299 : vector<2x32xf32>
    %301 = math.tanh %300 : vector<2x32xf32>
    %302 = arith.mulf %296, %301 : vector<2x32xf32>
    %303 = vector.extract_strided_slice %262 {offsets = [2, 0], sizes = [2, 128], strides = [1, 1]} : vector<16x128xf32> to vector<2x128xf32>
    %cst_104 = arith.constant dense<0.000000e+00> : vector<2x128xf32>
    %304 = tpu.matmul %284, %252, %cst_104 {dimension_numbers = #tpu.dot_dimension_numbers<[1], [0], [0], [1], [0, 0, 1, 1], [], []>} : vector<2x32xf32>, vector<32x128xf32>, vector<2x128xf32> -> vector<2x128xf32>
    %305 = arith.addf %303, %304 : vector<2x128xf32>
    %306 = arith.negf %305 : vector<2x128xf32>
    %307 = math.exp %306 : vector<2x128xf32>
    %cst_105 = arith.constant 1.000000e+00 : f32
    %308 = vector.broadcast %cst_105 : f32 to vector<2x128xf32>
    %309 = arith.addf %308, %307 : vector<2x128xf32>
    %310 = arith.divf %308, %309 : vector<2x128xf32>
    %311 = math.tanh %305 : vector<2x128xf32>
    %312 = vector.extract_strided_slice %310 {offsets = [0, 0], sizes = [2, 32], strides = [1, 1]} : vector<2x128xf32> to vector<2x32xf32>
    %313 = vector.extract_strided_slice %310 {offsets = [0, 32], sizes = [2, 32], strides = [1, 1]} : vector<2x128xf32> to vector<2x32xf32>
    %314 = vector.extract_strided_slice %310 {offsets = [0, 96], sizes = [2, 32], strides = [1, 1]} : vector<2x128xf32> to vector<2x32xf32>
    %315 = vector.extract_strided_slice %311 {offsets = [0, 64], sizes = [2, 32], strides = [1, 1]} : vector<2x128xf32> to vector<2x32xf32>
    %316 = arith.mulf %313, %282 : vector<2x32xf32>
    %317 = arith.mulf %312, %315 : vector<2x32xf32>
    %318 = arith.addf %316, %317 : vector<2x32xf32>
    %319 = math.tanh %318 : vector<2x32xf32>
    %320 = arith.mulf %314, %319 : vector<2x32xf32>
    %321 = tpu.concatenate %320, %302 in 1 : vector<2x32xf32>, vector<2x32xf32> -> vector<2x64xf32>
    %cst_106 = arith.constant dense<0.000000e+00> : vector<2x128xf32>
    %322 = tpu.matmul %321, %253, %cst_106 {dimension_numbers = #tpu.dot_dimension_numbers<[1], [0], [0], [1], [0, 0, 1, 1], [], []>} : vector<2x64xf32>, vector<64x128xf32>, vector<2x128xf32> -> vector<2x128xf32>
    %323 = arith.addf %322, %257 : vector<2x128xf32>
    %324 = arith.negf %323 : vector<2x128xf32>
    %325 = math.exp %324 : vector<2x128xf32>
    %cst_107 = arith.constant 1.000000e+00 : f32
    %326 = vector.broadcast %cst_107 : f32 to vector<2x128xf32>
    %327 = arith.addf %326, %325 : vector<2x128xf32>
    %328 = arith.divf %326, %327 : vector<2x128xf32>
    %329 = math.tanh %323 : vector<2x128xf32>
    %330 = vector.extract_strided_slice %328 {offsets = [0, 0], sizes = [2, 32], strides = [1, 1]} : vector<2x128xf32> to vector<2x32xf32>
    %331 = vector.extract_strided_slice %328 {offsets = [0, 32], sizes = [2, 32], strides = [1, 1]} : vector<2x128xf32> to vector<2x32xf32>
    %332 = vector.extract_strided_slice %328 {offsets = [0, 96], sizes = [2, 32], strides = [1, 1]} : vector<2x128xf32> to vector<2x32xf32>
    %333 = vector.extract_strided_slice %329 {offsets = [0, 64], sizes = [2, 32], strides = [1, 1]} : vector<2x128xf32> to vector<2x32xf32>
    %334 = arith.mulf %331, %300 : vector<2x32xf32>
    %335 = arith.mulf %330, %333 : vector<2x32xf32>
    %336 = arith.addf %334, %335 : vector<2x32xf32>
    %337 = math.tanh %336 : vector<2x32xf32>
    %338 = arith.mulf %332, %337 : vector<2x32xf32>
    %339 = vector.extract_strided_slice %262 {offsets = [4, 0], sizes = [2, 128], strides = [1, 1]} : vector<16x128xf32> to vector<2x128xf32>
    %cst_108 = arith.constant dense<0.000000e+00> : vector<2x128xf32>
    %340 = tpu.matmul %320, %252, %cst_108 {dimension_numbers = #tpu.dot_dimension_numbers<[1], [0], [0], [1], [0, 0, 1, 1], [], []>} : vector<2x32xf32>, vector<32x128xf32>, vector<2x128xf32> -> vector<2x128xf32>
    %341 = arith.addf %339, %340 : vector<2x128xf32>
    %342 = arith.negf %341 : vector<2x128xf32>
    %343 = math.exp %342 : vector<2x128xf32>
    %cst_109 = arith.constant 1.000000e+00 : f32
    %344 = vector.broadcast %cst_109 : f32 to vector<2x128xf32>
    %345 = arith.addf %344, %343 : vector<2x128xf32>
    %346 = arith.divf %344, %345 : vector<2x128xf32>
    %347 = math.tanh %341 : vector<2x128xf32>
    %348 = vector.extract_strided_slice %346 {offsets = [0, 0], sizes = [2, 32], strides = [1, 1]} : vector<2x128xf32> to vector<2x32xf32>
    %349 = vector.extract_strided_slice %346 {offsets = [0, 32], sizes = [2, 32], strides = [1, 1]} : vector<2x128xf32> to vector<2x32xf32>
    %350 = vector.extract_strided_slice %346 {offsets = [0, 96], sizes = [2, 32], strides = [1, 1]} : vector<2x128xf32> to vector<2x32xf32>
    %351 = vector.extract_strided_slice %347 {offsets = [0, 64], sizes = [2, 32], strides = [1, 1]} : vector<2x128xf32> to vector<2x32xf32>
    %352 = arith.mulf %349, %318 : vector<2x32xf32>
    %353 = arith.mulf %348, %351 : vector<2x32xf32>
    %354 = arith.addf %352, %353 : vector<2x32xf32>
    %355 = math.tanh %354 : vector<2x32xf32>
    %356 = arith.mulf %350, %355 : vector<2x32xf32>
    %357 = tpu.concatenate %356, %338 in 1 : vector<2x32xf32>, vector<2x32xf32> -> vector<2x64xf32>
    %cst_110 = arith.constant dense<0.000000e+00> : vector<2x128xf32>
    %358 = tpu.matmul %357, %253, %cst_110 {dimension_numbers = #tpu.dot_dimension_numbers<[1], [0], [0], [1], [0, 0, 1, 1], [], []>} : vector<2x64xf32>, vector<64x128xf32>, vector<2x128xf32> -> vector<2x128xf32>
    %359 = arith.addf %358, %257 : vector<2x128xf32>
    %360 = arith.negf %359 : vector<2x128xf32>
    %361 = math.exp %360 : vector<2x128xf32>
    %cst_111 = arith.constant 1.000000e+00 : f32
    %362 = vector.broadcast %cst_111 : f32 to vector<2x128xf32>
    %363 = arith.addf %362, %361 : vector<2x128xf32>
    %364 = arith.divf %362, %363 : vector<2x128xf32>
    %365 = math.tanh %359 : vector<2x128xf32>
    %366 = vector.extract_strided_slice %364 {offsets = [0, 0], sizes = [2, 32], strides = [1, 1]} : vector<2x128xf32> to vector<2x32xf32>
    %367 = vector.extract_strided_slice %364 {offsets = [0, 32], sizes = [2, 32], strides = [1, 1]} : vector<2x128xf32> to vector<2x32xf32>
    %368 = vector.extract_strided_slice %364 {offsets = [0, 96], sizes = [2, 32], strides = [1, 1]} : vector<2x128xf32> to vector<2x32xf32>
    %369 = vector.extract_strided_slice %365 {offsets = [0, 64], sizes = [2, 32], strides = [1, 1]} : vector<2x128xf32> to vector<2x32xf32>
    %370 = arith.mulf %367, %336 : vector<2x32xf32>
    %371 = arith.mulf %366, %369 : vector<2x32xf32>
    %372 = arith.addf %370, %371 : vector<2x32xf32>
    %373 = math.tanh %372 : vector<2x32xf32>
    %374 = arith.mulf %368, %373 : vector<2x32xf32>
    %375 = vector.extract_strided_slice %262 {offsets = [6, 0], sizes = [2, 128], strides = [1, 1]} : vector<16x128xf32> to vector<2x128xf32>
    %cst_112 = arith.constant dense<0.000000e+00> : vector<2x128xf32>
    %376 = tpu.matmul %356, %252, %cst_112 {dimension_numbers = #tpu.dot_dimension_numbers<[1], [0], [0], [1], [0, 0, 1, 1], [], []>} : vector<2x32xf32>, vector<32x128xf32>, vector<2x128xf32> -> vector<2x128xf32>
    %377 = arith.addf %375, %376 : vector<2x128xf32>
    %378 = arith.negf %377 : vector<2x128xf32>
    %379 = math.exp %378 : vector<2x128xf32>
    %cst_113 = arith.constant 1.000000e+00 : f32
    %380 = vector.broadcast %cst_113 : f32 to vector<2x128xf32>
    %381 = arith.addf %380, %379 : vector<2x128xf32>
    %382 = arith.divf %380, %381 : vector<2x128xf32>
    %383 = math.tanh %377 : vector<2x128xf32>
    %384 = vector.extract_strided_slice %382 {offsets = [0, 0], sizes = [2, 32], strides = [1, 1]} : vector<2x128xf32> to vector<2x32xf32>
    %385 = vector.extract_strided_slice %382 {offsets = [0, 32], sizes = [2, 32], strides = [1, 1]} : vector<2x128xf32> to vector<2x32xf32>
    %386 = vector.extract_strided_slice %382 {offsets = [0, 96], sizes = [2, 32], strides = [1, 1]} : vector<2x128xf32> to vector<2x32xf32>
    %387 = vector.extract_strided_slice %383 {offsets = [0, 64], sizes = [2, 32], strides = [1, 1]} : vector<2x128xf32> to vector<2x32xf32>
    %388 = arith.mulf %385, %354 : vector<2x32xf32>
    %389 = arith.mulf %384, %387 : vector<2x32xf32>
    %390 = arith.addf %388, %389 : vector<2x32xf32>
    %391 = math.tanh %390 : vector<2x32xf32>
    %392 = arith.mulf %386, %391 : vector<2x32xf32>
    %393 = tpu.concatenate %392, %374 in 1 : vector<2x32xf32>, vector<2x32xf32> -> vector<2x64xf32>
    %cst_114 = arith.constant dense<0.000000e+00> : vector<2x128xf32>
    %394 = tpu.matmul %393, %253, %cst_114 {dimension_numbers = #tpu.dot_dimension_numbers<[1], [0], [0], [1], [0, 0, 1, 1], [], []>} : vector<2x64xf32>, vector<64x128xf32>, vector<2x128xf32> -> vector<2x128xf32>
    %395 = arith.addf %394, %257 : vector<2x128xf32>
    %396 = arith.negf %395 : vector<2x128xf32>
    %397 = math.exp %396 : vector<2x128xf32>
    %cst_115 = arith.constant 1.000000e+00 : f32
    %398 = vector.broadcast %cst_115 : f32 to vector<2x128xf32>
    %399 = arith.addf %398, %397 : vector<2x128xf32>
    %400 = arith.divf %398, %399 : vector<2x128xf32>
    %401 = math.tanh %395 : vector<2x128xf32>
    %402 = vector.extract_strided_slice %400 {offsets = [0, 0], sizes = [2, 32], strides = [1, 1]} : vector<2x128xf32> to vector<2x32xf32>
    %403 = vector.extract_strided_slice %400 {offsets = [0, 32], sizes = [2, 32], strides = [1, 1]} : vector<2x128xf32> to vector<2x32xf32>
    %404 = vector.extract_strided_slice %400 {offsets = [0, 96], sizes = [2, 32], strides = [1, 1]} : vector<2x128xf32> to vector<2x32xf32>
    %405 = vector.extract_strided_slice %401 {offsets = [0, 64], sizes = [2, 32], strides = [1, 1]} : vector<2x128xf32> to vector<2x32xf32>
    %406 = arith.mulf %403, %372 : vector<2x32xf32>
    %407 = arith.mulf %402, %405 : vector<2x32xf32>
    %408 = arith.addf %406, %407 : vector<2x32xf32>
    %409 = math.tanh %408 : vector<2x32xf32>
    %410 = arith.mulf %404, %409 : vector<2x32xf32>
    %411 = vector.extract_strided_slice %262 {offsets = [8, 0], sizes = [2, 128], strides = [1, 1]} : vector<16x128xf32> to vector<2x128xf32>
    %cst_116 = arith.constant dense<0.000000e+00> : vector<2x128xf32>
    %412 = tpu.matmul %392, %252, %cst_116 {dimension_numbers = #tpu.dot_dimension_numbers<[1], [0], [0], [1], [0, 0, 1, 1], [], []>} : vector<2x32xf32>, vector<32x128xf32>, vector<2x128xf32> -> vector<2x128xf32>
    %413 = arith.addf %411, %412 : vector<2x128xf32>
    %414 = arith.negf %413 : vector<2x128xf32>
    %415 = math.exp %414 : vector<2x128xf32>
    %cst_117 = arith.constant 1.000000e+00 : f32
    %416 = vector.broadcast %cst_117 : f32 to vector<2x128xf32>
    %417 = arith.addf %416, %415 : vector<2x128xf32>
    %418 = arith.divf %416, %417 : vector<2x128xf32>
    %419 = math.tanh %413 : vector<2x128xf32>
    %420 = vector.extract_strided_slice %418 {offsets = [0, 0], sizes = [2, 32], strides = [1, 1]} : vector<2x128xf32> to vector<2x32xf32>
    %421 = vector.extract_strided_slice %418 {offsets = [0, 32], sizes = [2, 32], strides = [1, 1]} : vector<2x128xf32> to vector<2x32xf32>
    %422 = vector.extract_strided_slice %418 {offsets = [0, 96], sizes = [2, 32], strides = [1, 1]} : vector<2x128xf32> to vector<2x32xf32>
    %423 = vector.extract_strided_slice %419 {offsets = [0, 64], sizes = [2, 32], strides = [1, 1]} : vector<2x128xf32> to vector<2x32xf32>
    %424 = arith.mulf %421, %390 : vector<2x32xf32>
    %425 = arith.mulf %420, %423 : vector<2x32xf32>
    %426 = arith.addf %424, %425 : vector<2x32xf32>
    %427 = math.tanh %426 : vector<2x32xf32>
    %428 = arith.mulf %422, %427 : vector<2x32xf32>
    %429 = tpu.concatenate %428, %410 in 1 : vector<2x32xf32>, vector<2x32xf32> -> vector<2x64xf32>
    %cst_118 = arith.constant dense<0.000000e+00> : vector<2x128xf32>
    %430 = tpu.matmul %429, %253, %cst_118 {dimension_numbers = #tpu.dot_dimension_numbers<[1], [0], [0], [1], [0, 0, 1, 1], [], []>} : vector<2x64xf32>, vector<64x128xf32>, vector<2x128xf32> -> vector<2x128xf32>
    %431 = arith.addf %430, %257 : vector<2x128xf32>
    %432 = arith.negf %431 : vector<2x128xf32>
    %433 = math.exp %432 : vector<2x128xf32>
    %cst_119 = arith.constant 1.000000e+00 : f32
    %434 = vector.broadcast %cst_119 : f32 to vector<2x128xf32>
    %435 = arith.addf %434, %433 : vector<2x128xf32>
    %436 = arith.divf %434, %435 : vector<2x128xf32>
    %437 = math.tanh %431 : vector<2x128xf32>
    %438 = vector.extract_strided_slice %436 {offsets = [0, 0], sizes = [2, 32], strides = [1, 1]} : vector<2x128xf32> to vector<2x32xf32>
    %439 = vector.extract_strided_slice %436 {offsets = [0, 32], sizes = [2, 32], strides = [1, 1]} : vector<2x128xf32> to vector<2x32xf32>
    %440 = vector.extract_strided_slice %436 {offsets = [0, 96], sizes = [2, 32], strides = [1, 1]} : vector<2x128xf32> to vector<2x32xf32>
    %441 = vector.extract_strided_slice %437 {offsets = [0, 64], sizes = [2, 32], strides = [1, 1]} : vector<2x128xf32> to vector<2x32xf32>
    %442 = arith.mulf %439, %408 : vector<2x32xf32>
    %443 = arith.mulf %438, %441 : vector<2x32xf32>
    %444 = arith.addf %442, %443 : vector<2x32xf32>
    %445 = math.tanh %444 : vector<2x32xf32>
    %446 = arith.mulf %440, %445 : vector<2x32xf32>
    %447 = vector.extract_strided_slice %262 {offsets = [10, 0], sizes = [2, 128], strides = [1, 1]} : vector<16x128xf32> to vector<2x128xf32>
    %cst_120 = arith.constant dense<0.000000e+00> : vector<2x128xf32>
    %448 = tpu.matmul %428, %252, %cst_120 {dimension_numbers = #tpu.dot_dimension_numbers<[1], [0], [0], [1], [0, 0, 1, 1], [], []>} : vector<2x32xf32>, vector<32x128xf32>, vector<2x128xf32> -> vector<2x128xf32>
    %449 = arith.addf %447, %448 : vector<2x128xf32>
    %450 = arith.negf %449 : vector<2x128xf32>
    %451 = math.exp %450 : vector<2x128xf32>
    %cst_121 = arith.constant 1.000000e+00 : f32
    %452 = vector.broadcast %cst_121 : f32 to vector<2x128xf32>
    %453 = arith.addf %452, %451 : vector<2x128xf32>
    %454 = arith.divf %452, %453 : vector<2x128xf32>
    %455 = math.tanh %449 : vector<2x128xf32>
    %456 = vector.extract_strided_slice %454 {offsets = [0, 0], sizes = [2, 32], strides = [1, 1]} : vector<2x128xf32> to vector<2x32xf32>
    %457 = vector.extract_strided_slice %454 {offsets = [0, 32], sizes = [2, 32], strides = [1, 1]} : vector<2x128xf32> to vector<2x32xf32>
    %458 = vector.extract_strided_slice %454 {offsets = [0, 96], sizes = [2, 32], strides = [1, 1]} : vector<2x128xf32> to vector<2x32xf32>
    %459 = vector.extract_strided_slice %455 {offsets = [0, 64], sizes = [2, 32], strides = [1, 1]} : vector<2x128xf32> to vector<2x32xf32>
    %460 = arith.mulf %457, %426 : vector<2x32xf32>
    %461 = arith.mulf %456, %459 : vector<2x32xf32>
    %462 = arith.addf %460, %461 : vector<2x32xf32>
    %463 = math.tanh %462 : vector<2x32xf32>
    %464 = arith.mulf %458, %463 : vector<2x32xf32>
    %465 = tpu.concatenate %464, %446 in 1 : vector<2x32xf32>, vector<2x32xf32> -> vector<2x64xf32>
    %cst_122 = arith.constant dense<0.000000e+00> : vector<2x128xf32>
    %466 = tpu.matmul %465, %253, %cst_122 {dimension_numbers = #tpu.dot_dimension_numbers<[1], [0], [0], [1], [0, 0, 1, 1], [], []>} : vector<2x64xf32>, vector<64x128xf32>, vector<2x128xf32> -> vector<2x128xf32>
    %467 = arith.addf %466, %257 : vector<2x128xf32>
    %468 = arith.negf %467 : vector<2x128xf32>
    %469 = math.exp %468 : vector<2x128xf32>
    %cst_123 = arith.constant 1.000000e+00 : f32
    %470 = vector.broadcast %cst_123 : f32 to vector<2x128xf32>
    %471 = arith.addf %470, %469 : vector<2x128xf32>
    %472 = arith.divf %470, %471 : vector<2x128xf32>
    %473 = math.tanh %467 : vector<2x128xf32>
    %474 = vector.extract_strided_slice %472 {offsets = [0, 0], sizes = [2, 32], strides = [1, 1]} : vector<2x128xf32> to vector<2x32xf32>
    %475 = vector.extract_strided_slice %472 {offsets = [0, 32], sizes = [2, 32], strides = [1, 1]} : vector<2x128xf32> to vector<2x32xf32>
    %476 = vector.extract_strided_slice %472 {offsets = [0, 96], sizes = [2, 32], strides = [1, 1]} : vector<2x128xf32> to vector<2x32xf32>
    %477 = vector.extract_strided_slice %473 {offsets = [0, 64], sizes = [2, 32], strides = [1, 1]} : vector<2x128xf32> to vector<2x32xf32>
    %478 = arith.mulf %475, %444 : vector<2x32xf32>
    %479 = arith.mulf %474, %477 : vector<2x32xf32>
    %480 = arith.addf %478, %479 : vector<2x32xf32>
    %481 = math.tanh %480 : vector<2x32xf32>
    %482 = arith.mulf %476, %481 : vector<2x32xf32>
    %483 = vector.extract_strided_slice %262 {offsets = [12, 0], sizes = [2, 128], strides = [1, 1]} : vector<16x128xf32> to vector<2x128xf32>
    %cst_124 = arith.constant dense<0.000000e+00> : vector<2x128xf32>
    %484 = tpu.matmul %464, %252, %cst_124 {dimension_numbers = #tpu.dot_dimension_numbers<[1], [0], [0], [1], [0, 0, 1, 1], [], []>} : vector<2x32xf32>, vector<32x128xf32>, vector<2x128xf32> -> vector<2x128xf32>
    %485 = arith.addf %483, %484 : vector<2x128xf32>
    %486 = arith.negf %485 : vector<2x128xf32>
    %487 = math.exp %486 : vector<2x128xf32>
    %cst_125 = arith.constant 1.000000e+00 : f32
    %488 = vector.broadcast %cst_125 : f32 to vector<2x128xf32>
    %489 = arith.addf %488, %487 : vector<2x128xf32>
    %490 = arith.divf %488, %489 : vector<2x128xf32>
    %491 = math.tanh %485 : vector<2x128xf32>
    %492 = vector.extract_strided_slice %490 {offsets = [0, 0], sizes = [2, 32], strides = [1, 1]} : vector<2x128xf32> to vector<2x32xf32>
    %493 = vector.extract_strided_slice %490 {offsets = [0, 32], sizes = [2, 32], strides = [1, 1]} : vector<2x128xf32> to vector<2x32xf32>
    %494 = vector.extract_strided_slice %490 {offsets = [0, 96], sizes = [2, 32], strides = [1, 1]} : vector<2x128xf32> to vector<2x32xf32>
    %495 = vector.extract_strided_slice %491 {offsets = [0, 64], sizes = [2, 32], strides = [1, 1]} : vector<2x128xf32> to vector<2x32xf32>
    %496 = arith.mulf %493, %462 : vector<2x32xf32>
    %497 = arith.mulf %492, %495 : vector<2x32xf32>
    %498 = arith.addf %496, %497 : vector<2x32xf32>
    %499 = math.tanh %498 : vector<2x32xf32>
    %500 = arith.mulf %494, %499 : vector<2x32xf32>
    %501 = tpu.concatenate %500, %482 in 1 : vector<2x32xf32>, vector<2x32xf32> -> vector<2x64xf32>
    %cst_126 = arith.constant dense<0.000000e+00> : vector<2x128xf32>
    %502 = tpu.matmul %501, %253, %cst_126 {dimension_numbers = #tpu.dot_dimension_numbers<[1], [0], [0], [1], [0, 0, 1, 1], [], []>} : vector<2x64xf32>, vector<64x128xf32>, vector<2x128xf32> -> vector<2x128xf32>
    %503 = arith.addf %502, %257 : vector<2x128xf32>
    %504 = arith.negf %503 : vector<2x128xf32>
    %505 = math.exp %504 : vector<2x128xf32>
    %cst_127 = arith.constant 1.000000e+00 : f32
    %506 = vector.broadcast %cst_127 : f32 to vector<2x128xf32>
    %507 = arith.addf %506, %505 : vector<2x128xf32>
    %508 = arith.divf %506, %507 : vector<2x128xf32>
    %509 = math.tanh %503 : vector<2x128xf32>
    %510 = vector.extract_strided_slice %508 {offsets = [0, 0], sizes = [2, 32], strides = [1, 1]} : vector<2x128xf32> to vector<2x32xf32>
    %511 = vector.extract_strided_slice %508 {offsets = [0, 32], sizes = [2, 32], strides = [1, 1]} : vector<2x128xf32> to vector<2x32xf32>
    %512 = vector.extract_strided_slice %508 {offsets = [0, 96], sizes = [2, 32], strides = [1, 1]} : vector<2x128xf32> to vector<2x32xf32>
    %513 = vector.extract_strided_slice %509 {offsets = [0, 64], sizes = [2, 32], strides = [1, 1]} : vector<2x128xf32> to vector<2x32xf32>
    %514 = arith.mulf %511, %480 : vector<2x32xf32>
    %515 = arith.mulf %510, %513 : vector<2x32xf32>
    %516 = arith.addf %514, %515 : vector<2x32xf32>
    %517 = math.tanh %516 : vector<2x32xf32>
    %518 = arith.mulf %512, %517 : vector<2x32xf32>
    %519 = vector.extract_strided_slice %262 {offsets = [14, 0], sizes = [2, 128], strides = [1, 1]} : vector<16x128xf32> to vector<2x128xf32>
    %cst_128 = arith.constant dense<0.000000e+00> : vector<2x128xf32>
    %520 = tpu.matmul %500, %252, %cst_128 {dimension_numbers = #tpu.dot_dimension_numbers<[1], [0], [0], [1], [0, 0, 1, 1], [], []>} : vector<2x32xf32>, vector<32x128xf32>, vector<2x128xf32> -> vector<2x128xf32>
    %521 = arith.addf %519, %520 : vector<2x128xf32>
    %522 = arith.negf %521 : vector<2x128xf32>
    %523 = math.exp %522 : vector<2x128xf32>
    %cst_129 = arith.constant 1.000000e+00 : f32
    %524 = vector.broadcast %cst_129 : f32 to vector<2x128xf32>
    %525 = arith.addf %524, %523 : vector<2x128xf32>
    %526 = arith.divf %524, %525 : vector<2x128xf32>
    %527 = math.tanh %521 : vector<2x128xf32>
    %528 = vector.extract_strided_slice %526 {offsets = [0, 0], sizes = [2, 32], strides = [1, 1]} : vector<2x128xf32> to vector<2x32xf32>
    %529 = vector.extract_strided_slice %526 {offsets = [0, 32], sizes = [2, 32], strides = [1, 1]} : vector<2x128xf32> to vector<2x32xf32>
    %530 = vector.extract_strided_slice %526 {offsets = [0, 96], sizes = [2, 32], strides = [1, 1]} : vector<2x128xf32> to vector<2x32xf32>
    %531 = vector.extract_strided_slice %527 {offsets = [0, 64], sizes = [2, 32], strides = [1, 1]} : vector<2x128xf32> to vector<2x32xf32>
    %532 = arith.mulf %529, %498 : vector<2x32xf32>
    %533 = arith.mulf %528, %531 : vector<2x32xf32>
    %534 = arith.addf %532, %533 : vector<2x32xf32>
    %535 = math.tanh %534 : vector<2x32xf32>
    %536 = arith.mulf %530, %535 : vector<2x32xf32>
    %537 = tpu.concatenate %536, %518 in 1 : vector<2x32xf32>, vector<2x32xf32> -> vector<2x64xf32>
    %cst_130 = arith.constant dense<0.000000e+00> : vector<2x128xf32>
    %538 = tpu.matmul %537, %253, %cst_130 {dimension_numbers = #tpu.dot_dimension_numbers<[1], [0], [0], [1], [0, 0, 1, 1], [], []>} : vector<2x64xf32>, vector<64x128xf32>, vector<2x128xf32> -> vector<2x128xf32>
    %539 = arith.addf %538, %257 : vector<2x128xf32>
    %540 = arith.negf %539 : vector<2x128xf32>
    %541 = math.exp %540 : vector<2x128xf32>
    %cst_131 = arith.constant 1.000000e+00 : f32
    %542 = vector.broadcast %cst_131 : f32 to vector<2x128xf32>
    %543 = arith.addf %542, %541 : vector<2x128xf32>
    %544 = arith.divf %542, %543 : vector<2x128xf32>
    %545 = math.tanh %539 : vector<2x128xf32>
    %546 = vector.extract_strided_slice %544 {offsets = [0, 0], sizes = [2, 32], strides = [1, 1]} : vector<2x128xf32> to vector<2x32xf32>
    %547 = vector.extract_strided_slice %544 {offsets = [0, 32], sizes = [2, 32], strides = [1, 1]} : vector<2x128xf32> to vector<2x32xf32>
    %548 = vector.extract_strided_slice %544 {offsets = [0, 96], sizes = [2, 32], strides = [1, 1]} : vector<2x128xf32> to vector<2x32xf32>
    %549 = vector.extract_strided_slice %545 {offsets = [0, 64], sizes = [2, 32], strides = [1, 1]} : vector<2x128xf32> to vector<2x32xf32>
    %550 = arith.mulf %547, %516 : vector<2x32xf32>
    %551 = arith.mulf %546, %549 : vector<2x32xf32>
    %552 = arith.addf %550, %551 : vector<2x32xf32>
    %553 = math.tanh %552 : vector<2x32xf32>
    %554 = arith.mulf %548, %553 : vector<2x32xf32>
    %555 = tpu.concatenate %302, %338, %374, %410, %446, %482, %518, %554 in 0 : vector<2x32xf32>, vector<2x32xf32>, vector<2x32xf32>, vector<2x32xf32>, vector<2x32xf32>, vector<2x32xf32>, vector<2x32xf32>, vector<2x32xf32> -> vector<16x32xf32>
    %cst_132 = arith.constant dense<0.000000e+00> : vector<16x128xf32>
    %556 = tpu.matmul %555, %258, %cst_132 {dimension_numbers = #tpu.dot_dimension_numbers<[1], [0], [0], [1], [0, 0, 1, 1], [], []>} : vector<16x32xf32>, vector<32x128xf32>, vector<16x128xf32> -> vector<16x128xf32>
    %557 = vector.broadcast %259 : vector<1x128xf32> to vector<16x128xf32>
    %558 = arith.addf %556, %557 : vector<16x128xf32>
    %c0_133 = arith.constant 0 : index
    %c0_134 = arith.constant 0 : index
    %559 = vector.load %arg4[%c0_133, %c0_134] : memref<16x128xf32, #tpu.memory_space<vmem>>, vector<16x128xf32>
    tpu.vector_store %arg4[%c0_133, %c0_134], %558 {strides = array<i32>} : memref<16x128xf32, #tpu.memory_space<vmem>>, vector<16x128xf32>,
    return
  }
}

</mosaic_0001>

<llo_original>
// kernel: tpu_custom_call.1
$region0: #{tpu_custom_call.1}
  #allocation0 [shape = 'u32[]', space=smem, size = 0x4, offset = 0x4, fixed_abs, tag = 'smem constant byte address 0x4 - core index']
  #allocation1 [shape = 'u32[144,128]{1,0:T(1,128)}', space=vmem, size = 0x12000, scoped, tag = 'internal scratch']
  %s0 = inlined_call_operand.vmem [shape: f32[32,32], index: 0, kind: input, shape index: {}]
  %s1 = inlined_call_operand.vmem [shape: f32[468,32], index: 1, kind: input, shape index: {}]
  %s2 = inlined_call_operand.vmem [shape: f32[169,128], index: 2, kind: input, shape index: {}]
  %s3 = inlined_call_operand.hbm [shape: f32[16,32], index: 3, kind: output, shape index: {0}]
  %s4 = inlined_call_operand.hbm [shape: f32[16,128], index: 4, kind: output, shape index: {1}]
  %5 = xla_tuple %s3, %s4
  %s6 = sld [smem:[#allocation0]]
  $region30: #{tpu_custom_call.1} parent=0
    _
  %s8 = ssub.s32 1, %s6
  %s9 = scalar_select 0, %s8, %s6
  $region1: #{tpu_custom_call.1} parent=0
    #allocation2 [shape = 'u8[8192]{0}', space=vmem, size = 0x2000, scoped, tag = 'output window, operand 0, single buffered']
    #allocation3 [shape = 's32[1]{0}', space=sflag, size = 0x4, scoped, tag = 'scoped memory for tpu_custom_call.1']
    #allocation4 [shape = 'u8[8192]{0}', space=vmem, size = 0x2000, scoped, tag = 'output window, operand 1, single buffered']
    #allocation5 [shape = 's32[1]{0}', space=sflag, size = 0x4, scoped, tag = 'scoped memory for tpu_custom_call.1']
    %10 = vsyncpa [#allocation3], 0
    %11 = vsyncpa [#allocation5], 0
    // Predicated region
    $region2: #{tpu_custom_call.1} parent=1 // pred_check
      _
    $region3: #{tpu_custom_call.1} parent=1 // pred_check_branch
      %13 = sbr.rel (0) target = $region5
    $region4: #{tpu_custom_call.1} parent=1 // pred_region
      _
    $region5: #{tpu_custom_call.1} parent=1 // pred_fallthru
      _
    // Predicated region
    $region6: #{tpu_custom_call.1} parent=1 // pred_check
      _
    $region7: #{tpu_custom_call.1} parent=1 // pred_check_branch
      %15 = sbr.rel (0) target = $region9
    $region8: #{tpu_custom_call.1} parent=1 // pred_region
      _
    $region9: #{tpu_custom_call.1} parent=1 // pred_fallthru
      _
    // Predicated region
    $region10: #{tpu_custom_call.1} parent=1 // pred_check
      _
    $region11: #{tpu_custom_call.1} parent=1 // pred_check_branch
      %17 = sbr.rel (0) target = $region13
    $region12: #{tpu_custom_call.1} parent=1 // pred_region
      _
    $region13: #{tpu_custom_call.1} parent=1 // pred_fallthru
      _
    %v18 = vld [vmem:[%s1 + $0x180] sm:$0xff]
    %v19 = vld [vmem:[%s1 + $0x188] sm:$0xff]
    %v20 = vld [vmem:[%s1 + $0x190] sm:$0xff]
    %v21 = vld [vmem:[%s1 + $0x198] sm:$0xff]
    %v22 = vld [vmem:[%s1 + $0x1a0] sm:$0xff]
    %v23 = vld [vmem:[%s1 + $0x1a8] sm:$0xff]
    %v24 = vld [vmem:[%s1 + $0x1b0] sm:$0xff]
    %v25 = vld [vmem:[%s1 + $0x1b8] sm:$0xff]
    %v26 = vld [vmem:[%s0] sm:$0xff]
    %v27 = vld [vmem:[%s0 + $0x8] sm:$0xff]
    %v28 = vld [vmem:[%s1] sm:$0xff]
    %v29 = vld [vmem:[%s1 + $0x8] sm:$0xff]
    %v30 = vld [vmem:[%s1 + $0x10] sm:$0xff]
    %v31 = vld [vmem:[%s1 + $0x18] sm:$0xff]
    %v32 = vld [vmem:[%s1 + $0x20] sm:$0xff]
    %v33 = vld [vmem:[%s1 + $0x28] sm:$0xff]
    %v34 = vld [vmem:[%s1 + $0x30] sm:$0xff]
    %v35 = vld [vmem:[%s1 + $0x38] sm:$0xff]
    %v36 = vld [vmem:[%s1 + $0x40] sm:$0xff]
    %v37 = vld [vmem:[%s1 + $0x48] sm:$0xff]
    %v38 = vld [vmem:[%s1 + $0x50] sm:$0xff]
    %v39 = vld [vmem:[%s1 + $0x58] sm:$0xff]
    %v40 = vld [vmem:[%s1 + $0x60] sm:$0xff]
    %v41 = vld [vmem:[%s1 + $0x68] sm:$0xff]
    %v42 = vld [vmem:[%s1 + $0x70] sm:$0xff]
    %v43 = vld [vmem:[%s1 + $0x78] sm:$0xff]
    %v44 = vld [vmem:[%s1 + $0x80] sm:$0xff]
    %v45 = vld [vmem:[%s1 + $0x88] sm:$0xff]
    %v46 = vld [vmem:[%s1 + $0x90] sm:$0xff]
    %v47 = vld [vmem:[%s1 + $0x98] sm:$0xff]
    %v48 = vld [vmem:[%s1 + $0xa0] sm:$0xff]
    %v49 = vld [vmem:[%s1 + $0xa8] sm:$0xff]
    %v50 = vld [vmem:[%s1 + $0xb0] sm:$0xff]
    %v51 = vld [vmem:[%s1 + $0xb8] sm:$0xff]
    %v52 = vld [vmem:[%s1 + $0x1c0] sm:$0x1]
    %v53 = vld [vmem:[%s1 + $0x1c1] sm:$0x1]
    %v54 = vld [vmem:[%s1 + $0x1c2] sm:$0x1]
    %v55 = vld [vmem:[%s1 + $0x1c3] sm:$0x1]
    %v56 = vld [vmem:[%s1 + $0x1c4] sm:$0x1]
    %v57 = vld [vmem:[%s1 + $0x1c5] sm:$0x1]
    %v58 = vld [vmem:[%s1 + $0x1c6] sm:$0x1]
    %v59 = vld [vmem:[%s1 + $0x1c7] sm:$0x1]
    %v60 = vld [vmem:[%s1 + $0x1c8] sm:$0x1]
    %v61 = vld [vmem:[%s1 + $0x1c9] sm:$0x1]
    %v62 = vlaneseq
    %v63 = vshrl.u32 %v62, 7
    %v64 = vsub.s32 0, %v63
    %v65 = vrot.slane %v52, %v64
    %vm66 = vcmask 261120
    %v68 = vsel %vm66, %v26, 0
    %v71 = vsel %vm66, %v27, 0
    %73 = vmatprep.subr.mxu0 0.0
    %74 = vmatpush1.msra.mxu0 %v28
    %75 = vmatprep.subr.mxu0 0.0
    %76 = vmatpush1.msra.mxu0 %v29
    %77 = vmatprep.subr.mxu0 0.0
    %78 = vmatpush1.msra.mxu0 %v30
    %79 = vmatprep.subr.mxu0 0.0
    %80 = vmatpush1.msra.mxu0 %v31
    %81 = vmatprep.subr.mxu0 0.0
    %82 = vmatpush1.msra.mxu0 0.0
    %83 = vmatprep.subr.mxu0 0.0
    %84 = vmatpush1.msra.mxu0 0.0
    %85 = vmatprep.subr.mxu0 0.0
    %86 = vmatpush1.msra.mxu0 0.0
    %87 = vmatprep.subr.mxu0 0.0
    %88 = vmatpush1.msra.mxu0 0.0
    %89 = vmatprep.subr.mxu0 0.0
    %90 = vmatpush1.msra.mxu0 0.0
    %91 = vmatprep.subr.mxu0 0.0
    %92 = vmatpush1.msra.mxu0 0.0
    %93 = vmatprep.subr.mxu0 0.0
    %94 = vmatpush1.msra.mxu0 0.0
    %95 = vmatprep.subr.mxu0 0.0
    %96 = vmatpush1.msra.mxu0 0.0
    %97 = vmatprep.subr.mxu0 0.0
    %98 = vmatpush1.msra.mxu0 0.0
    %99 = vmatprep.subr.mxu0 0.0
    %100 = vmatpush1.msra.mxu0 0.0
    %101 = vmatprep.subr.mxu0 0.0
    %102 = vmatpush1.msra.mxu0 0.0
    %103 = vmatprep.subr.mxu0 0.0
    %104 = vmatpush1.msra.mxu0 0.0
    %105 = vmatprep.subr.mxu0 0.0
    %106 = vmatpush1.msra.mxu0 0.0
    %107 = vmatprep.subr.mxu0 0.0
    %108 = vmatpush1.msra.mxu0 0.0
    %109 = vmatprep.subr.mxu0 0.0
    %110 = vmatpush1.msra.mxu0 0.0
    %111 = vmatprep.subr.mxu0 0.0
    %112 = vmatpush1.msra.mxu0 0.0
    %113 = vmatprep.subr.mxu0 0.0
    %114 = vmatpush1.msra.mxu0 0.0
    %115 = vmatprep.subr.mxu0 0.0
    %116 = vmatpush1.msra.mxu0 0.0
    %117 = vmatprep.subr.mxu0 0.0
    %118 = vmatpush1.msra.mxu0 0.0
    %119 = vmatprep.subr.mxu0 0.0
    %120 = vmatpush1.msra.mxu0 0.0
    %121 = vmatprep.subr.mxu0 0.0
    %122 = vmatpush1.msra.mxu0 0.0
    %123 = vmatprep.subr.mxu0 0.0
    %124 = vmatpush1.msra.mxu0 0.0
    %125 = vmatprep.subr.mxu0 0.0
    %126 = vmatpush1.msra.mxu0 0.0
    %127 = vmatprep.subr.mxu0 0.0
    %128 = vmatpush1.msra.mxu0 0.0
    %129 = vmatprep.subr.mxu0 0.0
    %130 = vmatpush1.msra.mxu0 0.0
    %131 = vmatprep.subr.mxu0 0.0
    %132 = vmatpush1.msra.mxu0 0.0
    %133 = vmatprep.subr.mxu0 0.0
    %134 = vmatpush1.msra.mxu0 0.0
    %135 = vmatprep.subr.mxu0 0.0
    %136 = vmatpush1.msra.mxu0 0.0
    %137 = vmatprep.mubr.f32.mxu0 0.0
    %138 = vmatmul.mubr.f32.gmra.mrb[0].mxu0 %v68
    %v139 = vpop.f32.mrb[0].mxu0
    %v140 = vadd.f32 %v65, %v139
    %v141 = vpop.f32.mrb[0].mxu0
    %142 = vmatprep.mubr.f32.mxu0 0.0
    %143 = vmatmul.mubr.f32.gmra.mrb[0].mxu0 %v71
    %v144 = vpop.f32.mrb[0].mxu0
    %v145 = vadd.f32 %v65, %v144
    %v146 = vpop.f32.mrb[0].mxu0
    %147 = vdwg.mxu0
    %v148 = vlaneseq
    %v149 = vshrl.u32 %v148, 7
    %v150 = vsub.s32 0, %v149
    %v151 = vrot.slane %v53, %v150
    %152 = vmatprep.subr.mxu0 0.0
    %153 = vmatpush1.msra.mxu0 %v32
    %154 = vmatprep.subr.mxu0 0.0
    %155 = vmatpush1.msra.mxu0 %v33
    %156 = vmatprep.subr.mxu0 0.0
    %157 = vmatpush1.msra.mxu0 %v34
    %158 = vmatprep.subr.mxu0 0.0
    %159 = vmatpush1.msra.mxu0 %v35
    %160 = vmatprep.subr.mxu0 0.0
    %161 = vmatpush1.msra.mxu0 0.0
    %162 = vmatprep.subr.mxu0 0.0
    %163 = vmatpush1.msra.mxu0 0.0
    %164 = vmatprep.subr.mxu0 0.0
    %165 = vmatpush1.msra.mxu0 0.0
    %166 = vmatprep.subr.mxu0 0.0
    %167 = vmatpush1.msra.mxu0 0.0
    %168 = vmatprep.subr.mxu0 0.0
    %169 = vmatpush1.msra.mxu0 0.0
    %170 = vmatprep.subr.mxu0 0.0
    %171 = vmatpush1.msra.mxu0 0.0
    %172 = vmatprep.subr.mxu0 0.0
    %173 = vmatpush1.msra.mxu0 0.0
    %174 = vmatprep.subr.mxu0 0.0
    %175 = vmatpush1.msra.mxu0 0.0
    %176 = vmatprep.subr.mxu0 0.0
    %177 = vmatpush1.msra.mxu0 0.0
    %178 = vmatprep.subr.mxu0 0.0
    %179 = vmatpush1.msra.mxu0 0.0
    %180 = vmatprep.subr.mxu0 0.0
    %181 = vmatpush1.msra.mxu0 0.0
    %182 = vmatprep.subr.mxu0 0.0
    %183 = vmatpush1.msra.mxu0 0.0
    %184 = vmatprep.subr.mxu0 0.0
    %185 = vmatpush1.msra.mxu0 0.0
    %186 = vmatprep.subr.mxu0 0.0
    %187 = vmatpush1.msra.mxu0 0.0
    %188 = vmatprep.subr.mxu0 0.0
    %189 = vmatpush1.msra.mxu0 0.0
    %190 = vmatprep.subr.mxu0 0.0
    %191 = vmatpush1.msra.mxu0 0.0
    %192 = vmatprep.subr.mxu0 0.0
    %193 = vmatpush1.msra.mxu0 0.0
    %194 = vmatprep.subr.mxu0 0.0
    %195 = vmatpush1.msra.mxu0 0.0
    %196 = vmatprep.subr.mxu0 0.0
    %197 = vmatpush1.msra.mxu0 0.0
    %198 = vmatprep.subr.mxu0 0.0
    %199 = vmatpush1.msra.mxu0 0.0
    %200 = vmatprep.subr.mxu0 0.0
    %201 = vmatpush1.msra.mxu0 0.0
    %202 = vmatprep.subr.mxu0 0.0
    %203 = vmatpush1.msra.mxu0 0.0
    %204 = vmatprep.subr.mxu0 0.0
    %205 = vmatpush1.msra.mxu0 0.0
    %206 = vmatprep.subr.mxu0 0.0
    %207 = vmatpush1.msra.mxu0 0.0
    %208 = vmatprep.subr.mxu0 0.0
    %209 = vmatpush1.msra.mxu0 0.0
    %210 = vmatprep.subr.mxu0 0.0
    %211 = vmatpush1.msra.mxu0 0.0
    %212 = vmatprep.subr.mxu0 0.0
    %213 = vmatpush1.msra.mxu0 0.0
    %214 = vmatprep.subr.mxu0 0.0
    %215 = vmatpush1.msra.mxu0 0.0
    %216 = vmatprep.mubr.f32.mxu0 0.0
    %217 = vmatmul.mubr.f32.gmra.mrb[0].mxu0 %v68
    %v218 = vpop.f32.mrb[0].mxu0
    %v219 = vadd.f32 %v151, %v218
    %v220 = vpop.f32.mrb[0].mxu0
    %221 = vmatprep.mubr.f32.mxu0 0.0
    %222 = vmatmul.mubr.f32.gmra.mrb[0].mxu0 %v71
    %v223 = vpop.f32.mrb[0].mxu0
    %v224 = vadd.f32 %v151, %v223
    %v225 = vpop.f32.mrb[0].mxu0
    %226 = vdwg.mxu0
    %v227 = vlaneseq
    %v228 = vshrl.u32 %v227, 7
    %v229 = vsub.s32 0, %v228
    %v230 = vrot.slane %v54, %v229
    %231 = vmatprep.subr.mxu0 0.0
    %232 = vmatpush1.msra.mxu0 %v36
    %233 = vmatprep.subr.mxu0 0.0
    %234 = vmatpush1.msra.mxu0 %v37
    %235 = vmatprep.subr.mxu0 0.0
    %236 = vmatpush1.msra.mxu0 %v38
    %237 = vmatprep.subr.mxu0 0.0
    %238 = vmatpush1.msra.mxu0 %v39
    %239 = vmatprep.subr.mxu0 0.0
    %240 = vmatpush1.msra.mxu0 0.0
    %241 = vmatprep.subr.mxu0 0.0
    %242 = vmatpush1.msra.mxu0 0.0
    %243 = vmatprep.subr.mxu0 0.0
    %244 = vmatpush1.msra.mxu0 0.0
    %245 = vmatprep.subr.mxu0 0.0
    %246 = vmatpush1.msra.mxu0 0.0
    %247 = vmatprep.subr.mxu0 0.0
    %248 = vmatpush1.msra.mxu0 0.0
    %249 = vmatprep.subr.mxu0 0.0
    %250 = vmatpush1.msra.mxu0 0.0
    %251 = vmatprep.subr.mxu0 0.0
    %252 = vmatpush1.msra.mxu0 0.0
    %253 = vmatprep.subr.mxu0 0.0
    %254 = vmatpush1.msra.mxu0 0.0
    %255 = vmatprep.subr.mxu0 0.0
    %256 = vmatpush1.msra.mxu0 0.0
    %257 = vmatprep.subr.mxu0 0.0
    %258 = vmatpush1.msra.mxu0 0.0
    %259 = vmatprep.subr.mxu0 0.0
    %260 = vmatpush1.msra.mxu0 0.0
    %261 = vmatprep.subr.mxu0 0.0
    %262 = vmatpush1.msra.mxu0 0.0
    %263 = vmatprep.subr.mxu0 0.0
    %264 = vmatpush1.msra.mxu0 0.0
    %265 = vmatprep.subr.mxu0 0.0
    %266 = vmatpush1.msra.mxu0 0.0
    %267 = vmatprep.subr.mxu0 0.0
    %268 = vmatpush1.msra.mxu0 0.0
    %269 = vmatprep.subr.mxu0 0.0
    %270 = vmatpush1.msra.mxu0 0.0
    %271 = vmatprep.subr.mxu0 0.0
    %272 = vmatpush1.msra.mxu0 0.0
    %273 = vmatprep.subr.mxu0 0.0
    %274 = vmatpush1.msra.mxu0 0.0
    %275 = vmatprep.subr.mxu0 0.0
    %276 = vmatpush1.msra.mxu0 0.0
    %277 = vmatprep.subr.mxu0 0.0
    %278 = vmatpush1.msra.mxu0 0.0
    %279 = vmatprep.subr.mxu0 0.0
    %280 = vmatpush1.msra.mxu0 0.0
    %281 = vmatprep.subr.mxu0 0.0
    %282 = vmatpush1.msra.mxu0 0.0
    %283 = vmatprep.subr.mxu0 0.0
    %284 = vmatpush1.msra.mxu0 0.0
    %285 = vmatprep.subr.mxu0 0.0
    %286 = vmatpush1.msra.mxu0 0.0
    %287 = vmatprep.subr.mxu0 0.0
    %288 = vmatpush1.msra.mxu0 0.0
    %289 = vmatprep.subr.mxu0 0.0
    %290 = vmatpush1.msra.mxu0 0.0
    %291 = vmatprep.subr.mxu0 0.0
    %292 = vmatpush1.msra.mxu0 0.0
    %293 = vmatprep.subr.mxu0 0.0
    %294 = vmatpush1.msra.mxu0 0.0
    %295 = vmatprep.mubr.f32.mxu0 0.0
    %296 = vmatmul.mubr.f32.gmra.mrb[0].mxu0 %v68
    %v297 = vpop.f32.mrb[0].mxu0
    %v298 = vadd.f32 %v230, %v297
    %v299 = vpop.f32.mrb[0].mxu0
    %300 = vmatprep.mubr.f32.mxu0 0.0
    %301 = vmatmul.mubr.f32.gmra.mrb[0].mxu0 %v71
    %v302 = vpop.f32.mrb[0].mxu0
    %v303 = vadd.f32 %v230, %v302
    %v304 = vpop.f32.mrb[0].mxu0
    %305 = vdwg.mxu0
    %v306 = vmul.f32 %v140, %v219
    %v307 = vmul.f32 %v140, %v224
    %v308 = vmul.f32 %v145, %v219
    %v309 = vmul.f32 %v145, %v224
    %v311 = vsel %vm66, %v306, 0
    %v314 = vsel %vm66, %v307, 0
    %v317 = vsel %vm66, %v308, 0
    %v320 = vsel %vm66, %v309, 0
    %322 = vmatprep.subr.mxu0 0.0
    %323 = vmatpush1.msra.mxu0 %v18
    %324 = vmatprep.subr.mxu0 0.0
    %325 = vmatpush1.msra.mxu0 %v19
    %326 = vmatprep.subr.mxu0 0.0
    %327 = vmatpush1.msra.mxu0 %v20
    %328 = vmatprep.subr.mxu0 0.0
    %329 = vmatpush1.msra.mxu0 %v21
    %330 = vmatprep.subr.mxu0 0.0
    %331 = vmatpush1.msra.mxu0 0.0
    %332 = vmatprep.subr.mxu0 0.0
    %333 = vmatpush1.msra.mxu0 0.0
    %334 = vmatprep.subr.mxu0 0.0
    %335 = vmatpush1.msra.mxu0 0.0
    %336 = vmatprep.subr.mxu0 0.0
    %337 = vmatpush1.msra.mxu0 0.0
    %338 = vmatprep.subr.mxu0 0.0
    %339 = vmatpush1.msra.mxu0 0.0
    %340 = vmatprep.subr.mxu0 0.0
    %341 = vmatpush1.msra.mxu0 0.0
    %342 = vmatprep.subr.mxu0 0.0
    %343 = vmatpush1.msra.mxu0 0.0
    %344 = vmatprep.subr.mxu0 0.0
    %345 = vmatpush1.msra.mxu0 0.0
    %346 = vmatprep.subr.mxu0 0.0
    %347 = vmatpush1.msra.mxu0 0.0
    %348 = vmatprep.subr.mxu0 0.0
    %349 = vmatpush1.msra.mxu0 0.0
    %350 = vmatprep.subr.mxu0 0.0
    %351 = vmatpush1.msra.mxu0 0.0
    %352 = vmatprep.subr.mxu0 0.0
    %353 = vmatpush1.msra.mxu0 0.0
    %354 = vmatprep.subr.mxu0 0.0
    %355 = vmatpush1.msra.mxu0 0.0
    %356 = vmatprep.subr.mxu0 0.0
    %357 = vmatpush1.msra.mxu0 0.0
    %358 = vmatprep.subr.mxu0 0.0
    %359 = vmatpush1.msra.mxu0 0.0
    %360 = vmatprep.subr.mxu0 0.0
    %361 = vmatpush1.msra.mxu0 0.0
    %362 = vmatprep.subr.mxu0 0.0
    %363 = vmatpush1.msra.mxu0 0.0
    %364 = vmatprep.subr.mxu0 0.0
    %365 = vmatpush1.msra.mxu0 0.0
    %366 = vmatprep.subr.mxu0 0.0
    %367 = vmatpush1.msra.mxu0 0.0
    %368 = vmatprep.subr.mxu0 0.0
    %369 = vmatpush1.msra.mxu0 0.0
    %370 = vmatprep.subr.mxu0 0.0
    %371 = vmatpush1.msra.mxu0 0.0
    %372 = vmatprep.subr.mxu0 0.0
    %373 = vmatpush1.msra.mxu0 0.0
    %374 = vmatprep.subr.mxu0 0.0
    %375 = vmatpush1.msra.mxu0 0.0
    %376 = vmatprep.subr.mxu0 0.0
    %377 = vmatpush1.msra.mxu0 0.0
    %378 = vmatprep.subr.mxu0 0.0
    %379 = vmatpush1.msra.mxu0 0.0
    %380 = vmatprep.subr.mxu0 0.0
    %381 = vmatpush1.msra.mxu0 0.0
    %382 = vmatprep.subr.mxu0 0.0
    %383 = vmatpush1.msra.mxu0 0.0
    %384 = vmatprep.subr.mxu0 0.0
    %385 = vmatpush1.msra.mxu0 0.0
    %386 = vmatprep.mubr.f32.mxu0 0.0
    %387 = vmatmul.mubr.f32.gmra.mrb[0].mxu0 %v311
    %v388 = vpop.f32.mrb[0].mxu0
    %v389 = vadd.f32 0.0, %v388
    %v390 = vpop.f32.mrb[0].mxu0
    %391 = vmatprep.mubr.f32.mxu0 0.0
    %392 = vmatmul.mubr.f32.gmra.mrb[0].mxu0 %v314
    %v393 = vpop.f32.mrb[0].mxu0
    %v394 = vadd.f32 0.0, %v393
    %v395 = vpop.f32.mrb[0].mxu0
    %396 = vmatprep.mubr.f32.mxu0 0.0
    %397 = vmatmul.mubr.f32.gmra.mrb[0].mxu0 %v317
    %v398 = vpop.f32.mrb[0].mxu0
    %v399 = vadd.f32 0.0, %v398
    %v400 = vpop.f32.mrb[0].mxu0
    %401 = vmatprep.mubr.f32.mxu0 0.0
    %402 = vmatmul.mubr.f32.gmra.mrb[0].mxu0 %v320
    %v403 = vpop.f32.mrb[0].mxu0
    %v404 = vadd.f32 0.0, %v403
    %v405 = vpop.f32.mrb[0].mxu0
    %406 = vdwg.mxu0
    %v407 = vsub.f32 %v389, %v394
    %v408 = vxor.u32 %v407, 2147483648
    %v409 = vmul.f32 %v408, 1.442695
    %v410 = vpow.pop %v409
    %v411 = vadd.f32 %v410, 1.0
    %v412 = vrcp.pop %v411
    %v413 = vmul.f32 1.0, %v412
    %v414 = vsub.f32 %v399, %v404
    %v415 = vxor.u32 %v414, 2147483648
    %v416 = vmul.f32 %v415, 1.442695
    %v417 = vpow.pop %v416
    %v418 = vadd.f32 %v417, 1.0
    %v419 = vrcp.pop %v418
    %v420 = vmul.f32 1.0, %v419
    %v421 = vsub.f32 1.0, %v413
    %v422 = vsub.f32 1.0, %v420
    %v424 = vsel %vm66, %v413, 0
    %v427 = vsel %vm66, %v421, 0
    %v430 = vsel %vm66, %v420, 0
    %v433 = vsel %vm66, %v422, 0
    %435 = vmatprep.subr.mxu0 0.0
    %436 = vmatpush1.msra.mxu0 %v22
    %437 = vmatprep.subr.mxu0 0.0
    %438 = vmatpush1.msra.mxu0 %v23
    %439 = vmatprep.subr.mxu0 0.0
    %440 = vmatpush1.msra.mxu0 %v24
    %441 = vmatprep.subr.mxu0 0.0
    %442 = vmatpush1.msra.mxu0 %v25
    %443 = vmatprep.subr.mxu0 0.0
    %444 = vmatpush1.msra.mxu0 0.0
    %445 = vmatprep.subr.mxu0 0.0
    %446 = vmatpush1.msra.mxu0 0.0
    %447 = vmatprep.subr.mxu0 0.0
    %448 = vmatpush1.msra.mxu0 0.0
    %449 = vmatprep.subr.mxu0 0.0
    %450 = vmatpush1.msra.mxu0 0.0
    %451 = vmatprep.subr.mxu0 0.0
    %452 = vmatpush1.msra.mxu0 0.0
    %453 = vmatprep.subr.mxu0 0.0
    %454 = vmatpush1.msra.mxu0 0.0
    %455 = vmatprep.subr.mxu0 0.0
    %456 = vmatpush1.msra.mxu0 0.0
    %457 = vmatprep.subr.mxu0 0.0
    %458 = vmatpush1.msra.mxu0 0.0
    %459 = vmatprep.subr.mxu0 0.0
    %460 = vmatpush1.msra.mxu0 0.0
    %461 = vmatprep.subr.mxu0 0.0
    %462 = vmatpush1.msra.mxu0 0.0
    %463 = vmatprep.subr.mxu0 0.0
    %464 = vmatpush1.msra.mxu0 0.0
    %465 = vmatprep.subr.mxu0 0.0
    %466 = vmatpush1.msra.mxu0 0.0
    %467 = vmatprep.subr.mxu0 0.0
    %468 = vmatpush1.msra.mxu0 0.0
    %469 = vmatprep.subr.mxu0 0.0
    %470 = vmatpush1.msra.mxu0 0.0
    %471 = vmatprep.subr.mxu0 0.0
    %472 = vmatpush1.msra.mxu0 0.0
    %473 = vmatprep.subr.mxu0 0.0
    %474 = vmatpush1.msra.mxu0 0.0
    %475 = vmatprep.subr.mxu0 0.0
    %476 = vmatpush1.msra.mxu0 0.0
    %477 = vmatprep.subr.mxu0 0.0
    %478 = vmatpush1.msra.mxu0 0.0
    %479 = vmatprep.subr.mxu0 0.0
    %480 = vmatpush1.msra.mxu0 0.0
    %481 = vmatprep.subr.mxu0 0.0
    %482 = vmatpush1.msra.mxu0 0.0
    %483 = vmatprep.subr.mxu0 0.0
    %484 = vmatpush1.msra.mxu0 0.0
    %485 = vmatprep.subr.mxu0 0.0
    %486 = vmatpush1.msra.mxu0 0.0
    %487 = vmatprep.subr.mxu0 0.0
    %488 = vmatpush1.msra.mxu0 0.0
    %489 = vmatprep.subr.mxu0 0.0
    %490 = vmatpush1.msra.mxu0 0.0
    %491 = vmatprep.subr.mxu0 0.0
    %492 = vmatpush1.msra.mxu0 0.0
    %493 = vmatprep.subr.mxu0 0.0
    %494 = vmatpush1.msra.mxu0 0.0
    %495 = vmatprep.subr.mxu0 0.0
    %496 = vmatpush1.msra.mxu0 0.0
    %497 = vmatprep.subr.mxu0 0.0
    %498 = vmatpush1.msra.mxu0 0.0
    %499 = vmatprep.mubr.f32.mxu0 0.0
    %500 = vmatmul.mubr.f32.gmra.mrb[0].mxu0 %v424
    %v501 = vpop.f32.mrb[0].mxu0
    %v502 = vadd.f32 0.0, %v501
    %v503 = vpop.f32.mrb[0].mxu0
    %504 = vmatprep.mubr.f32.mxu0 0.0
    %505 = vmatmul.mubr.f32.gmra.mrb[0].mxu0 %v427
    %v506 = vpop.f32.mrb[0].mxu0
    %v507 = vadd.f32 0.0, %v506
    %v508 = vpop.f32.mrb[0].mxu0
    %509 = vmatprep.mubr.f32.mxu0 0.0
    %510 = vmatmul.mubr.f32.gmra.mrb[0].mxu0 %v430
    %v511 = vpop.f32.mrb[0].mxu0
    %v512 = vadd.f32 0.0, %v511
    %v513 = vpop.f32.mrb[0].mxu0
    %514 = vmatprep.mubr.f32.mxu0 0.0
    %515 = vmatmul.mubr.f32.gmra.mrb[0].mxu0 %v433
    %v516 = vpop.f32.mrb[0].mxu0
    %v517 = vadd.f32 0.0, %v516
    %v518 = vpop.f32.mrb[0].mxu0
    %519 = vdwg.mxu0
    %v520 = vmul.f32 %v502, %v298
    %v521 = vmul.f32 %v507, %v303
    %v522 = vadd.f32 %v520, %v521
    %v523 = vmul.f32 %v512, %v298
    %v524 = vmul.f32 %v517, %v303
    %v525 = vadd.f32 %v523, %v524
    %v526 = vlaneseq
    %v527 = vshrl.u32 %v526, 7
    %v528 = vsub.s32 0, %v527
    %v529 = vrot.slane %v55, %v528
    %v531 = vsel %vm66, %v522, 0
    %v534 = vsel %vm66, %v525, 0
    %536 = vmatprep.subr.mxu0 0.0
    %537 = vmatpush1.msra.mxu0 %v40
    %538 = vmatprep.subr.mxu0 0.0
    %539 = vmatpush1.msra.mxu0 %v41
    %540 = vmatprep.subr.mxu0 0.0
    %541 = vmatpush1.msra.mxu0 %v42
    %542 = vmatprep.subr.mxu0 0.0
    %543 = vmatpush1.msra.mxu0 %v43
    %544 = vmatprep.subr.mxu0 0.0
    %545 = vmatpush1.msra.mxu0 0.0
    %546 = vmatprep.subr.mxu0 0.0
    %547 = vmatpush1.msra.mxu0 0.0
    %548 = vmatprep.subr.mxu0 0.0
    %549 = vmatpush1.msra.mxu0 0.0
    %550 = vmatprep.subr.mxu0 0.0
    %551 = vmatpush1.msra.mxu0 0.0
    %552 = vmatprep.subr.mxu0 0.0
    %553 = vmatpush1.msra.mxu0 0.0
    %554 = vmatprep.subr.mxu0 0.0
    %555 = vmatpush1.msra.mxu0 0.0
    %556 = vmatprep.subr.mxu0 0.0
    %557 = vmatpush1.msra.mxu0 0.0
    %558 = vmatprep.subr.mxu0 0.0
    %559 = vmatpush1.msra.mxu0 0.0
    %560 = vmatprep.subr.mxu0 0.0
    %561 = vmatpush1.msra.mxu0 0.0
    %562 = vmatprep.subr.mxu0 0.0
    %563 = vmatpush1.msra.mxu0 0.0
    %564 = vmatprep.subr.mxu0 0.0
    %565 = vmatpush1.msra.mxu0 0.0
    %566 = vmatprep.subr.mxu0 0.0
    %567 = vmatpush1.msra.mxu0 0.0
    %568 = vmatprep.subr.mxu0 0.0
    %569 = vmatpush1.msra.mxu0 0.0
    %570 = vmatprep.subr.mxu0 0.0
    %571 = vmatpush1.msra.mxu0 0.0
    %572 = vmatprep.subr.mxu0 0.0
    %573 = vmatpush1.msra.mxu0 0.0
    %574 = vmatprep.subr.mxu0 0.0
    %575 = vmatpush1.msra.mxu0 0.0
    %576 = vmatprep.subr.mxu0 0.0
    %577 = vmatpush1.msra.mxu0 0.0
    %578 = vmatprep.subr.mxu0 0.0
    %579 = vmatpush1.msra.mxu0 0.0
    %580 = vmatprep.subr.mxu0 0.0
    %581 = vmatpush1.msra.mxu0 0.0
    %582 = vmatprep.subr.mxu0 0.0
    %583 = vmatpush1.msra.mxu0 0.0
    %584 = vmatprep.subr.mxu0 0.0
    %585 = vmatpush1.msra.mxu0 0.0
    %586 = vmatprep.subr.mxu0 0.0
    %587 = vmatpush1.msra.mxu0 0.0
    %588 = vmatprep.subr.mxu0 0.0
    %589 = vmatpush1.msra.mxu0 0.0
    %590 = vmatprep.subr.mxu0 0.0
    %591 = vmatpush1.msra.mxu0 0.0
    %592 = vmatprep.subr.mxu0 0.0
    %593 = vmatpush1.msra.mxu0 0.0
    %594 = vmatprep.subr.mxu0 0.0
    %595 = vmatpush1.msra.mxu0 0.0
    %596 = vmatprep.subr.mxu0 0.0
    %597 = vmatpush1.msra.mxu0 0.0
    %598 = vmatprep.subr.mxu0 0.0
    %599 = vmatpush1.msra.mxu0 0.0
    %600 = vmatprep.mubr.f32.mxu0 0.0
    %601 = vmatmul.mubr.f32.gmra.mrb[0].mxu0 %v531
    %v602 = vpop.f32.mrb[0].mxu0
    %v603 = vadd.f32 %v529, %v602
    %v604 = vpop.f32.mrb[0].mxu0
    %605 = vmatprep.mubr.f32.mxu0 0.0
    %606 = vmatmul.mubr.f32.gmra.mrb[0].mxu0 %v534
    %v607 = vpop.f32.mrb[0].mxu0
    %v608 = vadd.f32 %v529, %v607
    %v609 = vpop.f32.mrb[0].mxu0
    %610 = vdwg.mxu0
    %v611 = vadd.f32 %v26, %v603
    %v612 = vadd.f32 %v27, %v608
    %v613 = vsel %vm66, %v611, 0.0
    %614 = vadd.xlane.f32.xlu0 %v613
    %v615 = vpop.xlane.xlu0 %614
    %v616 = vsel %vm66, %v612, 0.0
    %617 = vadd.xlane.f32.xlu0 %v616
    %v618 = vpop.xlane.xlu0 %617
    %v619 = vrcp.pop 32.0
    %v620 = vmul.f32 %v615, %v619
    %v621 = vmul.f32 %v618, %v619
    %v622 = vsub.f32 %v611, %v620
    %v623 = vsub.f32 %v612, %v621
    %v624 = vmul.f32 %v622, %v622
    %v625 = vmul.f32 %v623, %v623
    %v626 = vsel %vm66, %v624, 0.0
    %627 = vadd.xlane.f32.xlu0 %v626
    %v628 = vpop.xlane.xlu0 %627
    %v629 = vsel %vm66, %v625, 0.0
    %630 = vadd.xlane.f32.xlu0 %v629
    %v631 = vpop.xlane.xlu0 %630
    %v632 = vmul.f32 %v628, %v619
    %v633 = vmul.f32 %v631, %v619
    %v634 = vadd.f32 %v632, 1e-05
    %v635 = vadd.f32 %v633, 1e-05
    %v636 = vrsqrt.pop %v634
    %v637 = vrsqrt.pop %v635
    %v638 = vmul.f32 %v622, %v636
    %v639 = vmul.f32 %v623, %v637
    %v640 = vlaneseq
    %v641 = vshrl.u32 %v640, 7
    %v642 = vsub.s32 0, %v641
    %v643 = vrot.slane %v56, %v642
    %v644 = vmul.f32 %v638, %v643
    %v645 = vmul.f32 %v639, %v643
    %v646 = vlaneseq
    %v647 = vshrl.u32 %v646, 7
    %v648 = vsub.s32 0, %v647
    %v649 = vrot.slane %v57, %v648
    %v650 = vadd.f32 %v644, %v649
    %v651 = vadd.f32 %v645, %v649
    %v652 = vlaneseq
    %v653 = vshrl.u32 %v652, 7
    %v654 = vsub.s32 0, %v653
    %v655 = vrot.slane %v58, %v654
    %v657 = vsel %vm66, %v650, 0
    %v660 = vsel %vm66, %v651, 0
    %662 = vmatprep.subr.mxu0 0.0
    %663 = vmatpush1.msra.mxu0 %v44
    %664 = vmatprep.subr.mxu0 0.0
    %665 = vmatpush1.msra.mxu0 %v45
    %666 = vmatprep.subr.mxu0 0.0
    %667 = vmatpush1.msra.mxu0 %v46
    %668 = vmatprep.subr.mxu0 0.0
    %669 = vmatpush1.msra.mxu0 %v47
    %670 = vmatprep.subr.mxu0 0.0
    %671 = vmatpush1.msra.mxu0 0.0
    %672 = vmatprep.subr.mxu0 0.0
    %673 = vmatpush1.msra.mxu0 0.0
    %674 = vmatprep.subr.mxu0 0.0
    %675 = vmatpush1.msra.mxu0 0.0
    %676 = vmatprep.subr.mxu0 0.0
    %677 = vmatpush1.msra.mxu0 0.0
    %678 = vmatprep.subr.mxu0 0.0
    %679 = vmatpush1.msra.mxu0 0.0
    %680 = vmatprep.subr.mxu0 0.0
    %681 = vmatpush1.msra.mxu0 0.0
    %682 = vmatprep.subr.mxu0 0.0
    %683 = vmatpush1.msra.mxu0 0.0
    %684 = vmatprep.subr.mxu0 0.0
    %685 = vmatpush1.msra.mxu0 0.0
    %686 = vmatprep.subr.mxu0 0.0
    %687 = vmatpush1.msra.mxu0 0.0
    %688 = vmatprep.subr.mxu0 0.0
    %689 = vmatpush1.msra.mxu0 0.0
    %690 = vmatprep.subr.mxu0 0.0
    %691 = vmatpush1.msra.mxu0 0.0
    %692 = vmatprep.subr.mxu0 0.0
    %693 = vmatpush1.msra.mxu0 0.0
    %694 = vmatprep.subr.mxu0 0.0
    %695 = vmatpush1.msra.mxu0 0.0
    %696 = vmatprep.subr.mxu0 0.0
    %697 = vmatpush1.msra.mxu0 0.0
    %698 = vmatprep.subr.mxu0 0.0
    %699 = vmatpush1.msra.mxu0 0.0
    %700 = vmatprep.subr.mxu0 0.0
    %701 = vmatpush1.msra.mxu0 0.0
    %702 = vmatprep.subr.mxu0 0.0
    %703 = vmatpush1.msra.mxu0 0.0
    %704 = vmatprep.subr.mxu0 0.0
    %705 = vmatpush1.msra.mxu0 0.0
    %706 = vmatprep.subr.mxu0 0.0
    %707 = vmatpush1.msra.mxu0 0.0
    %708 = vmatprep.subr.mxu0 0.0
    %709 = vmatpush1.msra.mxu0 0.0
    %710 = vmatprep.subr.mxu0 0.0
    %711 = vmatpush1.msra.mxu0 0.0
    %712 = vmatprep.subr.mxu0 0.0
    %713 = vmatpush1.msra.mxu0 0.0
    %714 = vmatprep.subr.mxu0 0.0
    %715 = vmatpush1.msra.mxu0 0.0
    %716 = vmatprep.subr.mxu0 0.0
    %717 = vmatpush1.msra.mxu0 0.0
    %718 = vmatprep.subr.mxu0 0.0
    %719 = vmatpush1.msra.mxu0 0.0
    %720 = vmatprep.subr.mxu0 0.0
    %721 = vmatpush1.msra.mxu0 0.0
    %722 = vmatprep.subr.mxu0 0.0
    %723 = vmatpush1.msra.mxu0 0.0
    %724 = vmatprep.subr.mxu0 0.0
    %725 = vmatpush1.msra.mxu0 0.0
    %726 = vmatprep.mubr.f32.mxu0 0.0
    %727 = vmatmul.mubr.f32.gmra.mrb[0].mxu0 %v657
    %v728 = vpop.f32.mrb[0].mxu0
    %v729 = vadd.f32 %v655, %v728
    %v730 = vpop.f32.mrb[0].mxu0
    %731 = vmatprep.mubr.f32.mxu0 0.0
    %732 = vmatmul.mubr.f32.gmra.mrb[0].mxu0 %v660
    %v733 = vpop.f32.mrb[0].mxu0
    %v734 = vadd.f32 %v655, %v733
    %v735 = vpop.f32.mrb[0].mxu0
    %736 = vdwg.mxu0
    %v737 = vmax.f32 %v729, 0.0
    %v738 = vmax.f32 %v734, 0.0
    %v739 = vlaneseq
    %v740 = vshrl.u32 %v739, 7
    %v741 = vsub.s32 0, %v740
    %v742 = vrot.slane %v59, %v741
    %v744 = vsel %vm66, %v737, 0
    %v747 = vsel %vm66, %v738, 0
    %749 = vmatprep.subr.mxu0 0.0
    %750 = vmatpush1.msra.mxu0 %v48
    %751 = vmatprep.subr.mxu0 0.0
    %752 = vmatpush1.msra.mxu0 %v49
    %753 = vmatprep.subr.mxu0 0.0
    %754 = vmatpush1.msra.mxu0 %v50
    %755 = vmatprep.subr.mxu0 0.0
    %756 = vmatpush1.msra.mxu0 %v51
    %757 = vmatprep.subr.mxu0 0.0
    %758 = vmatpush1.msra.mxu0 0.0
    %759 = vmatprep.subr.mxu0 0.0
    %760 = vmatpush1.msra.mxu0 0.0
    %761 = vmatprep.subr.mxu0 0.0
    %762 = vmatpush1.msra.mxu0 0.0
    %763 = vmatprep.subr.mxu0 0.0
    %764 = vmatpush1.msra.mxu0 0.0
    %765 = vmatprep.subr.mxu0 0.0
    %766 = vmatpush1.msra.mxu0 0.0
    %767 = vmatprep.subr.mxu0 0.0
    %768 = vmatpush1.msra.mxu0 0.0
    %769 = vmatprep.subr.mxu0 0.0
    %770 = vmatpush1.msra.mxu0 0.0
    %771 = vmatprep.subr.mxu0 0.0
    %772 = vmatpush1.msra.mxu0 0.0
    %773 = vmatprep.subr.mxu0 0.0
    %774 = vmatpush1.msra.mxu0 0.0
    %775 = vmatprep.subr.mxu0 0.0
    %776 = vmatpush1.msra.mxu0 0.0
    %777 = vmatprep.subr.mxu0 0.0
    %778 = vmatpush1.msra.mxu0 0.0
    %779 = vmatprep.subr.mxu0 0.0
    %780 = vmatpush1.msra.mxu0 0.0
    %781 = vmatprep.subr.mxu0 0.0
    %782 = vmatpush1.msra.mxu0 0.0
    %783 = vmatprep.subr.mxu0 0.0
    %784 = vmatpush1.msra.mxu0 0.0
    %785 = vmatprep.subr.mxu0 0.0
    %786 = vmatpush1.msra.mxu0 0.0
    %787 = vmatprep.subr.mxu0 0.0
    %788 = vmatpush1.msra.mxu0 0.0
    %789 = vmatprep.subr.mxu0 0.0
    %790 = vmatpush1.msra.mxu0 0.0
    %791 = vmatprep.subr.mxu0 0.0
    %792 = vmatpush1.msra.mxu0 0.0
    %793 = vmatprep.subr.mxu0 0.0
    %794 = vmatpush1.msra.mxu0 0.0
    %795 = vmatprep.subr.mxu0 0.0
    %796 = vmatpush1.msra.mxu0 0.0
    %797 = vmatprep.subr.mxu0 0.0
    %798 = vmatpush1.msra.mxu0 0.0
    %799 = vmatprep.subr.mxu0 0.0
    %800 = vmatpush1.msra.mxu0 0.0
    %801 = vmatprep.subr.mxu0 0.0
    %802 = vmatpush1.msra.mxu0 0.0
    %803 = vmatprep.subr.mxu0 0.0
    %804 = vmatpush1.msra.mxu0 0.0
    %805 = vmatprep.subr.mxu0 0.0
    %806 = vmatpush1.msra.mxu0 0.0
    %807 = vmatprep.subr.mxu0 0.0
    %808 = vmatpush1.msra.mxu0 0.0
    %809 = vmatprep.subr.mxu0 0.0
    %810 = vmatpush1.msra.mxu0 0.0
    %811 = vmatprep.subr.mxu0 0.0
    %812 = vmatpush1.msra.mxu0 0.0
    %813 = vmatprep.mubr.f32.mxu0 0.0
    %814 = vmatmul.mubr.f32.gmra.mrb[0].mxu0 %v744
    %v815 = vpop.f32.mrb[0].mxu0
    %v816 = vadd.f32 %v742, %v815
    %v817 = vpop.f32.mrb[0].mxu0
    %818 = vmatprep.mubr.f32.mxu0 0.0
    %819 = vmatmul.mubr.f32.gmra.mrb[0].mxu0 %v747
    %v820 = vpop.f32.mrb[0].mxu0
    %v821 = vadd.f32 %v742, %v820
    %v822 = vpop.f32.mrb[0].mxu0
    %823 = vdwg.mxu0
    %v824 = vadd.f32 %v650, %v816
    %v825 = vadd.f32 %v651, %v821
    %v826 = vsel %vm66, %v824, 0.0
    %827 = vadd.xlane.f32.xlu0 %v826
    %v828 = vpop.xlane.xlu0 %827
    %v829 = vsel %vm66, %v825, 0.0
    %830 = vadd.xlane.f32.xlu0 %v829
    %v831 = vpop.xlane.xlu0 %830
    %v832 = vmul.f32 %v828, %v619
    %v833 = vmul.f32 %v831, %v619
    %v834 = vsub.f32 %v824, %v832
    %v835 = vsub.f32 %v825, %v833
    %v836 = vmul.f32 %v834, %v834
    %v837 = vmul.f32 %v835, %v835
    %v838 = vsel %vm66, %v836, 0.0
    %839 = vadd.xlane.f32.xlu0 %v838
    %v840 = vpop.xlane.xlu0 %839
    %v841 = vsel %vm66, %v837, 0.0
    %842 = vadd.xlane.f32.xlu0 %v841
    %v843 = vpop.xlane.xlu0 %842
    %v844 = vmul.f32 %v840, %v619
    %v845 = vmul.f32 %v843, %v619
    %v846 = vadd.f32 %v844, 1e-05
    %v847 = vadd.f32 %v845, 1e-05
    %v848 = vrsqrt.pop %v846
    %v849 = vrsqrt.pop %v847
    %v850 = vmul.f32 %v834, %v848
    %v851 = vmul.f32 %v835, %v849
    %v852 = vlaneseq
    %v853 = vshrl.u32 %v852, 7
    %v854 = vsub.s32 0, %v853
    %v855 = vrot.slane %v60, %v854
    %v856 = vmul.f32 %v850, %v855
    %v857 = vmul.f32 %v851, %v855
    %v858 = vlaneseq
    %v859 = vshrl.u32 %v858, 7
    %v860 = vsub.s32 0, %v859
    %v861 = vrot.slane %v61, %v860
    %v862 = vadd.f32 %v856, %v861
    %v863 = vadd.f32 %v857, %v861
    %v864 = vld [vmem:[%s1 + $0xc0] sm:$0xff]
    %v865 = vld [vmem:[%s1 + $0xc8] sm:$0xff]
    %v866 = vld [vmem:[%s1 + $0xd0] sm:$0xff]
    %v867 = vld [vmem:[%s1 + $0xd8] sm:$0xff]
    %v868 = vld [vmem:[%s1 + $0xe0] sm:$0xff]
    %v869 = vld [vmem:[%s1 + $0xe8] sm:$0xff]
    %v870 = vld [vmem:[%s1 + $0xf0] sm:$0xff]
    %v871 = vld [vmem:[%s1 + $0xf8] sm:$0xff]
    %v872 = vld [vmem:[%s1 + $0x100] sm:$0xff]
    %v873 = vld [vmem:[%s1 + $0x108] sm:$0xff]
    %v874 = vld [vmem:[%s1 + $0x110] sm:$0xff]
    %v875 = vld [vmem:[%s1 + $0x118] sm:$0xff]
    %v876 = vld [vmem:[%s1 + $0x120] sm:$0xff]
    %v877 = vld [vmem:[%s1 + $0x128] sm:$0xff]
    %v878 = vld [vmem:[%s1 + $0x130] sm:$0xff]
    %v879 = vld [vmem:[%s1 + $0x138] sm:$0xff]
    %v880 = vld [vmem:[%s1 + $0x140] sm:$0xff]
    %v881 = vld [vmem:[%s1 + $0x148] sm:$0xff]
    %v882 = vld [vmem:[%s1 + $0x150] sm:$0xff]
    %v883 = vld [vmem:[%s1 + $0x158] sm:$0xff]
    %v884 = vld [vmem:[%s1 + $0x160] sm:$0xff]
    %v885 = vld [vmem:[%s1 + $0x168] sm:$0xff]
    %v886 = vld [vmem:[%s1 + $0x170] sm:$0xff]
    %v887 = vld [vmem:[%s1 + $0x178] sm:$0xff]
    %v888 = vld [vmem:[%s1 + $0x1ca] sm:$0x1]
    %v889 = vld [vmem:[%s1 + $0x1cb] sm:$0x1]
    %v890 = vld [vmem:[%s1 + $0x1cc] sm:$0x1]
    %v891 = vld [vmem:[%s1 + $0x1cd] sm:$0x1]
    %v892 = vld [vmem:[%s1 + $0x1ce] sm:$0x1]
    %v893 = vld [vmem:[%s1 + $0x1cf] sm:$0x1]
    %v894 = vld [vmem:[%s1 + $0x1d0] sm:$0x1]
    %v895 = vld [vmem:[%s1 + $0x1d1] sm:$0x1]
    %v896 = vld [vmem:[%s1 + $0x1d2] sm:$0x1]
    %v897 = vld [vmem:[%s1 + $0x1d3] sm:$0x1]
    %v898 = vlaneseq
    %v899 = vshrl.u32 %v898, 7
    %v900 = vsub.s32 0, %v899
    %v901 = vrot.slane %v888, %v900
    %v903 = vsel %vm66, %v862, 0
    %v906 = vsel %vm66, %v863, 0
    %908 = vmatprep.subr.mxu0 0.0
    %909 = vmatpush1.msra.mxu0 %v864
    %910 = vmatprep.subr.mxu0 0.0
    %911 = vmatpush1.msra.mxu0 %v865
    %912 = vmatprep.subr.mxu0 0.0
    %913 = vmatpush1.msra.mxu0 %v866
    %914 = vmatprep.subr.mxu0 0.0
    %915 = vmatpush1.msra.mxu0 %v867
    %916 = vmatprep.subr.mxu0 0.0
    %917 = vmatpush1.msra.mxu0 0.0
    %918 = vmatprep.subr.mxu0 0.0
    %919 = vmatpush1.msra.mxu0 0.0
    %920 = vmatprep.subr.mxu0 0.0
    %921 = vmatpush1.msra.mxu0 0.0
    %922 = vmatprep.subr.mxu0 0.0
    %923 = vmatpush1.msra.mxu0 0.0
    %924 = vmatprep.subr.mxu0 0.0
    %925 = vmatpush1.msra.mxu0 0.0
    %926 = vmatprep.subr.mxu0 0.0
    %927 = vmatpush1.msra.mxu0 0.0
    %928 = vmatprep.subr.mxu0 0.0
    %929 = vmatpush1.msra.mxu0 0.0
    %930 = vmatprep.subr.mxu0 0.0
    %931 = vmatpush1.msra.mxu0 0.0
    %932 = vmatprep.subr.mxu0 0.0
    %933 = vmatpush1.msra.mxu0 0.0
    %934 = vmatprep.subr.mxu0 0.0
    %935 = vmatpush1.msra.mxu0 0.0
    %936 = vmatprep.subr.mxu0 0.0
    %937 = vmatpush1.msra.mxu0 0.0
    %938 = vmatprep.subr.mxu0 0.0
    %939 = vmatpush1.msra.mxu0 0.0
    %940 = vmatprep.subr.mxu0 0.0
    %941 = vmatpush1.msra.mxu0 0.0
    %942 = vmatprep.subr.mxu0 0.0
    %943 = vmatpush1.msra.mxu0 0.0
    %944 = vmatprep.subr.mxu0 0.0
    %945 = vmatpush1.msra.mxu0 0.0
    %946 = vmatprep.subr.mxu0 0.0
    %947 = vmatpush1.msra.mxu0 0.0
    %948 = vmatprep.subr.mxu0 0.0
    %949 = vmatpush1.msra.mxu0 0.0
    %950 = vmatprep.subr.mxu0 0.0
    %951 = vmatpush1.msra.mxu0 0.0
    %952 = vmatprep.subr.mxu0 0.0
    %953 = vmatpush1.msra.mxu0 0.0
    %954 = vmatprep.subr.mxu0 0.0
    %955 = vmatpush1.msra.mxu0 0.0
    %956 = vmatprep.subr.mxu0 0.0
    %957 = vmatpush1.msra.mxu0 0.0
    %958 = vmatprep.subr.mxu0 0.0
    %959 = vmatpush1.msra.mxu0 0.0
    %960 = vmatprep.subr.mxu0 0.0
    %961 = vmatpush1.msra.mxu0 0.0
    %962 = vmatprep.subr.mxu0 0.0
    %963 = vmatpush1.msra.mxu0 0.0
    %964 = vmatprep.subr.mxu0 0.0
    %965 = vmatpush1.msra.mxu0 0.0
    %966 = vmatprep.subr.mxu0 0.0
    %967 = vmatpush1.msra.mxu0 0.0
    %968 = vmatprep.subr.mxu0 0.0
    %969 = vmatpush1.msra.mxu0 0.0
    %970 = vmatprep.subr.mxu0 0.0
    %971 = vmatpush1.msra.mxu0 0.0
    %972 = vmatprep.mubr.f32.mxu0 0.0
    %973 = vmatmul.mubr.f32.gmra.mrb[0].mxu0 %v903
    %v974 = vpop.f32.mrb[0].mxu0
    %v975 = vadd.f32 %v901, %v974
    %v976 = vpop.f32.mrb[0].mxu0
    %977 = vmatprep.mubr.f32.mxu0 0.0
    %978 = vmatmul.mubr.f32.gmra.mrb[0].mxu0 %v906
    %v979 = vpop.f32.mrb[0].mxu0
    %v980 = vadd.f32 %v901, %v979
    %v981 = vpop.f32.mrb[0].mxu0
    %982 = vdwg.mxu0
    %v983 = vlaneseq
    %v984 = vshrl.u32 %v983, 7
    %v985 = vsub.s32 0, %v984
    %v986 = vrot.slane %v889, %v985
    %987 = vmatprep.subr.mxu0 0.0
    %988 = vmatpush1.msra.mxu0 %v868
    %989 = vmatprep.subr.mxu0 0.0
    %990 = vmatpush1.msra.mxu0 %v869
    %991 = vmatprep.subr.mxu0 0.0
    %992 = vmatpush1.msra.mxu0 %v870
    %993 = vmatprep.subr.mxu0 0.0
    %994 = vmatpush1.msra.mxu0 %v871
    %995 = vmatprep.subr.mxu0 0.0
    %996 = vmatpush1.msra.mxu0 0.0
    %997 = vmatprep.subr.mxu0 0.0
    %998 = vmatpush1.msra.mxu0 0.0
    %999 = vmatprep.subr.mxu0 0.0
    %1000 = vmatpush1.msra.mxu0 0.0
    %1001 = vmatprep.subr.mxu0 0.0
    %1002 = vmatpush1.msra.mxu0 0.0
    %1003 = vmatprep.subr.mxu0 0.0
    %1004 = vmatpush1.msra.mxu0 0.0
    %1005 = vmatprep.subr.mxu0 0.0
    %1006 = vmatpush1.msra.mxu0 0.0
    %1007 = vmatprep.subr.mxu0 0.0
    %1008 = vmatpush1.msra.mxu0 0.0
    %1009 = vmatprep.subr.mxu0 0.0
    %1010 = vmatpush1.msra.mxu0 0.0
    %1011 = vmatprep.subr.mxu0 0.0
    %1012 = vmatpush1.msra.mxu0 0.0
    %1013 = vmatprep.subr.mxu0 0.0
    %1014 = vmatpush1.msra.mxu0 0.0
    %1015 = vmatprep.subr.mxu0 0.0
    %1016 = vmatpush1.msra.mxu0 0.0
    %1017 = vmatprep.subr.mxu0 0.0
    %1018 = vmatpush1.msra.mxu0 0.0
    %1019 = vmatprep.subr.mxu0 0.0
    %1020 = vmatpush1.msra.mxu0 0.0
    %1021 = vmatprep.subr.mxu0 0.0
    %1022 = vmatpush1.msra.mxu0 0.0
    %1023 = vmatprep.subr.mxu0 0.0
    %1024 = vmatpush1.msra.mxu0 0.0
    %1025 = vmatprep.subr.mxu0 0.0
    %1026 = vmatpush1.msra.mxu0 0.0
    %1027 = vmatprep.subr.mxu0 0.0
    %1028 = vmatpush1.msra.mxu0 0.0
    %1029 = vmatprep.subr.mxu0 0.0
    %1030 = vmatpush1.msra.mxu0 0.0
    %1031 = vmatprep.subr.mxu0 0.0
    %1032 = vmatpush1.msra.mxu0 0.0
    %1033 = vmatprep.subr.mxu0 0.0
    %1034 = vmatpush1.msra.mxu0 0.0
    %1035 = vmatprep.subr.mxu0 0.0
    %1036 = vmatpush1.msra.mxu0 0.0
    %1037 = vmatprep.subr.mxu0 0.0
    %1038 = vmatpush1.msra.mxu0 0.0
    %1039 = vmatprep.subr.mxu0 0.0
    %1040 = vmatpush1.msra.mxu0 0.0
    %1041 = vmatprep.subr.mxu0 0.0
    %1042 = vmatpush1.msra.mxu0 0.0
    %1043 = vmatprep.subr.mxu0 0.0
    %1044 = vmatpush1.msra.mxu0 0.0
    %1045 = vmatprep.subr.mxu0 0.0
    %1046 = vmatpush1.msra.mxu0 0.0
    %1047 = vmatprep.subr.mxu0 0.0
    %1048 = vmatpush1.msra.mxu0 0.0
    %1049 = vmatprep.subr.mxu0 0.0
    %1050 = vmatpush1.msra.mxu0 0.0
    %1051 = vmatprep.mubr.f32.mxu0 0.0
    %1052 = vmatmul.mubr.f32.gmra.mrb[0].mxu0 %v903
    %v1053 = vpop.f32.mrb[0].mxu0
    %v1054 = vadd.f32 %v986, %v1053
    %v1055 = vpop.f32.mrb[0].mxu0
    %1056 = vmatprep.mubr.f32.mxu0 0.0
    %1057 = vmatmul.mubr.f32.gmra.mrb[0].mxu0 %v906
    %v1058 = vpop.f32.mrb[0].mxu0
    %v1059 = vadd.f32 %v986, %v1058
    %v1060 = vpop.f32.mrb[0].mxu0
    %1061 = vdwg.mxu0
    %v1062 = vlaneseq
    %v1063 = vshrl.u32 %v1062, 7
    %v1064 = vsub.s32 0, %v1063
    %v1065 = vrot.slane %v890, %v1064
    %1066 = vmatprep.subr.mxu0 0.0
    %1067 = vmatpush1.msra.mxu0 %v872
    %1068 = vmatprep.subr.mxu0 0.0
    %1069 = vmatpush1.msra.mxu0 %v873
    %1070 = vmatprep.subr.mxu0 0.0
    %1071 = vmatpush1.msra.mxu0 %v874
    %1072 = vmatprep.subr.mxu0 0.0
    %1073 = vmatpush1.msra.mxu0 %v875
    %1074 = vmatprep.subr.mxu0 0.0
    %1075 = vmatpush1.msra.mxu0 0.0
    %1076 = vmatprep.subr.mxu0 0.0
    %1077 = vmatpush1.msra.mxu0 0.0
    %1078 = vmatprep.subr.mxu0 0.0
    %1079 = vmatpush1.msra.mxu0 0.0
    %1080 = vmatprep.subr.mxu0 0.0
    %1081 = vmatpush1.msra.mxu0 0.0
    %1082 = vmatprep.subr.mxu0 0.0
    %1083 = vmatpush1.msra.mxu0 0.0
    %1084 = vmatprep.subr.mxu0 0.0
    %1085 = vmatpush1.msra.mxu0 0.0
    %1086 = vmatprep.subr.mxu0 0.0
    %1087 = vmatpush1.msra.mxu0 0.0
    %1088 = vmatprep.subr.mxu0 0.0
    %1089 = vmatpush1.msra.mxu0 0.0
    %1090 = vmatprep.subr.mxu0 0.0
    %1091 = vmatpush1.msra.mxu0 0.0
    %1092 = vmatprep.subr.mxu0 0.0
    %1093 = vmatpush1.msra.mxu0 0.0
    %1094 = vmatprep.subr.mxu0 0.0
    %1095 = vmatpush1.msra.mxu0 0.0
    %1096 = vmatprep.subr.mxu0 0.0
    %1097 = vmatpush1.msra.mxu0 0.0
    %1098 = vmatprep.subr.mxu0 0.0
    %1099 = vmatpush1.msra.mxu0 0.0
    %1100 = vmatprep.subr.mxu0 0.0
    %1101 = vmatpush1.msra.mxu0 0.0
    %1102 = vmatprep.subr.mxu0 0.0
    %1103 = vmatpush1.msra.mxu0 0.0
    %1104 = vmatprep.subr.mxu0 0.0
    %1105 = vmatpush1.msra.mxu0 0.0
    %1106 = vmatprep.subr.mxu0 0.0
    %1107 = vmatpush1.msra.mxu0 0.0
    %1108 = vmatprep.subr.mxu0 0.0
    %1109 = vmatpush1.msra.mxu0 0.0
    %1110 = vmatprep.subr.mxu0 0.0
    %1111 = vmatpush1.msra.mxu0 0.0
    %1112 = vmatprep.subr.mxu0 0.0
    %1113 = vmatpush1.msra.mxu0 0.0
    %1114 = vmatprep.subr.mxu0 0.0
    %1115 = vmatpush1.msra.mxu0 0.0
    %1116 = vmatprep.subr.mxu0 0.0
    %1117 = vmatpush1.msra.mxu0 0.0
    %1118 = vmatprep.subr.mxu0 0.0
    %1119 = vmatpush1.msra.mxu0 0.0
    %1120 = vmatprep.subr.mxu0 0.0
    %1121 = vmatpush1.msra.mxu0 0.0
    %1122 = vmatprep.subr.mxu0 0.0
    %1123 = vmatpush1.msra.mxu0 0.0
    %1124 = vmatprep.subr.mxu0 0.0
    %1125 = vmatpush1.msra.mxu0 0.0
    %1126 = vmatprep.subr.mxu0 0.0
    %1127 = vmatpush1.msra.mxu0 0.0
    %1128 = vmatprep.subr.mxu0 0.0
    %1129 = vmatpush1.msra.mxu0 0.0
    %1130 = vmatprep.mubr.f32.mxu0 0.0
    %1131 = vmatmul.mubr.f32.gmra.mrb[0].mxu0 %v903
    %v1132 = vpop.f32.mrb[0].mxu0
    %v1133 = vadd.f32 %v1065, %v1132
    %v1134 = vpop.f32.mrb[0].mxu0
    %1135 = vmatprep.mubr.f32.mxu0 0.0
    %1136 = vmatmul.mubr.f32.gmra.mrb[0].mxu0 %v906
    %v1137 = vpop.f32.mrb[0].mxu0
    %v1138 = vadd.f32 %v1065, %v1137
    %v1139 = vpop.f32.mrb[0].mxu0
    %1140 = vdwg.mxu0
    %v1141 = vmul.f32 %v975, %v1054
    %v1142 = vmul.f32 %v975, %v1059
    %v1143 = vmul.f32 %v980, %v1054
    %v1144 = vmul.f32 %v980, %v1059
    %v1146 = vsel %vm66, %v1141, 0
    %v1149 = vsel %vm66, %v1142, 0
    %v1152 = vsel %vm66, %v1143, 0
    %v1155 = vsel %vm66, %v1144, 0
    %1157 = vmatprep.subr.mxu0 0.0
    %1158 = vmatpush1.msra.mxu0 %v18
    %1159 = vmatprep.subr.mxu0 0.0
    %1160 = vmatpush1.msra.mxu0 %v19
    %1161 = vmatprep.subr.mxu0 0.0
    %1162 = vmatpush1.msra.mxu0 %v20
    %1163 = vmatprep.subr.mxu0 0.0
    %1164 = vmatpush1.msra.mxu0 %v21
    %1165 = vmatprep.subr.mxu0 0.0
    %1166 = vmatpush1.msra.mxu0 0.0
    %1167 = vmatprep.subr.mxu0 0.0
    %1168 = vmatpush1.msra.mxu0 0.0
    %1169 = vmatprep.subr.mxu0 0.0
    %1170 = vmatpush1.msra.mxu0 0.0
    %1171 = vmatprep.subr.mxu0 0.0
    %1172 = vmatpush1.msra.mxu0 0.0
    %1173 = vmatprep.subr.mxu0 0.0
    %1174 = vmatpush1.msra.mxu0 0.0
    %1175 = vmatprep.subr.mxu0 0.0
    %1176 = vmatpush1.msra.mxu0 0.0
    %1177 = vmatprep.subr.mxu0 0.0
    %1178 = vmatpush1.msra.mxu0 0.0
    %1179 = vmatprep.subr.mxu0 0.0
    %1180 = vmatpush1.msra.mxu0 0.0
    %1181 = vmatprep.subr.mxu0 0.0
    %1182 = vmatpush1.msra.mxu0 0.0
    %1183 = vmatprep.subr.mxu0 0.0
    %1184 = vmatpush1.msra.mxu0 0.0
    %1185 = vmatprep.subr.mxu0 0.0
    %1186 = vmatpush1.msra.mxu0 0.0
    %1187 = vmatprep.subr.mxu0 0.0
    %1188 = vmatpush1.msra.mxu0 0.0
    %1189 = vmatprep.subr.mxu0 0.0
    %1190 = vmatpush1.msra.mxu0 0.0
    %1191 = vmatprep.subr.mxu0 0.0
    %1192 = vmatpush1.msra.mxu0 0.0
    %1193 = vmatprep.subr.mxu0 0.0
    %1194 = vmatpush1.msra.mxu0 0.0
    %1195 = vmatprep.subr.mxu0 0.0
    %1196 = vmatpush1.msra.mxu0 0.0
    %1197 = vmatprep.subr.mxu0 0.0
    %1198 = vmatpush1.msra.mxu0 0.0
    %1199 = vmatprep.subr.mxu0 0.0
    %1200 = vmatpush1.msra.mxu0 0.0
    %1201 = vmatprep.subr.mxu0 0.0
    %1202 = vmatpush1.msra.mxu0 0.0
    %1203 = vmatprep.subr.mxu0 0.0
    %1204 = vmatpush1.msra.mxu0 0.0
    %1205 = vmatprep.subr.mxu0 0.0
    %1206 = vmatpush1.msra.mxu0 0.0
    %1207 = vmatprep.subr.mxu0 0.0
    %1208 = vmatpush1.msra.mxu0 0.0
    %1209 = vmatprep.subr.mxu0 0.0
    %1210 = vmatpush1.msra.mxu0 0.0
    %1211 = vmatprep.subr.mxu0 0.0
    %1212 = vmatpush1.msra.mxu0 0.0
    %1213 = vmatprep.subr.mxu0 0.0
    %1214 = vmatpush1.msra.mxu0 0.0
    %1215 = vmatprep.subr.mxu0 0.0
    %1216 = vmatpush1.msra.mxu0 0.0
    %1217 = vmatprep.subr.mxu0 0.0
    %1218 = vmatpush1.msra.mxu0 0.0
    %1219 = vmatprep.subr.mxu0 0.0
    %1220 = vmatpush1.msra.mxu0 0.0
    %1221 = vmatprep.mubr.f32.mxu0 0.0
    %1222 = vmatmul.mubr.f32.gmra.mrb[0].mxu0 %v1146
    %v1223 = vpop.f32.mrb[0].mxu0
    %v1224 = vadd.f32 0.0, %v1223
    %v1225 = vpop.f32.mrb[0].mxu0
    %1226 = vmatprep.mubr.f32.mxu0 0.0
    %1227 = vmatmul.mubr.f32.gmra.mrb[0].mxu0 %v1149
    %v1228 = vpop.f32.mrb[0].mxu0
    %v1229 = vadd.f32 0.0, %v1228
    %v1230 = vpop.f32.mrb[0].mxu0
    %1231 = vmatprep.mubr.f32.mxu0 0.0
    %1232 = vmatmul.mubr.f32.gmra.mrb[0].mxu0 %v1152
    %v1233 = vpop.f32.mrb[0].mxu0
    %v1234 = vadd.f32 0.0, %v1233
    %v1235 = vpop.f32.mrb[0].mxu0
    %1236 = vmatprep.mubr.f32.mxu0 0.0
    %1237 = vmatmul.mubr.f32.gmra.mrb[0].mxu0 %v1155
    %v1238 = vpop.f32.mrb[0].mxu0
    %v1239 = vadd.f32 0.0, %v1238
    %v1240 = vpop.f32.mrb[0].mxu0
    %1241 = vdwg.mxu0
    %v1242 = vsub.f32 %v1224, %v1229
    %v1243 = vxor.u32 %v1242, 2147483648
    %v1244 = vmul.f32 %v1243, 1.442695
    %v1245 = vpow.pop %v1244
    %v1246 = vadd.f32 %v1245, 1.0
    %v1247 = vrcp.pop %v1246
    %v1248 = vmul.f32 1.0, %v1247
    %v1249 = vsub.f32 %v1234, %v1239
    %v1250 = vxor.u32 %v1249, 2147483648
    %v1251 = vmul.f32 %v1250, 1.442695
    %v1252 = vpow.pop %v1251
    %v1253 = vadd.f32 %v1252, 1.0
    %v1254 = vrcp.pop %v1253
    %v1255 = vmul.f32 1.0, %v1254
    %v1256 = vsub.f32 1.0, %v1248
    %v1257 = vsub.f32 1.0, %v1255
    %v1259 = vsel %vm66, %v1248, 0
    %v1262 = vsel %vm66, %v1256, 0
    %v1265 = vsel %vm66, %v1255, 0
    %v1268 = vsel %vm66, %v1257, 0
    %1270 = vmatprep.subr.mxu0 0.0
    %1271 = vmatpush1.msra.mxu0 %v22
    %1272 = vmatprep.subr.mxu0 0.0
    %1273 = vmatpush1.msra.mxu0 %v23
    %1274 = vmatprep.subr.mxu0 0.0
    %1275 = vmatpush1.msra.mxu0 %v24
    %1276 = vmatprep.subr.mxu0 0.0
    %1277 = vmatpush1.msra.mxu0 %v25
    %1278 = vmatprep.subr.mxu0 0.0
    %1279 = vmatpush1.msra.mxu0 0.0
    %1280 = vmatprep.subr.mxu0 0.0
    %1281 = vmatpush1.msra.mxu0 0.0
    %1282 = vmatprep.subr.mxu0 0.0
    %1283 = vmatpush1.msra.mxu0 0.0
    %1284 = vmatprep.subr.mxu0 0.0
    %1285 = vmatpush1.msra.mxu0 0.0
    %1286 = vmatprep.subr.mxu0 0.0
    %1287 = vmatpush1.msra.mxu0 0.0
    %1288 = vmatprep.subr.mxu0 0.0
    %1289 = vmatpush1.msra.mxu0 0.0
    %1290 = vmatprep.subr.mxu0 0.0
    %1291 = vmatpush1.msra.mxu0 0.0
    %1292 = vmatprep.subr.mxu0 0.0
    %1293 = vmatpush1.msra.mxu0 0.0
    %1294 = vmatprep.subr.mxu0 0.0
    %1295 = vmatpush1.msra.mxu0 0.0
    %1296 = vmatprep.subr.mxu0 0.0
    %1297 = vmatpush1.msra.mxu0 0.0
    %1298 = vmatprep.subr.mxu0 0.0
    %1299 = vmatpush1.msra.mxu0 0.0
    %1300 = vmatprep.subr.mxu0 0.0
    %1301 = vmatpush1.msra.mxu0 0.0
    %1302 = vmatprep.subr.mxu0 0.0
    %1303 = vmatpush1.msra.mxu0 0.0
    %1304 = vmatprep.subr.mxu0 0.0
    %1305 = vmatpush1.msra.mxu0 0.0
    %1306 = vmatprep.subr.mxu0 0.0
    %1307 = vmatpush1.msra.mxu0 0.0
    %1308 = vmatprep.subr.mxu0 0.0
    %1309 = vmatpush1.msra.mxu0 0.0
    %1310 = vmatprep.subr.mxu0 0.0
    %1311 = vmatpush1.msra.mxu0 0.0
    %1312 = vmatprep.subr.mxu0 0.0
    %1313 = vmatpush1.msra.mxu0 0.0
    %1314 = vmatprep.subr.mxu0 0.0
    %1315 = vmatpush1.msra.mxu0 0.0
    %1316 = vmatprep.subr.mxu0 0.0
    %1317 = vmatpush1.msra.mxu0 0.0
    %1318 = vmatprep.subr.mxu0 0.0
    %1319 = vmatpush1.msra.mxu0 0.0
    %1320 = vmatprep.subr.mxu0 0.0
    %1321 = vmatpush1.msra.mxu0 0.0
    %1322 = vmatprep.subr.mxu0 0.0
    %1323 = vmatpush1.msra.mxu0 0.0
    %1324 = vmatprep.subr.mxu0 0.0
    %1325 = vmatpush1.msra.mxu0 0.0
    %1326 = vmatprep.subr.mxu0 0.0
    %1327 = vmatpush1.msra.mxu0 0.0
    %1328 = vmatprep.subr.mxu0 0.0
    %1329 = vmatpush1.msra.mxu0 0.0
    %1330 = vmatprep.subr.mxu0 0.0
    %1331 = vmatpush1.msra.mxu0 0.0
    %1332 = vmatprep.subr.mxu0 0.0
    %1333 = vmatpush1.msra.mxu0 0.0
    %1334 = vmatprep.mubr.f32.mxu0 0.0
    %1335 = vmatmul.mubr.f32.gmra.mrb[0].mxu0 %v1259
    %v1336 = vpop.f32.mrb[0].mxu0
    %v1337 = vadd.f32 0.0, %v1336
    %v1338 = vpop.f32.mrb[0].mxu0
    %1339 = vmatprep.mubr.f32.mxu0 0.0
    %1340 = vmatmul.mubr.f32.gmra.mrb[0].mxu0 %v1262
    %v1341 = vpop.f32.mrb[0].mxu0
    %v1342 = vadd.f32 0.0, %v1341
    %v1343 = vpop.f32.mrb[0].mxu0
    %1344 = vmatprep.mubr.f32.mxu0 0.0
    %1345 = vmatmul.mubr.f32.gmra.mrb[0].mxu0 %v1265
    %v1346 = vpop.f32.mrb[0].mxu0
    %v1347 = vadd.f32 0.0, %v1346
    %v1348 = vpop.f32.mrb[0].mxu0
    %1349 = vmatprep.mubr.f32.mxu0 0.0
    %1350 = vmatmul.mubr.f32.gmra.mrb[0].mxu0 %v1268
    %v1351 = vpop.f32.mrb[0].mxu0
    %v1352 = vadd.f32 0.0, %v1351
    %v1353 = vpop.f32.mrb[0].mxu0
    %1354 = vdwg.mxu0
    %v1355 = vmul.f32 %v1337, %v1133
    %v1356 = vmul.f32 %v1342, %v1138
    %v1357 = vadd.f32 %v1355, %v1356
    %v1358 = vmul.f32 %v1347, %v1133
    %v1359 = vmul.f32 %v1352, %v1138
    %v1360 = vadd.f32 %v1358, %v1359
    %v1361 = vlaneseq
    %v1362 = vshrl.u32 %v1361, 7
    %v1363 = vsub.s32 0, %v1362
    %v1364 = vrot.slane %v891, %v1363
    %v1366 = vsel %vm66, %v1357, 0
    %v1369 = vsel %vm66, %v1360, 0
    %1371 = vmatprep.subr.mxu0 0.0
    %1372 = vmatpush1.msra.mxu0 %v876
    %1373 = vmatprep.subr.mxu0 0.0
    %1374 = vmatpush1.msra.mxu0 %v877
    %1375 = vmatprep.subr.mxu0 0.0
    %1376 = vmatpush1.msra.mxu0 %v878
    %1377 = vmatprep.subr.mxu0 0.0
    %1378 = vmatpush1.msra.mxu0 %v879
    %1379 = vmatprep.subr.mxu0 0.0
    %1380 = vmatpush1.msra.mxu0 0.0
    %1381 = vmatprep.subr.mxu0 0.0
    %1382 = vmatpush1.msra.mxu0 0.0
    %1383 = vmatprep.subr.mxu0 0.0
    %1384 = vmatpush1.msra.mxu0 0.0
    %1385 = vmatprep.subr.mxu0 0.0
    %1386 = vmatpush1.msra.mxu0 0.0
    %1387 = vmatprep.subr.mxu0 0.0
    %1388 = vmatpush1.msra.mxu0 0.0
    %1389 = vmatprep.subr.mxu0 0.0
    %1390 = vmatpush1.msra.mxu0 0.0
    %1391 = vmatprep.subr.mxu0 0.0
    %1392 = vmatpush1.msra.mxu0 0.0
    %1393 = vmatprep.subr.mxu0 0.0
    %1394 = vmatpush1.msra.mxu0 0.0
    %1395 = vmatprep.subr.mxu0 0.0
    %1396 = vmatpush1.msra.mxu0 0.0
    %1397 = vmatprep.subr.mxu0 0.0
    %1398 = vmatpush1.msra.mxu0 0.0
    %1399 = vmatprep.subr.mxu0 0.0
    %1400 = vmatpush1.msra.mxu0 0.0
    %1401 = vmatprep.subr.mxu0 0.0
    %1402 = vmatpush1.msra.mxu0 0.0
    %1403 = vmatprep.subr.mxu0 0.0
    %1404 = vmatpush1.msra.mxu0 0.0
    %1405 = vmatprep.subr.mxu0 0.0
    %1406 = vmatpush1.msra.mxu0 0.0
    %1407 = vmatprep.subr.mxu0 0.0
    %1408 = vmatpush1.msra.mxu0 0.0
    %1409 = vmatprep.subr.mxu0 0.0
    %1410 = vmatpush1.msra.mxu0 0.0
    %1411 = vmatprep.subr.mxu0 0.0
    %1412 = vmatpush1.msra.mxu0 0.0
    %1413 = vmatprep.subr.mxu0 0.0
    %1414 = vmatpush1.msra.mxu0 0.0
    %1415 = vmatprep.subr.mxu0 0.0
    %1416 = vmatpush1.msra.mxu0 0.0
    %1417 = vmatprep.subr.mxu0 0.0
    %1418 = vmatpush1.msra.mxu0 0.0
    %1419 = vmatprep.subr.mxu0 0.0
    %1420 = vmatpush1.msra.mxu0 0.0
    %1421 = vmatprep.subr.mxu0 0.0
    %1422 = vmatpush1.msra.mxu0 0.0
    %1423 = vmatprep.subr.mxu0 0.0
    %1424 = vmatpush1.msra.mxu0 0.0
    %1425 = vmatprep.subr.mxu0 0.0
    %1426 = vmatpush1.msra.mxu0 0.0
    %1427 = vmatprep.subr.mxu0 0.0
    %1428 = vmatpush1.msra.mxu0 0.0
    %1429 = vmatprep.subr.mxu0 0.0
    %1430 = vmatpush1.msra.mxu0 0.0
    %1431 = vmatprep.subr.mxu0 0.0
    %1432 = vmatpush1.msra.mxu0 0.0
    %1433 = vmatprep.subr.mxu0 0.0
    %1434 = vmatpush1.msra.mxu0 0.0
    %1435 = vmatprep.mubr.f32.mxu0 0.0
    %1436 = vmatmul.mubr.f32.gmra.mrb[0].mxu0 %v1366
    %v1437 = vpop.f32.mrb[0].mxu0
    %v1438 = vadd.f32 %v1364, %v1437
    %v1439 = vpop.f32.mrb[0].mxu0
    %1440 = vmatprep.mubr.f32.mxu0 0.0
    %1441 = vmatmul.mubr.f32.gmra.mrb[0].mxu0 %v1369
    %v1442 = vpop.f32.mrb[0].mxu0
    %v1443 = vadd.f32 %v1364, %v1442
    %v1444 = vpop.f32.mrb[0].mxu0
    %1445 = vdwg.mxu0
    %v1446 = vadd.f32 %v862, %v1438
    %v1447 = vadd.f32 %v863, %v1443
    %v1448 = vsel %vm66, %v1446, 0.0
    %1449 = vadd.xlane.f32.xlu0 %v1448
    %v1450 = vpop.xlane.xlu0 %1449
    %v1451 = vsel %vm66, %v1447, 0.0
    %1452 = vadd.xlane.f32.xlu0 %v1451
    %v1453 = vpop.xlane.xlu0 %1452
    %v1454 = vmul.f32 %v1450, %v619
    %v1455 = vmul.f32 %v1453, %v619
    %v1456 = vsub.f32 %v1446, %v1454
    %v1457 = vsub.f32 %v1447, %v1455
    %v1458 = vmul.f32 %v1456, %v1456
    %v1459 = vmul.f32 %v1457, %v1457
    %v1460 = vsel %vm66, %v1458, 0.0
    %1461 = vadd.xlane.f32.xlu0 %v1460
    %v1462 = vpop.xlane.xlu0 %1461
    %v1463 = vsel %vm66, %v1459, 0.0
    %1464 = vadd.xlane.f32.xlu0 %v1463
    %v1465 = vpop.xlane.xlu0 %1464
    %v1466 = vmul.f32 %v1462, %v619
    %v1467 = vmul.f32 %v1465, %v619
    %v1468 = vadd.f32 %v1466, 1e-05
    %v1469 = vadd.f32 %v1467, 1e-05
    %v1470 = vrsqrt.pop %v1468
    %v1471 = vrsqrt.pop %v1469
    %v1472 = vmul.f32 %v1456, %v1470
    %v1473 = vmul.f32 %v1457, %v1471
    %v1474 = vlaneseq
    %v1475 = vshrl.u32 %v1474, 7
    %v1476 = vsub.s32 0, %v1475
    %v1477 = vrot.slane %v892, %v1476
    %v1478 = vmul.f32 %v1472, %v1477
    %v1479 = vmul.f32 %v1473, %v1477
    %v1480 = vlaneseq
    %v1481 = vshrl.u32 %v1480, 7
    %v1482 = vsub.s32 0, %v1481
    %v1483 = vrot.slane %v893, %v1482
    %v1484 = vadd.f32 %v1478, %v1483
    %v1485 = vadd.f32 %v1479, %v1483
    %v1486 = vlaneseq
    %v1487 = vshrl.u32 %v1486, 7
    %v1488 = vsub.s32 0, %v1487
    %v1489 = vrot.slane %v894, %v1488
    %v1491 = vsel %vm66, %v1484, 0
    %v1494 = vsel %vm66, %v1485, 0
    %1496 = vmatprep.subr.mxu0 0.0
    %1497 = vmatpush1.msra.mxu0 %v880
    %1498 = vmatprep.subr.mxu0 0.0
    %1499 = vmatpush1.msra.mxu0 %v881
    %1500 = vmatprep.subr.mxu0 0.0
    %1501 = vmatpush1.msra.mxu0 %v882
    %1502 = vmatprep.subr.mxu0 0.0
    %1503 = vmatpush1.msra.mxu0 %v883
    %1504 = vmatprep.subr.mxu0 0.0
    %1505 = vmatpush1.msra.mxu0 0.0
    %1506 = vmatprep.subr.mxu0 0.0
    %1507 = vmatpush1.msra.mxu0 0.0
    %1508 = vmatprep.subr.mxu0 0.0
    %1509 = vmatpush1.msra.mxu0 0.0
    %1510 = vmatprep.subr.mxu0 0.0
    %1511 = vmatpush1.msra.mxu0 0.0
    %1512 = vmatprep.subr.mxu0 0.0
    %1513 = vmatpush1.msra.mxu0 0.0
    %1514 = vmatprep.subr.mxu0 0.0
    %1515 = vmatpush1.msra.mxu0 0.0
    %1516 = vmatprep.subr.mxu0 0.0
    %1517 = vmatpush1.msra.mxu0 0.0
    %1518 = vmatprep.subr.mxu0 0.0
    %1519 = vmatpush1.msra.mxu0 0.0
    %1520 = vmatprep.subr.mxu0 0.0
    %1521 = vmatpush1.msra.mxu0 0.0
    %1522 = vmatprep.subr.mxu0 0.0
    %1523 = vmatpush1.msra.mxu0 0.0
    %1524 = vmatprep.subr.mxu0 0.0
    %1525 = vmatpush1.msra.mxu0 0.0
    %1526 = vmatprep.subr.mxu0 0.0
    %1527 = vmatpush1.msra.mxu0 0.0
    %1528 = vmatprep.subr.mxu0 0.0
    %1529 = vmatpush1.msra.mxu0 0.0
    %1530 = vmatprep.subr.mxu0 0.0
    %1531 = vmatpush1.msra.mxu0 0.0
    %1532 = vmatprep.subr.mxu0 0.0
    %1533 = vmatpush1.msra.mxu0 0.0
    %1534 = vmatprep.subr.mxu0 0.0
    %1535 = vmatpush1.msra.mxu0 0.0
    %1536 = vmatprep.subr.mxu0 0.0
    %1537 = vmatpush1.msra.mxu0 0.0
    %1538 = vmatprep.subr.mxu0 0.0
    %1539 = vmatpush1.msra.mxu0 0.0
    %1540 = vmatprep.subr.mxu0 0.0
    %1541 = vmatpush1.msra.mxu0 0.0
    %1542 = vmatprep.subr.mxu0 0.0
    %1543 = vmatpush1.msra.mxu0 0.0
    %1544 = vmatprep.subr.mxu0 0.0
    %1545 = vmatpush1.msra.mxu0 0.0
    %1546 = vmatprep.subr.mxu0 0.0
    %1547 = vmatpush1.msra.mxu0 0.0
    %1548 = vmatprep.subr.mxu0 0.0
    %1549 = vmatpush1.msra.mxu0 0.0
    %1550 = vmatprep.subr.mxu0 0.0
    %1551 = vmatpush1.msra.mxu0 0.0
    %1552 = vmatprep.subr.mxu0 0.0
    %1553 = vmatpush1.msra.mxu0 0.0
    %1554 = vmatprep.subr.mxu0 0.0
    %1555 = vmatpush1.msra.mxu0 0.0
    %1556 = vmatprep.subr.mxu0 0.0
    %1557 = vmatpush1.msra.mxu0 0.0
    %1558 = vmatprep.subr.mxu0 0.0
    %1559 = vmatpush1.msra.mxu0 0.0
    %1560 = vmatprep.mubr.f32.mxu0 0.0
    %1561 = vmatmul.mubr.f32.gmra.mrb[0].mxu0 %v1491
    %v1562 = vpop.f32.mrb[0].mxu0
    %v1563 = vadd.f32 %v1489, %v1562
    %v1564 = vpop.f32.mrb[0].mxu0
    %1565 = vmatprep.mubr.f32.mxu0 0.0
    %1566 = vmatmul.mubr.f32.gmra.mrb[0].mxu0 %v1494
    %v1567 = vpop.f32.mrb[0].mxu0
    %v1568 = vadd.f32 %v1489, %v1567
    %v1569 = vpop.f32.mrb[0].mxu0
    %1570 = vdwg.mxu0
    %v1571 = vmax.f32 %v1563, 0.0
    %v1572 = vmax.f32 %v1568, 0.0
    %v1573 = vlaneseq
    %v1574 = vshrl.u32 %v1573, 7
    %v1575 = vsub.s32 0, %v1574
    %v1576 = vrot.slane %v895, %v1575
    %v1578 = vsel %vm66, %v1571, 0
    %v1581 = vsel %vm66, %v1572, 0
    %1583 = vmatprep.subr.mxu0 0.0
    %1584 = vmatpush1.msra.mxu0 %v884
    %1585 = vmatprep.subr.mxu0 0.0
    %1586 = vmatpush1.msra.mxu0 %v885
    %1587 = vmatprep.subr.mxu0 0.0
    %1588 = vmatpush1.msra.mxu0 %v886
    %1589 = vmatprep.subr.mxu0 0.0
    %1590 = vmatpush1.msra.mxu0 %v887
    %1591 = vmatprep.subr.mxu0 0.0
    %1592 = vmatpush1.msra.mxu0 0.0
    %1593 = vmatprep.subr.mxu0 0.0
    %1594 = vmatpush1.msra.mxu0 0.0
    %1595 = vmatprep.subr.mxu0 0.0
    %1596 = vmatpush1.msra.mxu0 0.0
    %1597 = vmatprep.subr.mxu0 0.0
    %1598 = vmatpush1.msra.mxu0 0.0
    %1599 = vmatprep.subr.mxu0 0.0
    %1600 = vmatpush1.msra.mxu0 0.0
    %1601 = vmatprep.subr.mxu0 0.0
    %1602 = vmatpush1.msra.mxu0 0.0
    %1603 = vmatprep.subr.mxu0 0.0
    %1604 = vmatpush1.msra.mxu0 0.0
    %1605 = vmatprep.subr.mxu0 0.0
    %1606 = vmatpush1.msra.mxu0 0.0
    %1607 = vmatprep.subr.mxu0 0.0
    %1608 = vmatpush1.msra.mxu0 0.0
    %1609 = vmatprep.subr.mxu0 0.0
    %1610 = vmatpush1.msra.mxu0 0.0
    %1611 = vmatprep.subr.mxu0 0.0
    %1612 = vmatpush1.msra.mxu0 0.0
    %1613 = vmatprep.subr.mxu0 0.0
    %1614 = vmatpush1.msra.mxu0 0.0
    %1615 = vmatprep.subr.mxu0 0.0
    %1616 = vmatpush1.msra.mxu0 0.0
    %1617 = vmatprep.subr.mxu0 0.0
    %1618 = vmatpush1.msra.mxu0 0.0
    %1619 = vmatprep.subr.mxu0 0.0
    %1620 = vmatpush1.msra.mxu0 0.0
    %1621 = vmatprep.subr.mxu0 0.0
    %1622 = vmatpush1.msra.mxu0 0.0
    %1623 = vmatprep.subr.mxu0 0.0
    %1624 = vmatpush1.msra.mxu0 0.0
    %1625 = vmatprep.subr.mxu0 0.0
    %1626 = vmatpush1.msra.mxu0 0.0
    %1627 = vmatprep.subr.mxu0 0.0
    %1628 = vmatpush1.msra.mxu0 0.0
    %1629 = vmatprep.subr.mxu0 0.0
    %1630 = vmatpush1.msra.mxu0 0.0
    %1631 = vmatprep.subr.mxu0 0.0
    %1632 = vmatpush1.msra.mxu0 0.0
    %1633 = vmatprep.subr.mxu0 0.0
    %1634 = vmatpush1.msra.mxu0 0.0
    %1635 = vmatprep.subr.mxu0 0.0
    %1636 = vmatpush1.msra.mxu0 0.0
    %1637 = vmatprep.subr.mxu0 0.0
    %1638 = vmatpush1.msra.mxu0 0.0
    %1639 = vmatprep.subr.mxu0 0.0
    %1640 = vmatpush1.msra.mxu0 0.0
    %1641 = vmatprep.subr.mxu0 0.0
    %1642 = vmatpush1.msra.mxu0 0.0
    %1643 = vmatprep.subr.mxu0 0.0
    %1644 = vmatpush1.msra.mxu0 0.0
    %1645 = vmatprep.subr.mxu0 0.0
    %1646 = vmatpush1.msra.mxu0 0.0
    %1647 = vmatprep.mubr.f32.mxu0 0.0
    %1648 = vmatmul.mubr.f32.gmra.mrb[0].mxu0 %v1578
    %v1649 = vpop.f32.mrb[0].mxu0
    %v1650 = vadd.f32 %v1576, %v1649
    %v1651 = vpop.f32.mrb[0].mxu0
    %1652 = vmatprep.mubr.f32.mxu0 0.0
    %1653 = vmatmul.mubr.f32.gmra.mrb[0].mxu0 %v1581
    %v1654 = vpop.f32.mrb[0].mxu0
    %v1655 = vadd.f32 %v1576, %v1654
    %v1656 = vpop.f32.mrb[0].mxu0
    %1657 = vdwg.mxu0
    %v1658 = vadd.f32 %v1484, %v1650
    %v1659 = vadd.f32 %v1485, %v1655
    %v1660 = vsel %vm66, %v1658, 0.0
    %1661 = vadd.xlane.f32.xlu0 %v1660
    %v1662 = vpop.xlane.xlu0 %1661
    %v1663 = vsel %vm66, %v1659, 0.0
    %1664 = vadd.xlane.f32.xlu0 %v1663
    %v1665 = vpop.xlane.xlu0 %1664
    %v1666 = vmul.f32 %v1662, %v619
    %v1667 = vmul.f32 %v1665, %v619
    %v1668 = vsub.f32 %v1658, %v1666
    %v1669 = vsub.f32 %v1659, %v1667
    %v1670 = vmul.f32 %v1668, %v1668
    %v1671 = vmul.f32 %v1669, %v1669
    %v1672 = vsel %vm66, %v1670, 0.0
    %1673 = vadd.xlane.f32.xlu0 %v1672
    %v1674 = vpop.xlane.xlu0 %1673
    %v1675 = vsel %vm66, %v1671, 0.0
    %1676 = vadd.xlane.f32.xlu0 %v1675
    %v1677 = vpop.xlane.xlu0 %1676
    %v1678 = vmul.f32 %v1674, %v619
    %v1679 = vmul.f32 %v1677, %v619
    %v1680 = vadd.f32 %v1678, 1e-05
    %v1681 = vadd.f32 %v1679, 1e-05
    %v1682 = vrsqrt.pop %v1680
    %v1683 = vrsqrt.pop %v1681
    %v1684 = vmul.f32 %v1668, %v1682
    %v1685 = vmul.f32 %v1669, %v1683
    %v1686 = vlaneseq
    %v1687 = vshrl.u32 %v1686, 7
    %v1688 = vsub.s32 0, %v1687
    %v1689 = vrot.slane %v896, %v1688
    %v1690 = vmul.f32 %v1684, %v1689
    %v1691 = vmul.f32 %v1685, %v1689
    %v1692 = vlaneseq
    %v1693 = vshrl.u32 %v1692, 7
    %v1694 = vsub.s32 0, %v1693
    %v1695 = vrot.slane %v897, %v1694
    %v1696 = vadd.f32 %v1690, %v1695
    %v1697 = vadd.f32 %v1691, %v1695
    %1698 = vst.msk [vmem:[#allocation2] sm:$0xff] %vm66, %v1696
    %1699 = vst.msk [vmem:[#allocation2 + $0x8] sm:$0xff] %vm66, %v1697
    %v1700 = vld [vmem:[%s0 + $0x10] sm:$0xff]
    %v1701 = vld [vmem:[%s0 + $0x18] sm:$0xff]
    %v1702 = vld [vmem:[%s2] sm:$0xff]
    %v1703 = vld [vmem:[%s2 + $0x8] sm:$0xff]
    %v1704 = vld [vmem:[%s2 + $0x10] sm:$0xff]
    %v1705 = vld [vmem:[%s2 + $0x18] sm:$0xff]
    %v1706 = vld [vmem:[%s2 + $0x20] sm:$0xff]
    %v1707 = vld [vmem:[%s2 + $0x28] sm:$0xff]
    %v1708 = vld [vmem:[%s2 + $0x30] sm:$0xff]
    %v1709 = vld [vmem:[%s2 + $0x38] sm:$0xff]
    %v1710 = vld [vmem:[%s2 + $0x40] sm:$0xff]
    %v1711 = vld [vmem:[%s2 + $0x48] sm:$0xff]
    %v1712 = vld [vmem:[%s2 + $0x50] sm:$0xff]
    %v1713 = vld [vmem:[%s2 + $0x58] sm:$0xff]
    %v1714 = vld [vmem:[%s2 + $0x60] sm:$0xff]
    %v1715 = vld [vmem:[%s2 + $0x68] sm:$0xff]
    %v1716 = vld [vmem:[%s2 + $0x70] sm:$0xff]
    %v1717 = vld [vmem:[%s2 + $0x78] sm:$0xff]
    %v1718 = vld [vmem:[%s2 + $0x80] sm:$0x1]
    %v1719 = vld [vmem:[%s2 + $0x81] sm:$0x1]
    %v1720 = vlaneseq
    %v1721 = vshrl.u32 %v1720, 7
    %v1722 = vsub.s32 0, %v1721
    %v1723 = vrot.slane %v1719, %v1722
    %v1724 = vld [vmem:[%s2 + $0x88] sm:$0xff]
    %v1725 = vld [vmem:[%s2 + $0x90] sm:$0xff]
    %v1726 = vld [vmem:[%s2 + $0x98] sm:$0xff]
    %v1727 = vld [vmem:[%s2 + $0xa0] sm:$0xff]
    %v1728 = vld [vmem:[%s2 + $0xa8] sm:$0x1]
    %v1729 = vlaneseq
    %v1730 = vshrl.u32 %v1729, 7
    %v1731 = vsub.s32 0, %v1730
    %v1732 = vrot.slane %v1718, %v1731
    %v1734 = vsel %vm66, %v1700, 0
    %v1737 = vsel %vm66, %v1701, 0
    %1739 = vmatprep.subr.mxu0 0.0
    %1740 = vmatpush1.msra.mxu0 %v1702
    %1741 = vmatprep.subr.mxu0 0.0
    %1742 = vmatpush1.msra.mxu0 %v1703
    %1743 = vmatprep.subr.mxu0 0.0
    %1744 = vmatpush1.msra.mxu0 %v1704
    %1745 = vmatprep.subr.mxu0 0.0
    %1746 = vmatpush1.msra.mxu0 %v1705
    %1747 = vmatprep.subr.mxu0 0.0
    %1748 = vmatpush1.msra.mxu0 0.0
    %1749 = vmatprep.subr.mxu0 0.0
    %1750 = vmatpush1.msra.mxu0 0.0
    %1751 = vmatprep.subr.mxu0 0.0
    %1752 = vmatpush1.msra.mxu0 0.0
    %1753 = vmatprep.subr.mxu0 0.0
    %1754 = vmatpush1.msra.mxu0 0.0
    %1755 = vmatprep.subr.mxu0 0.0
    %1756 = vmatpush1.msra.mxu0 0.0
    %1757 = vmatprep.subr.mxu0 0.0
    %1758 = vmatpush1.msra.mxu0 0.0
    %1759 = vmatprep.subr.mxu0 0.0
    %1760 = vmatpush1.msra.mxu0 0.0
    %1761 = vmatprep.subr.mxu0 0.0
    %1762 = vmatpush1.msra.mxu0 0.0
    %1763 = vmatprep.subr.mxu0 0.0
    %1764 = vmatpush1.msra.mxu0 0.0
    %1765 = vmatprep.subr.mxu0 0.0
    %1766 = vmatpush1.msra.mxu0 0.0
    %1767 = vmatprep.subr.mxu0 0.0
    %1768 = vmatpush1.msra.mxu0 0.0
    %1769 = vmatprep.subr.mxu0 0.0
    %1770 = vmatpush1.msra.mxu0 0.0
    %1771 = vmatprep.subr.mxu0 0.0
    %1772 = vmatpush1.msra.mxu0 0.0
    %1773 = vmatprep.subr.mxu0 0.0
    %1774 = vmatpush1.msra.mxu0 0.0
    %1775 = vmatprep.subr.mxu0 0.0
    %1776 = vmatpush1.msra.mxu0 0.0
    %1777 = vmatprep.subr.mxu0 0.0
    %1778 = vmatpush1.msra.mxu0 0.0
    %1779 = vmatprep.subr.mxu0 0.0
    %1780 = vmatpush1.msra.mxu0 0.0
    %1781 = vmatprep.subr.mxu0 0.0
    %1782 = vmatpush1.msra.mxu0 0.0
    %1783 = vmatprep.subr.mxu0 0.0
    %1784 = vmatpush1.msra.mxu0 0.0
    %1785 = vmatprep.subr.mxu0 0.0
    %1786 = vmatpush1.msra.mxu0 0.0
    %1787 = vmatprep.subr.mxu0 0.0
    %1788 = vmatpush1.msra.mxu0 0.0
    %1789 = vmatprep.subr.mxu0 0.0
    %1790 = vmatpush1.msra.mxu0 0.0
    %1791 = vmatprep.subr.mxu0 0.0
    %1792 = vmatpush1.msra.mxu0 0.0
    %1793 = vmatprep.subr.mxu0 0.0
    %1794 = vmatpush1.msra.mxu0 0.0
    %1795 = vmatprep.subr.mxu0 0.0
    %1796 = vmatpush1.msra.mxu0 0.0
    %1797 = vmatprep.subr.mxu0 0.0
    %1798 = vmatpush1.msra.mxu0 0.0
    %1799 = vmatprep.subr.mxu0 0.0
    %1800 = vmatpush1.msra.mxu0 0.0
    %1801 = vmatprep.subr.mxu0 0.0
    %1802 = vmatpush1.msra.mxu0 0.0
    %1803 = vmatprep.mubr.f32.mxu0 0.0
    %1804 = vmatmul.mubr.f32.gmra.mrb[0].mxu0 %v1734
    %v1805 = vpop.f32.mrb[0].mxu0
    %v1806 = vadd.f32 %v1732, %v1805
    %v1807 = vpop.f32.mrb[0].mxu0
    %1808 = vmatprep.mubr.f32.mxu0 0.0
    %1809 = vmatmul.mubr.f32.gmra.mrb[0].mxu0 %v1737
    %v1810 = vpop.f32.mrb[0].mxu0
    %v1811 = vadd.f32 %v1732, %v1810
    %v1812 = vpop.f32.mrb[0].mxu0
    %1813 = vdwg.mxu0
    %v1815 = vsel %vm66, 0.0, 0
    %1817 = vmatprep.subr.mxu0 0.0
    %1818 = vmatpush1.msra.mxu0 %v1706
    %1819 = vmatprep.subr.mxu0 0.0
    %1820 = vmatpush1.msra.mxu0 %v1707
    %1821 = vmatprep.subr.mxu0 0.0
    %1822 = vmatpush1.msra.mxu0 %v1708
    %1823 = vmatprep.subr.mxu0 0.0
    %1824 = vmatpush1.msra.mxu0 %v1709
    %1825 = vmatprep.subr.mxu0 0.0
    %1826 = vmatpush1.msra.mxu0 0.0
    %1827 = vmatprep.subr.mxu0 0.0
    %1828 = vmatpush1.msra.mxu0 0.0
    %1829 = vmatprep.subr.mxu0 0.0
    %1830 = vmatpush1.msra.mxu0 0.0
    %1831 = vmatprep.subr.mxu0 0.0
    %1832 = vmatpush1.msra.mxu0 0.0
    %1833 = vmatprep.subr.mxu0 0.0
    %1834 = vmatpush1.msra.mxu0 0.0
    %1835 = vmatprep.subr.mxu0 0.0
    %1836 = vmatpush1.msra.mxu0 0.0
    %1837 = vmatprep.subr.mxu0 0.0
    %1838 = vmatpush1.msra.mxu0 0.0
    %1839 = vmatprep.subr.mxu0 0.0
    %1840 = vmatpush1.msra.mxu0 0.0
    %1841 = vmatprep.subr.mxu0 0.0
    %1842 = vmatpush1.msra.mxu0 0.0
    %1843 = vmatprep.subr.mxu0 0.0
    %1844 = vmatpush1.msra.mxu0 0.0
    %1845 = vmatprep.subr.mxu0 0.0
    %1846 = vmatpush1.msra.mxu0 0.0
    %1847 = vmatprep.subr.mxu0 0.0
    %1848 = vmatpush1.msra.mxu0 0.0
    %1849 = vmatprep.subr.mxu0 0.0
    %1850 = vmatpush1.msra.mxu0 0.0
    %1851 = vmatprep.subr.mxu0 0.0
    %1852 = vmatpush1.msra.mxu0 0.0
    %1853 = vmatprep.subr.mxu0 0.0
    %1854 = vmatpush1.msra.mxu0 0.0
    %1855 = vmatprep.subr.mxu0 0.0
    %1856 = vmatpush1.msra.mxu0 0.0
    %1857 = vmatprep.subr.mxu0 0.0
    %1858 = vmatpush1.msra.mxu0 0.0
    %1859 = vmatprep.subr.mxu0 0.0
    %1860 = vmatpush1.msra.mxu0 0.0
    %1861 = vmatprep.subr.mxu0 0.0
    %1862 = vmatpush1.msra.mxu0 0.0
    %1863 = vmatprep.subr.mxu0 0.0
    %1864 = vmatpush1.msra.mxu0 0.0
    %1865 = vmatprep.subr.mxu0 0.0
    %1866 = vmatpush1.msra.mxu0 0.0
    %1867 = vmatprep.subr.mxu0 0.0
    %1868 = vmatpush1.msra.mxu0 0.0
    %1869 = vmatprep.subr.mxu0 0.0
    %1870 = vmatpush1.msra.mxu0 0.0
    %1871 = vmatprep.subr.mxu0 0.0
    %1872 = vmatpush1.msra.mxu0 0.0
    %1873 = vmatprep.subr.mxu0 0.0
    %1874 = vmatpush1.msra.mxu0 0.0
    %1875 = vmatprep.subr.mxu0 0.0
    %1876 = vmatpush1.msra.mxu0 0.0
    %1877 = vmatprep.subr.mxu0 0.0
    %1878 = vmatpush1.msra.mxu0 0.0
    %1879 = vmatprep.subr.mxu0 0.0
    %1880 = vmatpush1.msra.mxu0 0.0
    %1881 = vmatprep.mubr.f32.mxu0 0.0
    %1882 = vmatmul.mubr.f32.gmra.mrb[0].mxu0 %v1815
    %v1883 = vpop.f32.mrb[0].mxu0
    %v1884 = vadd.f32 0.0, %v1883
    %v1885 = vpop.f32.mrb[0].mxu0
    %1886 = vdwg.mxu0
    %v1887 = vadd.f32 %v1806, %v1884
    %v1888 = vxor.u32 %v1887, 2147483648
    %v1889 = vmul.f32 %v1888, 1.442695
    %v1890 = vpow.pop %v1889
    %v1891 = vadd.f32 %v1890, 1.0
    %v1892 = vrcp.pop %v1891
    %v1893 = vmul.f32 1.0, %v1892
    %v1894 = vtanh.pop %v1887
    %v1895 = vmul.f32 %v1893, 0.0
    %1897 = vrot.lane.b32.xlu0 %v1894, 64
    %v1898 = vpop.permute.xlu0 %1897
    %v1900 = vmul.f32 %v1893, %v1898
    %1902 = vrot.lane.b32.xlu0 %v1900, 32
    %v1903 = vpop.permute.xlu0 %1902
    %v1905 = vadd.f32 %v1895, %v1903
    %v1906 = vtanh.pop %v1905
    %1908 = vrot.lane.b32.xlu0 %v1906, 64
    %v1909 = vpop.permute.xlu0 %1908
    %v1911 = vmul.f32 %v1893, %v1909
    %1913 = vrot.lane.b32.xlu0 %v1911, 32
    %v1914 = vpop.permute.xlu0 %1913
    %v1916 = vsel %vm66, %v1914, 0.0
    %vm1917 = vcmask 523264
    %v1919 = vsel %vm1917, %v1916, 0
    %1921 = vmatprep.subr.mxu0 0.0
    %1922 = vmatpush1.msra.mxu0 %v1710
    %1923 = vmatprep.subr.mxu0 0.0
    %1924 = vmatpush1.msra.mxu0 %v1711
    %1925 = vmatprep.subr.mxu0 0.0
    %1926 = vmatpush1.msra.mxu0 %v1712
    %1927 = vmatprep.subr.mxu0 0.0
    %1928 = vmatpush1.msra.mxu0 %v1713
    %1929 = vmatprep.subr.mxu0 0.0
    %1930 = vmatpush1.msra.mxu0 %v1714
    %1931 = vmatprep.subr.mxu0 0.0
    %1932 = vmatpush1.msra.mxu0 %v1715
    %1933 = vmatprep.subr.mxu0 0.0
    %1934 = vmatpush1.msra.mxu0 %v1716
    %1935 = vmatprep.subr.mxu0 0.0
    %1936 = vmatpush1.msra.mxu0 %v1717
    %1937 = vmatprep.subr.mxu0 0.0
    %1938 = vmatpush1.msra.mxu0 0.0
    %1939 = vmatprep.subr.mxu0 0.0
    %1940 = vmatpush1.msra.mxu0 0.0
    %1941 = vmatprep.subr.mxu0 0.0
    %1942 = vmatpush1.msra.mxu0 0.0
    %1943 = vmatprep.subr.mxu0 0.0
    %1944 = vmatpush1.msra.mxu0 0.0
    %1945 = vmatprep.subr.mxu0 0.0
    %1946 = vmatpush1.msra.mxu0 0.0
    %1947 = vmatprep.subr.mxu0 0.0
    %1948 = vmatpush1.msra.mxu0 0.0
    %1949 = vmatprep.subr.mxu0 0.0
    %1950 = vmatpush1.msra.mxu0 0.0
    %1951 = vmatprep.subr.mxu0 0.0
    %1952 = vmatpush1.msra.mxu0 0.0
    %1953 = vmatprep.subr.mxu0 0.0
    %1954 = vmatpush1.msra.mxu0 0.0
    %1955 = vmatprep.subr.mxu0 0.0
    %1956 = vmatpush1.msra.mxu0 0.0
    %1957 = vmatprep.subr.mxu0 0.0
    %1958 = vmatpush1.msra.mxu0 0.0
    %1959 = vmatprep.subr.mxu0 0.0
    %1960 = vmatpush1.msra.mxu0 0.0
    %1961 = vmatprep.subr.mxu0 0.0
    %1962 = vmatpush1.msra.mxu0 0.0
    %1963 = vmatprep.subr.mxu0 0.0
    %1964 = vmatpush1.msra.mxu0 0.0
    %1965 = vmatprep.subr.mxu0 0.0
    %1966 = vmatpush1.msra.mxu0 0.0
    %1967 = vmatprep.subr.mxu0 0.0
    %1968 = vmatpush1.msra.mxu0 0.0
    %1969 = vmatprep.subr.mxu0 0.0
    %1970 = vmatpush1.msra.mxu0 0.0
    %1971 = vmatprep.subr.mxu0 0.0
    %1972 = vmatpush1.msra.mxu0 0.0
    %1973 = vmatprep.subr.mxu0 0.0
    %1974 = vmatpush1.msra.mxu0 0.0
    %1975 = vmatprep.subr.mxu0 0.0
    %1976 = vmatpush1.msra.mxu0 0.0
    %1977 = vmatprep.subr.mxu0 0.0
    %1978 = vmatpush1.msra.mxu0 0.0
    %1979 = vmatprep.subr.mxu0 0.0
    %1980 = vmatpush1.msra.mxu0 0.0
    %1981 = vmatprep.subr.mxu0 0.0
    %1982 = vmatpush1.msra.mxu0 0.0
    %1983 = vmatprep.subr.mxu0 0.0
    %1984 = vmatpush1.msra.mxu0 0.0
    %1985 = vmatprep.mubr.f32.mxu0 0.0
    %1986 = vmatmul.mubr.f32.gmra.mrb[0].mxu0 %v1919
    %v1987 = vpop.f32.mrb[0].mxu0
    %v1988 = vadd.f32 %v1723, %v1987
    %v1989 = vpop.f32.mrb[0].mxu0
    %1990 = vdwg.mxu0
    %v1991 = vxor.u32 %v1988, 2147483648
    %v1992 = vmul.f32 %v1991, 1.442695
    %v1993 = vpow.pop %v1992
    %v1994 = vadd.f32 %v1993, 1.0
    %v1995 = vrcp.pop %v1994
    %v1996 = vmul.f32 1.0, %v1995
    %v1997 = vtanh.pop %v1988
    %v1998 = vmul.f32 %v1996, 0.0
    %2000 = vrot.lane.b32.xlu0 %v1997, 64
    %v2001 = vpop.permute.xlu0 %2000
    %v2003 = vmul.f32 %v1996, %v2001
    %2005 = vrot.lane.b32.xlu0 %v2003, 32
    %v2006 = vpop.permute.xlu0 %2005
    %v2008 = vadd.f32 %v1998, %v2006
    %v2009 = vtanh.pop %v2008
    %2011 = vrot.lane.b32.xlu0 %v2009, 64
    %v2012 = vpop.permute.xlu0 %2011
    %v2014 = vmul.f32 %v1996, %v2012
    %v2015 = vsel %vm66, %v1914, 0
    %2017 = vmatprep.subr.mxu0 0.0
    %2018 = vmatpush1.msra.mxu0 %v1706
    %2019 = vmatprep.subr.mxu0 0.0
    %2020 = vmatpush1.msra.mxu0 %v1707
    %2021 = vmatprep.subr.mxu0 0.0
    %2022 = vmatpush1.msra.mxu0 %v1708
    %2023 = vmatprep.subr.mxu0 0.0
    %2024 = vmatpush1.msra.mxu0 %v1709
    %2025 = vmatprep.subr.mxu0 0.0
    %2026 = vmatpush1.msra.mxu0 0.0
    %2027 = vmatprep.subr.mxu0 0.0
    %2028 = vmatpush1.msra.mxu0 0.0
    %2029 = vmatprep.subr.mxu0 0.0
    %2030 = vmatpush1.msra.mxu0 0.0
    %2031 = vmatprep.subr.mxu0 0.0
    %2032 = vmatpush1.msra.mxu0 0.0
    %2033 = vmatprep.subr.mxu0 0.0
    %2034 = vmatpush1.msra.mxu0 0.0
    %2035 = vmatprep.subr.mxu0 0.0
    %2036 = vmatpush1.msra.mxu0 0.0
    %2037 = vmatprep.subr.mxu0 0.0
    %2038 = vmatpush1.msra.mxu0 0.0
    %2039 = vmatprep.subr.mxu0 0.0
    %2040 = vmatpush1.msra.mxu0 0.0
    %2041 = vmatprep.subr.mxu0 0.0
    %2042 = vmatpush1.msra.mxu0 0.0
    %2043 = vmatprep.subr.mxu0 0.0
    %2044 = vmatpush1.msra.mxu0 0.0
    %2045 = vmatprep.subr.mxu0 0.0
    %2046 = vmatpush1.msra.mxu0 0.0
    %2047 = vmatprep.subr.mxu0 0.0
    %2048 = vmatpush1.msra.mxu0 0.0
    %2049 = vmatprep.subr.mxu0 0.0
    %2050 = vmatpush1.msra.mxu0 0.0
    %2051 = vmatprep.subr.mxu0 0.0
    %2052 = vmatpush1.msra.mxu0 0.0
    %2053 = vmatprep.subr.mxu0 0.0
    %2054 = vmatpush1.msra.mxu0 0.0
    %2055 = vmatprep.subr.mxu0 0.0
    %2056 = vmatpush1.msra.mxu0 0.0
    %2057 = vmatprep.subr.mxu0 0.0
    %2058 = vmatpush1.msra.mxu0 0.0
    %2059 = vmatprep.subr.mxu0 0.0
    %2060 = vmatpush1.msra.mxu0 0.0
    %2061 = vmatprep.subr.mxu0 0.0
    %2062 = vmatpush1.msra.mxu0 0.0
    %2063 = vmatprep.subr.mxu0 0.0
    %2064 = vmatpush1.msra.mxu0 0.0
    %2065 = vmatprep.subr.mxu0 0.0
    %2066 = vmatpush1.msra.mxu0 0.0
    %2067 = vmatprep.subr.mxu0 0.0
    %2068 = vmatpush1.msra.mxu0 0.0
    %2069 = vmatprep.subr.mxu0 0.0
    %2070 = vmatpush1.msra.mxu0 0.0
    %2071 = vmatprep.subr.mxu0 0.0
    %2072 = vmatpush1.msra.mxu0 0.0
    %2073 = vmatprep.subr.mxu0 0.0
    %2074 = vmatpush1.msra.mxu0 0.0
    %2075 = vmatprep.subr.mxu0 0.0
    %2076 = vmatpush1.msra.mxu0 0.0
    %2077 = vmatprep.subr.mxu0 0.0
    %2078 = vmatpush1.msra.mxu0 0.0
    %2079 = vmatprep.subr.mxu0 0.0
    %2080 = vmatpush1.msra.mxu0 0.0
    %2081 = vmatprep.mubr.f32.mxu0 0.0
    %2082 = vmatmul.mubr.f32.gmra.mrb[0].mxu0 %v2015
    %v2083 = vpop.f32.mrb[0].mxu0
    %v2084 = vadd.f32 0.0, %v2083
    %v2085 = vpop.f32.mrb[0].mxu0
    %2086 = vdwg.mxu0
    %v2088 = vrot.slane %v2084, 6
    %v2090 = vadd.f32 %v1806, %v2088
    %v2091 = vxor.u32 %v2090, 2147483648
    %v2092 = vmul.f32 %v2091, 1.442695
    %v2093 = vpow.pop %v2092
    %v2094 = vadd.f32 %v2093, 1.0
    %v2095 = vrcp.pop %v2094
    %v2096 = vmul.f32 1.0, %v2095
    %v2097 = vtanh.pop %v2090
    %v2099 = vrot.slane %v1905, 6
    %v2101 = vmul.f32 %v2096, %v2099
    %2103 = vrot.lane.b32.xlu0 %v2097, 64
    %v2104 = vpop.permute.xlu0 %2103
    %v2106 = vmul.f32 %v2096, %v2104
    %2108 = vrot.lane.b32.xlu0 %v2106, 32
    %v2109 = vpop.permute.xlu0 %2108
    %v2111 = vadd.f32 %v2101, %v2109
    %v2112 = vtanh.pop %v2111
    %2114 = vrot.lane.b32.xlu0 %v2112, 64
    %v2115 = vpop.permute.xlu0 %2114
    %v2117 = vmul.f32 %v2096, %v2115
    %2119 = vrot.lane.b32.xlu0 %v2117, 32
    %v2120 = vpop.permute.xlu0 %2119
    %v2123 = vrot.slane %v2014, 6
    %2124 = vrot.lane.b32.xlu0 %v2123, 64
    %v2125 = vpop.permute.xlu0 %2124
    %v2127 = vsel %vm66, %v2120, %v2125
    %v2129 = vrot.slane %v2127, 2
    %v2130 = vsel %vm1917, %v2129, 0
    %2132 = vmatprep.subr.mxu0 0.0
    %2133 = vmatpush1.msra.mxu0 %v1710
    %2134 = vmatprep.subr.mxu0 0.0
    %2135 = vmatpush1.msra.mxu0 %v1711
    %2136 = vmatprep.subr.mxu0 0.0
    %2137 = vmatpush1.msra.mxu0 %v1712
    %2138 = vmatprep.subr.mxu0 0.0
    %2139 = vmatpush1.msra.mxu0 %v1713
    %2140 = vmatprep.subr.mxu0 0.0
    %2141 = vmatpush1.msra.mxu0 %v1714
    %2142 = vmatprep.subr.mxu0 0.0
    %2143 = vmatpush1.msra.mxu0 %v1715
    %2144 = vmatprep.subr.mxu0 0.0
    %2145 = vmatpush1.msra.mxu0 %v1716
    %2146 = vmatprep.subr.mxu0 0.0
    %2147 = vmatpush1.msra.mxu0 %v1717
    %2148 = vmatprep.subr.mxu0 0.0
    %2149 = vmatpush1.msra.mxu0 0.0
    %2150 = vmatprep.subr.mxu0 0.0
    %2151 = vmatpush1.msra.mxu0 0.0
    %2152 = vmatprep.subr.mxu0 0.0
    %2153 = vmatpush1.msra.mxu0 0.0
    %2154 = vmatprep.subr.mxu0 0.0
    %2155 = vmatpush1.msra.mxu0 0.0
    %2156 = vmatprep.subr.mxu0 0.0
    %2157 = vmatpush1.msra.mxu0 0.0
    %2158 = vmatprep.subr.mxu0 0.0
    %2159 = vmatpush1.msra.mxu0 0.0
    %2160 = vmatprep.subr.mxu0 0.0
    %2161 = vmatpush1.msra.mxu0 0.0
    %2162 = vmatprep.subr.mxu0 0.0
    %2163 = vmatpush1.msra.mxu0 0.0
    %2164 = vmatprep.subr.mxu0 0.0
    %2165 = vmatpush1.msra.mxu0 0.0
    %2166 = vmatprep.subr.mxu0 0.0
    %2167 = vmatpush1.msra.mxu0 0.0
    %2168 = vmatprep.subr.mxu0 0.0
    %2169 = vmatpush1.msra.mxu0 0.0
    %2170 = vmatprep.subr.mxu0 0.0
    %2171 = vmatpush1.msra.mxu0 0.0
    %2172 = vmatprep.subr.mxu0 0.0
    %2173 = vmatpush1.msra.mxu0 0.0
    %2174 = vmatprep.subr.mxu0 0.0
    %2175 = vmatpush1.msra.mxu0 0.0
    %2176 = vmatprep.subr.mxu0 0.0
    %2177 = vmatpush1.msra.mxu0 0.0
    %2178 = vmatprep.subr.mxu0 0.0
    %2179 = vmatpush1.msra.mxu0 0.0
    %2180 = vmatprep.subr.mxu0 0.0
    %2181 = vmatpush1.msra.mxu0 0.0
    %2182 = vmatprep.subr.mxu0 0.0
    %2183 = vmatpush1.msra.mxu0 0.0
    %2184 = vmatprep.subr.mxu0 0.0
    %2185 = vmatpush1.msra.mxu0 0.0
    %2186 = vmatprep.subr.mxu0 0.0
    %2187 = vmatpush1.msra.mxu0 0.0
    %2188 = vmatprep.subr.mxu0 0.0
    %2189 = vmatpush1.msra.mxu0 0.0
    %2190 = vmatprep.subr.mxu0 0.0
    %2191 = vmatpush1.msra.mxu0 0.0
    %2192 = vmatprep.subr.mxu0 0.0
    %2193 = vmatpush1.msra.mxu0 0.0
    %2194 = vmatprep.subr.mxu0 0.0
    %2195 = vmatpush1.msra.mxu0 0.0
    %2196 = vmatprep.mubr.f32.mxu0 0.0
    %2197 = vmatmul.mubr.f32.gmra.mrb[0].mxu0 %v2130
    %v2198 = vpop.f32.mrb[0].mxu0
    %v2199 = vadd.f32 %v1723, %v2198
    %v2200 = vpop.f32.mrb[0].mxu0
    %2201 = vdwg.mxu0
    %v2202 = vxor.u32 %v2199, 2147483648
    %v2203 = vmul.f32 %v2202, 1.442695
    %v2204 = vpow.pop %v2203
    %v2205 = vadd.f32 %v2204, 1.0
    %v2206 = vrcp.pop %v2205
    %v2207 = vmul.f32 1.0, %v2206
    %v2208 = vtanh.pop %v2199
    %v2209 = vmul.f32 %v2207, %v2008
    %2211 = vrot.lane.b32.xlu0 %v2208, 64
    %v2212 = vpop.permute.xlu0 %2211
    %v2214 = vmul.f32 %v2207, %v2212
    %2216 = vrot.lane.b32.xlu0 %v2214, 32
    %v2217 = vpop.permute.xlu0 %2216
    %v2219 = vadd.f32 %v2209, %v2217
    %v2220 = vtanh.pop %v2219
    %2222 = vrot.lane.b32.xlu0 %v2220, 64
    %v2223 = vpop.permute.xlu0 %2222
    %v2225 = vmul.f32 %v2207, %v2223
    %v2226 = vrot.slane %v2117, 2
    %2227 = vrot.lane.b32.xlu0 %v2226, 32
    %v2228 = vpop.permute.xlu0 %2227
    %v2229 = vsel %vm66, %v2228, 0
    %2231 = vmatprep.subr.mxu0 0.0
    %2232 = vmatpush1.msra.mxu0 %v1706
    %2233 = vmatprep.subr.mxu0 0.0
    %2234 = vmatpush1.msra.mxu0 %v1707
    %2235 = vmatprep.subr.mxu0 0.0
    %2236 = vmatpush1.msra.mxu0 %v1708
    %2237 = vmatprep.subr.mxu0 0.0
    %2238 = vmatpush1.msra.mxu0 %v1709
    %2239 = vmatprep.subr.mxu0 0.0
    %2240 = vmatpush1.msra.mxu0 0.0
    %2241 = vmatprep.subr.mxu0 0.0
    %2242 = vmatpush1.msra.mxu0 0.0
    %2243 = vmatprep.subr.mxu0 0.0
    %2244 = vmatpush1.msra.mxu0 0.0
    %2245 = vmatprep.subr.mxu0 0.0
    %2246 = vmatpush1.msra.mxu0 0.0
    %2247 = vmatprep.subr.mxu0 0.0
    %2248 = vmatpush1.msra.mxu0 0.0
    %2249 = vmatprep.subr.mxu0 0.0
    %2250 = vmatpush1.msra.mxu0 0.0
    %2251 = vmatprep.subr.mxu0 0.0
    %2252 = vmatpush1.msra.mxu0 0.0
    %2253 = vmatprep.subr.mxu0 0.0
    %2254 = vmatpush1.msra.mxu0 0.0
    %2255 = vmatprep.subr.mxu0 0.0
    %2256 = vmatpush1.msra.mxu0 0.0
    %2257 = vmatprep.subr.mxu0 0.0
    %2258 = vmatpush1.msra.mxu0 0.0
    %2259 = vmatprep.subr.mxu0 0.0
    %2260 = vmatpush1.msra.mxu0 0.0
    %2261 = vmatprep.subr.mxu0 0.0
    %2262 = vmatpush1.msra.mxu0 0.0
    %2263 = vmatprep.subr.mxu0 0.0
    %2264 = vmatpush1.msra.mxu0 0.0
    %2265 = vmatprep.subr.mxu0 0.0
    %2266 = vmatpush1.msra.mxu0 0.0
    %2267 = vmatprep.subr.mxu0 0.0
    %2268 = vmatpush1.msra.mxu0 0.0
    %2269 = vmatprep.subr.mxu0 0.0
    %2270 = vmatpush1.msra.mxu0 0.0
    %2271 = vmatprep.subr.mxu0 0.0
    %2272 = vmatpush1.msra.mxu0 0.0
    %2273 = vmatprep.subr.mxu0 0.0
    %2274 = vmatpush1.msra.mxu0 0.0
    %2275 = vmatprep.subr.mxu0 0.0
    %2276 = vmatpush1.msra.mxu0 0.0
    %2277 = vmatprep.subr.mxu0 0.0
    %2278 = vmatpush1.msra.mxu0 0.0
    %2279 = vmatprep.subr.mxu0 0.0
    %2280 = vmatpush1.msra.mxu0 0.0
    %2281 = vmatprep.subr.mxu0 0.0
    %2282 = vmatpush1.msra.mxu0 0.0
    %2283 = vmatprep.subr.mxu0 0.0
    %2284 = vmatpush1.msra.mxu0 0.0
    %2285 = vmatprep.subr.mxu0 0.0
    %2286 = vmatpush1.msra.mxu0 0.0
    %2287 = vmatprep.subr.mxu0 0.0
    %2288 = vmatpush1.msra.mxu0 0.0
    %2289 = vmatprep.subr.mxu0 0.0
    %2290 = vmatpush1.msra.mxu0 0.0
    %2291 = vmatprep.subr.mxu0 0.0
    %2292 = vmatpush1.msra.mxu0 0.0
    %2293 = vmatprep.subr.mxu0 0.0
    %2294 = vmatpush1.msra.mxu0 0.0
    %2295 = vmatprep.mubr.f32.mxu0 0.0
    %2296 = vmatmul.mubr.f32.gmra.mrb[0].mxu0 %v2229
    %v2297 = vpop.f32.mrb[0].mxu0
    %v2298 = vadd.f32 0.0, %v2297
    %v2299 = vpop.f32.mrb[0].mxu0
    %2300 = vdwg.mxu0
    %v2302 = vrot.slane %v2298, 4
    %v2304 = vadd.f32 %v1806, %v2302
    %v2305 = vxor.u32 %v2304, 2147483648
    %v2306 = vmul.f32 %v2305, 1.442695
    %v2307 = vpow.pop %v2306
    %v2308 = vadd.f32 %v2307, 1.0
    %v2309 = vrcp.pop %v2308
    %v2310 = vmul.f32 1.0, %v2309
    %v2311 = vtanh.pop %v2304
    %v2313 = vrot.slane %v2111, 6
    %v2315 = vmul.f32 %v2310, %v2313
    %2317 = vrot.lane.b32.xlu0 %v2311, 64
    %v2318 = vpop.permute.xlu0 %2317
    %v2320 = vmul.f32 %v2310, %v2318
    %2322 = vrot.lane.b32.xlu0 %v2320, 32
    %v2323 = vpop.permute.xlu0 %2322
    %v2325 = vadd.f32 %v2315, %v2323
    %v2326 = vtanh.pop %v2325
    %2328 = vrot.lane.b32.xlu0 %v2326, 64
    %v2329 = vpop.permute.xlu0 %2328
    %v2331 = vmul.f32 %v2310, %v2329
    %2333 = vrot.lane.b32.xlu0 %v2331, 32
    %v2334 = vpop.permute.xlu0 %2333
    %v2337 = vrot.slane %v2225, 4
    %2338 = vrot.lane.b32.xlu0 %v2337, 64
    %v2339 = vpop.permute.xlu0 %2338
    %v2341 = vsel %vm66, %v2334, %v2339
    %v2343 = vrot.slane %v2341, 4
    %v2344 = vsel %vm1917, %v2343, 0
    %2346 = vmatprep.subr.mxu0 0.0
    %2347 = vmatpush1.msra.mxu0 %v1710
    %2348 = vmatprep.subr.mxu0 0.0
    %2349 = vmatpush1.msra.mxu0 %v1711
    %2350 = vmatprep.subr.mxu0 0.0
    %2351 = vmatpush1.msra.mxu0 %v1712
    %2352 = vmatprep.subr.mxu0 0.0
    %2353 = vmatpush1.msra.mxu0 %v1713
    %2354 = vmatprep.subr.mxu0 0.0
    %2355 = vmatpush1.msra.mxu0 %v1714
    %2356 = vmatprep.subr.mxu0 0.0
    %2357 = vmatpush1.msra.mxu0 %v1715
    %2358 = vmatprep.subr.mxu0 0.0
    %2359 = vmatpush1.msra.mxu0 %v1716
    %2360 = vmatprep.subr.mxu0 0.0
    %2361 = vmatpush1.msra.mxu0 %v1717
    %2362 = vmatprep.subr.mxu0 0.0
    %2363 = vmatpush1.msra.mxu0 0.0
    %2364 = vmatprep.subr.mxu0 0.0
    %2365 = vmatpush1.msra.mxu0 0.0
    %2366 = vmatprep.subr.mxu0 0.0
    %2367 = vmatpush1.msra.mxu0 0.0
    %2368 = vmatprep.subr.mxu0 0.0
    %2369 = vmatpush1.msra.mxu0 0.0
    %2370 = vmatprep.subr.mxu0 0.0
    %2371 = vmatpush1.msra.mxu0 0.0
    %2372 = vmatprep.subr.mxu0 0.0
    %2373 = vmatpush1.msra.mxu0 0.0
    %2374 = vmatprep.subr.mxu0 0.0
    %2375 = vmatpush1.msra.mxu0 0.0
    %2376 = vmatprep.subr.mxu0 0.0
    %2377 = vmatpush1.msra.mxu0 0.0
    %2378 = vmatprep.subr.mxu0 0.0
    %2379 = vmatpush1.msra.mxu0 0.0
    %2380 = vmatprep.subr.mxu0 0.0
    %2381 = vmatpush1.msra.mxu0 0.0
    %2382 = vmatprep.subr.mxu0 0.0
    %2383 = vmatpush1.msra.mxu0 0.0
    %2384 = vmatprep.subr.mxu0 0.0
    %2385 = vmatpush1.msra.mxu0 0.0
    %2386 = vmatprep.subr.mxu0 0.0
    %2387 = vmatpush1.msra.mxu0 0.0
    %2388 = vmatprep.subr.mxu0 0.0
    %2389 = vmatpush1.msra.mxu0 0.0
    %2390 = vmatprep.subr.mxu0 0.0
    %2391 = vmatpush1.msra.mxu0 0.0
    %2392 = vmatprep.subr.mxu0 0.0
    %2393 = vmatpush1.msra.mxu0 0.0
    %2394 = vmatprep.subr.mxu0 0.0
    %2395 = vmatpush1.msra.mxu0 0.0
    %2396 = vmatprep.subr.mxu0 0.0
    %2397 = vmatpush1.msra.mxu0 0.0
    %2398 = vmatprep.subr.mxu0 0.0
    %2399 = vmatpush1.msra.mxu0 0.0
    %2400 = vmatprep.subr.mxu0 0.0
    %2401 = vmatpush1.msra.mxu0 0.0
    %2402 = vmatprep.subr.mxu0 0.0
    %2403 = vmatpush1.msra.mxu0 0.0
    %2404 = vmatprep.subr.mxu0 0.0
    %2405 = vmatpush1.msra.mxu0 0.0
    %2406 = vmatprep.subr.mxu0 0.0
    %2407 = vmatpush1.msra.mxu0 0.0
    %2408 = vmatprep.subr.mxu0 0.0
    %2409 = vmatpush1.msra.mxu0 0.0
    %2410 = vmatprep.mubr.f32.mxu0 0.0
    %2411 = vmatmul.mubr.f32.gmra.mrb[0].mxu0 %v2344
    %v2412 = vpop.f32.mrb[0].mxu0
    %v2413 = vadd.f32 %v1723, %v2412
    %v2414 = vpop.f32.mrb[0].mxu0
    %2415 = vdwg.mxu0
    %v2416 = vxor.u32 %v2413, 2147483648
    %v2417 = vmul.f32 %v2416, 1.442695
    %v2418 = vpow.pop %v2417
    %v2419 = vadd.f32 %v2418, 1.0
    %v2420 = vrcp.pop %v2419
    %v2421 = vmul.f32 1.0, %v2420
    %v2422 = vtanh.pop %v2413
    %v2423 = vmul.f32 %v2421, %v2219
    %2425 = vrot.lane.b32.xlu0 %v2422, 64
    %v2426 = vpop.permute.xlu0 %2425
    %v2428 = vmul.f32 %v2421, %v2426
    %2430 = vrot.lane.b32.xlu0 %v2428, 32
    %v2431 = vpop.permute.xlu0 %2430
    %v2433 = vadd.f32 %v2423, %v2431
    %v2434 = vtanh.pop %v2433
    %2436 = vrot.lane.b32.xlu0 %v2434, 64
    %v2437 = vpop.permute.xlu0 %2436
    %v2439 = vmul.f32 %v2421, %v2437
    %v2440 = vrot.slane %v2331, 4
    %2441 = vrot.lane.b32.xlu0 %v2440, 32
    %v2442 = vpop.permute.xlu0 %2441
    %v2443 = vsel %vm66, %v2442, 0
    %2445 = vmatprep.subr.mxu0 0.0
    %2446 = vmatpush1.msra.mxu0 %v1706
    %2447 = vmatprep.subr.mxu0 0.0
    %2448 = vmatpush1.msra.mxu0 %v1707
    %2449 = vmatprep.subr.mxu0 0.0
    %2450 = vmatpush1.msra.mxu0 %v1708
    %2451 = vmatprep.subr.mxu0 0.0
    %2452 = vmatpush1.msra.mxu0 %v1709
    %2453 = vmatprep.subr.mxu0 0.0
    %2454 = vmatpush1.msra.mxu0 0.0
    %2455 = vmatprep.subr.mxu0 0.0
    %2456 = vmatpush1.msra.mxu0 0.0
    %2457 = vmatprep.subr.mxu0 0.0
    %2458 = vmatpush1.msra.mxu0 0.0
    %2459 = vmatprep.subr.mxu0 0.0
    %2460 = vmatpush1.msra.mxu0 0.0
    %2461 = vmatprep.subr.mxu0 0.0
    %2462 = vmatpush1.msra.mxu0 0.0
    %2463 = vmatprep.subr.mxu0 0.0
    %2464 = vmatpush1.msra.mxu0 0.0
    %2465 = vmatprep.subr.mxu0 0.0
    %2466 = vmatpush1.msra.mxu0 0.0
    %2467 = vmatprep.subr.mxu0 0.0
    %2468 = vmatpush1.msra.mxu0 0.0
    %2469 = vmatprep.subr.mxu0 0.0
    %2470 = vmatpush1.msra.mxu0 0.0
    %2471 = vmatprep.subr.mxu0 0.0
    %2472 = vmatpush1.msra.mxu0 0.0
    %2473 = vmatprep.subr.mxu0 0.0
    %2474 = vmatpush1.msra.mxu0 0.0
    %2475 = vmatprep.subr.mxu0 0.0
    %2476 = vmatpush1.msra.mxu0 0.0
    %2477 = vmatprep.subr.mxu0 0.0
    %2478 = vmatpush1.msra.mxu0 0.0
    %2479 = vmatprep.subr.mxu0 0.0
    %2480 = vmatpush1.msra.mxu0 0.0
    %2481 = vmatprep.subr.mxu0 0.0
    %2482 = vmatpush1.msra.mxu0 0.0
    %2483 = vmatprep.subr.mxu0 0.0
    %2484 = vmatpush1.msra.mxu0 0.0
    %2485 = vmatprep.subr.mxu0 0.0
    %2486 = vmatpush1.msra.mxu0 0.0
    %2487 = vmatprep.subr.mxu0 0.0
    %2488 = vmatpush1.msra.mxu0 0.0
    %2489 = vmatprep.subr.mxu0 0.0
    %2490 = vmatpush1.msra.mxu0 0.0
    %2491 = vmatprep.subr.mxu0 0.0
    %2492 = vmatpush1.msra.mxu0 0.0
    %2493 = vmatprep.subr.mxu0 0.0
    %2494 = vmatpush1.msra.mxu0 0.0
    %2495 = vmatprep.subr.mxu0 0.0
    %2496 = vmatpush1.msra.mxu0 0.0
    %2497 = vmatprep.subr.mxu0 0.0
    %2498 = vmatpush1.msra.mxu0 0.0
    %2499 = vmatprep.subr.mxu0 0.0
    %2500 = vmatpush1.msra.mxu0 0.0
    %2501 = vmatprep.subr.mxu0 0.0
    %2502 = vmatpush1.msra.mxu0 0.0
    %2503 = vmatprep.subr.mxu0 0.0
    %2504 = vmatpush1.msra.mxu0 0.0
    %2505 = vmatprep.subr.mxu0 0.0
    %2506 = vmatpush1.msra.mxu0 0.0
    %2507 = vmatprep.subr.mxu0 0.0
    %2508 = vmatpush1.msra.mxu0 0.0
    %2509 = vmatprep.mubr.f32.mxu0 0.0
    %2510 = vmatmul.mubr.f32.gmra.mrb[0].mxu0 %v2443
    %v2511 = vpop.f32.mrb[0].mxu0
    %v2512 = vadd.f32 0.0, %v2511
    %v2513 = vpop.f32.mrb[0].mxu0
    %2514 = vdwg.mxu0
    %v2516 = vrot.slane %v2512, 2
    %v2518 = vadd.f32 %v1806, %v2516
    %v2519 = vxor.u32 %v2518, 2147483648
    %v2520 = vmul.f32 %v2519, 1.442695
    %v2521 = vpow.pop %v2520
    %v2522 = vadd.f32 %v2521, 1.0
    %v2523 = vrcp.pop %v2522
    %v2524 = vmul.f32 1.0, %v2523
    %v2525 = vtanh.pop %v2518
    %v2527 = vrot.slane %v2325, 6
    %v2529 = vmul.f32 %v2524, %v2527
    %2531 = vrot.lane.b32.xlu0 %v2525, 64
    %v2532 = vpop.permute.xlu0 %2531
    %v2534 = vmul.f32 %v2524, %v2532
    %2536 = vrot.lane.b32.xlu0 %v2534, 32
    %v2537 = vpop.permute.xlu0 %2536
    %v2539 = vadd.f32 %v2529, %v2537
    %v2540 = vtanh.pop %v2539
    %2542 = vrot.lane.b32.xlu0 %v2540, 64
    %v2543 = vpop.permute.xlu0 %2542
    %v2545 = vmul.f32 %v2524, %v2543
    %2547 = vrot.lane.b32.xlu0 %v2545, 32
    %v2548 = vpop.permute.xlu0 %2547
    %v2551 = vrot.slane %v2439, 2
    %2552 = vrot.lane.b32.xlu0 %v2551, 64
    %v2553 = vpop.permute.xlu0 %2552
    %v2555 = vsel %vm66, %v2548, %v2553
    %v2557 = vrot.slane %v2555, 6
    %v2558 = vsel %vm1917, %v2557, 0
    %2560 = vmatprep.subr.mxu0 0.0
    %2561 = vmatpush1.msra.mxu0 %v1710
    %2562 = vmatprep.subr.mxu0 0.0
    %2563 = vmatpush1.msra.mxu0 %v1711
    %2564 = vmatprep.subr.mxu0 0.0
    %2565 = vmatpush1.msra.mxu0 %v1712
    %2566 = vmatprep.subr.mxu0 0.0
    %2567 = vmatpush1.msra.mxu0 %v1713
    %2568 = vmatprep.subr.mxu0 0.0
    %2569 = vmatpush1.msra.mxu0 %v1714
    %2570 = vmatprep.subr.mxu0 0.0
    %2571 = vmatpush1.msra.mxu0 %v1715
    %2572 = vmatprep.subr.mxu0 0.0
    %2573 = vmatpush1.msra.mxu0 %v1716
    %2574 = vmatprep.subr.mxu0 0.0
    %2575 = vmatpush1.msra.mxu0 %v1717
    %2576 = vmatprep.subr.mxu0 0.0
    %2577 = vmatpush1.msra.mxu0 0.0
    %2578 = vmatprep.subr.mxu0 0.0
    %2579 = vmatpush1.msra.mxu0 0.0
    %2580 = vmatprep.subr.mxu0 0.0
    %2581 = vmatpush1.msra.mxu0 0.0
    %2582 = vmatprep.subr.mxu0 0.0
    %2583 = vmatpush1.msra.mxu0 0.0
    %2584 = vmatprep.subr.mxu0 0.0
    %2585 = vmatpush1.msra.mxu0 0.0
    %2586 = vmatprep.subr.mxu0 0.0
    %2587 = vmatpush1.msra.mxu0 0.0
    %2588 = vmatprep.subr.mxu0 0.0
    %2589 = vmatpush1.msra.mxu0 0.0
    %2590 = vmatprep.subr.mxu0 0.0
    %2591 = vmatpush1.msra.mxu0 0.0
    %2592 = vmatprep.subr.mxu0 0.0
    %2593 = vmatpush1.msra.mxu0 0.0
    %2594 = vmatprep.subr.mxu0 0.0
    %2595 = vmatpush1.msra.mxu0 0.0
    %2596 = vmatprep.subr.mxu0 0.0
    %2597 = vmatpush1.msra.mxu0 0.0
    %2598 = vmatprep.subr.mxu0 0.0
    %2599 = vmatpush1.msra.mxu0 0.0
    %2600 = vmatprep.subr.mxu0 0.0
    %2601 = vmatpush1.msra.mxu0 0.0
    %2602 = vmatprep.subr.mxu0 0.0
    %2603 = vmatpush1.msra.mxu0 0.0
    %2604 = vmatprep.subr.mxu0 0.0
    %2605 = vmatpush1.msra.mxu0 0.0
    %2606 = vmatprep.subr.mxu0 0.0
    %2607 = vmatpush1.msra.mxu0 0.0
    %2608 = vmatprep.subr.mxu0 0.0
    %2609 = vmatpush1.msra.mxu0 0.0
    %2610 = vmatprep.subr.mxu0 0.0
    %2611 = vmatpush1.msra.mxu0 0.0
    %2612 = vmatprep.subr.mxu0 0.0
    %2613 = vmatpush1.msra.mxu0 0.0
    %2614 = vmatprep.subr.mxu0 0.0
    %2615 = vmatpush1.msra.mxu0 0.0
    %2616 = vmatprep.subr.mxu0 0.0
    %2617 = vmatpush1.msra.mxu0 0.0
    %2618 = vmatprep.subr.mxu0 0.0
    %2619 = vmatpush1.msra.mxu0 0.0
    %2620 = vmatprep.subr.mxu0 0.0
    %2621 = vmatpush1.msra.mxu0 0.0
    %2622 = vmatprep.subr.mxu0 0.0
    %2623 = vmatpush1.msra.mxu0 0.0
    %2624 = vmatprep.mubr.f32.mxu0 0.0
    %2625 = vmatmul.mubr.f32.gmra.mrb[0].mxu0 %v2558
    %v2626 = vpop.f32.mrb[0].mxu0
    %v2627 = vadd.f32 %v1723, %v2626
    %v2628 = vpop.f32.mrb[0].mxu0
    %2629 = vdwg.mxu0
    %v2630 = vxor.u32 %v2627, 2147483648
    %v2631 = vmul.f32 %v2630, 1.442695
    %v2632 = vpow.pop %v2631
    %v2633 = vadd.f32 %v2632, 1.0
    %v2634 = vrcp.pop %v2633
    %v2635 = vmul.f32 1.0, %v2634
    %v2636 = vtanh.pop %v2627
    %v2637 = vmul.f32 %v2635, %v2433
    %2639 = vrot.lane.b32.xlu0 %v2636, 64
    %v2640 = vpop.permute.xlu0 %2639
    %v2642 = vmul.f32 %v2635, %v2640
    %2644 = vrot.lane.b32.xlu0 %v2642, 32
    %v2645 = vpop.permute.xlu0 %2644
    %v2647 = vadd.f32 %v2637, %v2645
    %v2648 = vtanh.pop %v2647
    %2650 = vrot.lane.b32.xlu0 %v2648, 64
    %v2651 = vpop.permute.xlu0 %2650
    %v2653 = vmul.f32 %v2635, %v2651
    %v2654 = vrot.slane %v2545, 6
    %2655 = vrot.lane.b32.xlu0 %v2654, 32
    %v2656 = vpop.permute.xlu0 %2655
    %v2657 = vsel %vm66, %v2656, 0
    %2659 = vmatprep.subr.mxu0 0.0
    %2660 = vmatpush1.msra.mxu0 %v1706
    %2661 = vmatprep.subr.mxu0 0.0
    %2662 = vmatpush1.msra.mxu0 %v1707
    %2663 = vmatprep.subr.mxu0 0.0
    %2664 = vmatpush1.msra.mxu0 %v1708
    %2665 = vmatprep.subr.mxu0 0.0
    %2666 = vmatpush1.msra.mxu0 %v1709
    %2667 = vmatprep.subr.mxu0 0.0
    %2668 = vmatpush1.msra.mxu0 0.0
    %2669 = vmatprep.subr.mxu0 0.0
    %2670 = vmatpush1.msra.mxu0 0.0
    %2671 = vmatprep.subr.mxu0 0.0
    %2672 = vmatpush1.msra.mxu0 0.0
    %2673 = vmatprep.subr.mxu0 0.0
    %2674 = vmatpush1.msra.mxu0 0.0
    %2675 = vmatprep.subr.mxu0 0.0
    %2676 = vmatpush1.msra.mxu0 0.0
    %2677 = vmatprep.subr.mxu0 0.0
    %2678 = vmatpush1.msra.mxu0 0.0
    %2679 = vmatprep.subr.mxu0 0.0
    %2680 = vmatpush1.msra.mxu0 0.0
    %2681 = vmatprep.subr.mxu0 0.0
    %2682 = vmatpush1.msra.mxu0 0.0
    %2683 = vmatprep.subr.mxu0 0.0
    %2684 = vmatpush1.msra.mxu0 0.0
    %2685 = vmatprep.subr.mxu0 0.0
    %2686 = vmatpush1.msra.mxu0 0.0
    %2687 = vmatprep.subr.mxu0 0.0
    %2688 = vmatpush1.msra.mxu0 0.0
    %2689 = vmatprep.subr.mxu0 0.0
    %2690 = vmatpush1.msra.mxu0 0.0
    %2691 = vmatprep.subr.mxu0 0.0
    %2692 = vmatpush1.msra.mxu0 0.0
    %2693 = vmatprep.subr.mxu0 0.0
    %2694 = vmatpush1.msra.mxu0 0.0
    %2695 = vmatprep.subr.mxu0 0.0
    %2696 = vmatpush1.msra.mxu0 0.0
    %2697 = vmatprep.subr.mxu0 0.0
    %2698 = vmatpush1.msra.mxu0 0.0
    %2699 = vmatprep.subr.mxu0 0.0
    %2700 = vmatpush1.msra.mxu0 0.0
    %2701 = vmatprep.subr.mxu0 0.0
    %2702 = vmatpush1.msra.mxu0 0.0
    %2703 = vmatprep.subr.mxu0 0.0
    %2704 = vmatpush1.msra.mxu0 0.0
    %2705 = vmatprep.subr.mxu0 0.0
    %2706 = vmatpush1.msra.mxu0 0.0
    %2707 = vmatprep.subr.mxu0 0.0
    %2708 = vmatpush1.msra.mxu0 0.0
    %2709 = vmatprep.subr.mxu0 0.0
    %2710 = vmatpush1.msra.mxu0 0.0
    %2711 = vmatprep.subr.mxu0 0.0
    %2712 = vmatpush1.msra.mxu0 0.0
    %2713 = vmatprep.subr.mxu0 0.0
    %2714 = vmatpush1.msra.mxu0 0.0
    %2715 = vmatprep.subr.mxu0 0.0
    %2716 = vmatpush1.msra.mxu0 0.0
    %2717 = vmatprep.subr.mxu0 0.0
    %2718 = vmatpush1.msra.mxu0 0.0
    %2719 = vmatprep.subr.mxu0 0.0
    %2720 = vmatpush1.msra.mxu0 0.0
    %2721 = vmatprep.subr.mxu0 0.0
    %2722 = vmatpush1.msra.mxu0 0.0
    %2723 = vmatprep.mubr.f32.mxu0 0.0
    %2724 = vmatmul.mubr.f32.gmra.mrb[0].mxu0 %v2657
    %v2725 = vpop.f32.mrb[0].mxu0
    %v2726 = vadd.f32 0.0, %v2725
    %v2727 = vpop.f32.mrb[0].mxu0
    %2728 = vdwg.mxu0
    %v2729 = vadd.f32 %v1811, %v2726
    %v2730 = vxor.u32 %v2729, 2147483648
    %v2731 = vmul.f32 %v2730, 1.442695
    %v2732 = vpow.pop %v2731
    %v2733 = vadd.f32 %v2732, 1.0
    %v2734 = vrcp.pop %v2733
    %v2735 = vmul.f32 1.0, %v2734
    %v2736 = vtanh.pop %v2729
    %v2738 = vrot.slane %v2539, 6
    %v2740 = vmul.f32 %v2735, %v2738
    %2742 = vrot.lane.b32.xlu0 %v2736, 64
    %v2743 = vpop.permute.xlu0 %2742
    %v2745 = vmul.f32 %v2735, %v2743
    %2747 = vrot.lane.b32.xlu0 %v2745, 32
    %v2748 = vpop.permute.xlu0 %2747
    %v2750 = vadd.f32 %v2740, %v2748
    %v2751 = vtanh.pop %v2750
    %2753 = vrot.lane.b32.xlu0 %v2751, 64
    %v2754 = vpop.permute.xlu0 %2753
    %v2756 = vmul.f32 %v2735, %v2754
    %2758 = vrot.lane.b32.xlu0 %v2756, 32
    %v2759 = vpop.permute.xlu0 %2758
    %2762 = vrot.lane.b32.xlu0 %v2653, 64
    %v2763 = vpop.permute.xlu0 %2762
    %v2765 = vsel %vm66, %v2759, %v2763
    %v2767 = vsel %vm1917, %v2765, 0
    %2769 = vmatprep.subr.mxu0 0.0
    %2770 = vmatpush1.msra.mxu0 %v1710
    %2771 = vmatprep.subr.mxu0 0.0
    %2772 = vmatpush1.msra.mxu0 %v1711
    %2773 = vmatprep.subr.mxu0 0.0
    %2774 = vmatpush1.msra.mxu0 %v1712
    %2775 = vmatprep.subr.mxu0 0.0
    %2776 = vmatpush1.msra.mxu0 %v1713
    %2777 = vmatprep.subr.mxu0 0.0
    %2778 = vmatpush1.msra.mxu0 %v1714
    %2779 = vmatprep.subr.mxu0 0.0
    %2780 = vmatpush1.msra.mxu0 %v1715
    %2781 = vmatprep.subr.mxu0 0.0
    %2782 = vmatpush1.msra.mxu0 %v1716
    %2783 = vmatprep.subr.mxu0 0.0
    %2784 = vmatpush1.msra.mxu0 %v1717
    %2785 = vmatprep.subr.mxu0 0.0
    %2786 = vmatpush1.msra.mxu0 0.0
    %2787 = vmatprep.subr.mxu0 0.0
    %2788 = vmatpush1.msra.mxu0 0.0
    %2789 = vmatprep.subr.mxu0 0.0
    %2790 = vmatpush1.msra.mxu0 0.0
    %2791 = vmatprep.subr.mxu0 0.0
    %2792 = vmatpush1.msra.mxu0 0.0
    %2793 = vmatprep.subr.mxu0 0.0
    %2794 = vmatpush1.msra.mxu0 0.0
    %2795 = vmatprep.subr.mxu0 0.0
    %2796 = vmatpush1.msra.mxu0 0.0
    %2797 = vmatprep.subr.mxu0 0.0
    %2798 = vmatpush1.msra.mxu0 0.0
    %2799 = vmatprep.subr.mxu0 0.0
    %2800 = vmatpush1.msra.mxu0 0.0
    %2801 = vmatprep.subr.mxu0 0.0
    %2802 = vmatpush1.msra.mxu0 0.0
    %2803 = vmatprep.subr.mxu0 0.0
    %2804 = vmatpush1.msra.mxu0 0.0
    %2805 = vmatprep.subr.mxu0 0.0
    %2806 = vmatpush1.msra.mxu0 0.0
    %2807 = vmatprep.subr.mxu0 0.0
    %2808 = vmatpush1.msra.mxu0 0.0
    %2809 = vmatprep.subr.mxu0 0.0
    %2810 = vmatpush1.msra.mxu0 0.0
    %2811 = vmatprep.subr.mxu0 0.0
    %2812 = vmatpush1.msra.mxu0 0.0
    %2813 = vmatprep.subr.mxu0 0.0
    %2814 = vmatpush1.msra.mxu0 0.0
    %2815 = vmatprep.subr.mxu0 0.0
    %2816 = vmatpush1.msra.mxu0 0.0
    %2817 = vmatprep.subr.mxu0 0.0
    %2818 = vmatpush1.msra.mxu0 0.0
    %2819 = vmatprep.subr.mxu0 0.0
    %2820 = vmatpush1.msra.mxu0 0.0
    %2821 = vmatprep.subr.mxu0 0.0
    %2822 = vmatpush1.msra.mxu0 0.0
    %2823 = vmatprep.subr.mxu0 0.0
    %2824 = vmatpush1.msra.mxu0 0.0
    %2825 = vmatprep.subr.mxu0 0.0
    %2826 = vmatpush1.msra.mxu0 0.0
    %2827 = vmatprep.subr.mxu0 0.0
    %2828 = vmatpush1.msra.mxu0 0.0
    %2829 = vmatprep.subr.mxu0 0.0
    %2830 = vmatpush1.msra.mxu0 0.0
    %2831 = vmatprep.subr.mxu0 0.0
    %2832 = vmatpush1.msra.mxu0 0.0
    %2833 = vmatprep.mubr.f32.mxu0 0.0
    %2834 = vmatmul.mubr.f32.gmra.mrb[0].mxu0 %v2767
    %v2835 = vpop.f32.mrb[0].mxu0
    %v2836 = vadd.f32 %v1723, %v2835
    %v2837 = vpop.f32.mrb[0].mxu0
    %2838 = vdwg.mxu0
    %v2839 = vxor.u32 %v2836, 2147483648
    %v2840 = vmul.f32 %v2839, 1.442695
    %v2841 = vpow.pop %v2840
    %v2842 = vadd.f32 %v2841, 1.0
    %v2843 = vrcp.pop %v2842
    %v2844 = vmul.f32 1.0, %v2843
    %v2845 = vtanh.pop %v2836
    %v2846 = vmul.f32 %v2844, %v2647
    %2848 = vrot.lane.b32.xlu0 %v2845, 64
    %v2849 = vpop.permute.xlu0 %2848
    %v2851 = vmul.f32 %v2844, %v2849
    %2853 = vrot.lane.b32.xlu0 %v2851, 32
    %v2854 = vpop.permute.xlu0 %2853
    %v2856 = vadd.f32 %v2846, %v2854
    %v2857 = vtanh.pop %v2856
    %2859 = vrot.lane.b32.xlu0 %v2857, 64
    %v2860 = vpop.permute.xlu0 %2859
    %v2862 = vmul.f32 %v2844, %v2860
    %v2863 = vsel %vm66, %v2759, 0
    %2865 = vmatprep.subr.mxu0 0.0
    %2866 = vmatpush1.msra.mxu0 %v1706
    %2867 = vmatprep.subr.mxu0 0.0
    %2868 = vmatpush1.msra.mxu0 %v1707
    %2869 = vmatprep.subr.mxu0 0.0
    %2870 = vmatpush1.msra.mxu0 %v1708
    %2871 = vmatprep.subr.mxu0 0.0
    %2872 = vmatpush1.msra.mxu0 %v1709
    %2873 = vmatprep.subr.mxu0 0.0
    %2874 = vmatpush1.msra.mxu0 0.0
    %2875 = vmatprep.subr.mxu0 0.0
    %2876 = vmatpush1.msra.mxu0 0.0
    %2877 = vmatprep.subr.mxu0 0.0
    %2878 = vmatpush1.msra.mxu0 0.0
    %2879 = vmatprep.subr.mxu0 0.0
    %2880 = vmatpush1.msra.mxu0 0.0
    %2881 = vmatprep.subr.mxu0 0.0
    %2882 = vmatpush1.msra.mxu0 0.0
    %2883 = vmatprep.subr.mxu0 0.0
    %2884 = vmatpush1.msra.mxu0 0.0
    %2885 = vmatprep.subr.mxu0 0.0
    %2886 = vmatpush1.msra.mxu0 0.0
    %2887 = vmatprep.subr.mxu0 0.0
    %2888 = vmatpush1.msra.mxu0 0.0
    %2889 = vmatprep.subr.mxu0 0.0
    %2890 = vmatpush1.msra.mxu0 0.0
    %2891 = vmatprep.subr.mxu0 0.0
    %2892 = vmatpush1.msra.mxu0 0.0
    %2893 = vmatprep.subr.mxu0 0.0
    %2894 = vmatpush1.msra.mxu0 0.0
    %2895 = vmatprep.subr.mxu0 0.0
    %2896 = vmatpush1.msra.mxu0 0.0
    %2897 = vmatprep.subr.mxu0 0.0
    %2898 = vmatpush1.msra.mxu0 0.0
    %2899 = vmatprep.subr.mxu0 0.0
    %2900 = vmatpush1.msra.mxu0 0.0
    %2901 = vmatprep.subr.mxu0 0.0
    %2902 = vmatpush1.msra.mxu0 0.0
    %2903 = vmatprep.subr.mxu0 0.0
    %2904 = vmatpush1.msra.mxu0 0.0
    %2905 = vmatprep.subr.mxu0 0.0
    %2906 = vmatpush1.msra.mxu0 0.0
    %2907 = vmatprep.subr.mxu0 0.0
    %2908 = vmatpush1.msra.mxu0 0.0
    %2909 = vmatprep.subr.mxu0 0.0
    %2910 = vmatpush1.msra.mxu0 0.0
    %2911 = vmatprep.subr.mxu0 0.0
    %2912 = vmatpush1.msra.mxu0 0.0
    %2913 = vmatprep.subr.mxu0 0.0
    %2914 = vmatpush1.msra.mxu0 0.0
    %2915 = vmatprep.subr.mxu0 0.0
    %2916 = vmatpush1.msra.mxu0 0.0
    %2917 = vmatprep.subr.mxu0 0.0
    %2918 = vmatpush1.msra.mxu0 0.0
    %2919 = vmatprep.subr.mxu0 0.0
    %2920 = vmatpush1.msra.mxu0 0.0
    %2921 = vmatprep.subr.mxu0 0.0
    %2922 = vmatpush1.msra.mxu0 0.0
    %2923 = vmatprep.subr.mxu0 0.0
    %2924 = vmatpush1.msra.mxu0 0.0
    %2925 = vmatprep.subr.mxu0 0.0
    %2926 = vmatpush1.msra.mxu0 0.0
    %2927 = vmatprep.subr.mxu0 0.0
    %2928 = vmatpush1.msra.mxu0 0.0
    %2929 = vmatprep.mubr.f32.mxu0 0.0
    %2930 = vmatmul.mubr.f32.gmra.mrb[0].mxu0 %v2863
    %v2931 = vpop.f32.mrb[0].mxu0
    %v2932 = vadd.f32 0.0, %v2931
    %v2933 = vpop.f32.mrb[0].mxu0
    %2934 = vdwg.mxu0
    %v2936 = vrot.slane %v2932, 6
    %v2938 = vadd.f32 %v1811, %v2936
    %v2939 = vxor.u32 %v2938, 2147483648
    %v2940 = vmul.f32 %v2939, 1.442695
    %v2941 = vpow.pop %v2940
    %v2942 = vadd.f32 %v2941, 1.0
    %v2943 = vrcp.pop %v2942
    %v2944 = vmul.f32 1.0, %v2943
    %v2945 = vtanh.pop %v2938
    %v2947 = vrot.slane %v2750, 6
    %v2949 = vmul.f32 %v2944, %v2947
    %2951 = vrot.lane.b32.xlu0 %v2945, 64
    %v2952 = vpop.permute.xlu0 %2951
    %v2954 = vmul.f32 %v2944, %v2952
    %2956 = vrot.lane.b32.xlu0 %v2954, 32
    %v2957 = vpop.permute.xlu0 %2956
    %v2959 = vadd.f32 %v2949, %v2957
    %v2960 = vtanh.pop %v2959
    %2962 = vrot.lane.b32.xlu0 %v2960, 64
    %v2963 = vpop.permute.xlu0 %2962
    %v2965 = vmul.f32 %v2944, %v2963
    %2967 = vrot.lane.b32.xlu0 %v2965, 32
    %v2968 = vpop.permute.xlu0 %2967
    %v2971 = vrot.slane %v2862, 6
    %2972 = vrot.lane.b32.xlu0 %v2971, 64
    %v2973 = vpop.permute.xlu0 %2972
    %v2975 = vsel %vm66, %v2968, %v2973
    %v2977 = vrot.slane %v2975, 2
    %v2978 = vsel %vm1917, %v2977, 0
    %2980 = vmatprep.subr.mxu0 0.0
    %2981 = vmatpush1.msra.mxu0 %v1710
    %2982 = vmatprep.subr.mxu0 0.0
    %2983 = vmatpush1.msra.mxu0 %v1711
    %2984 = vmatprep.subr.mxu0 0.0
    %2985 = vmatpush1.msra.mxu0 %v1712
    %2986 = vmatprep.subr.mxu0 0.0
    %2987 = vmatpush1.msra.mxu0 %v1713
    %2988 = vmatprep.subr.mxu0 0.0
    %2989 = vmatpush1.msra.mxu0 %v1714
    %2990 = vmatprep.subr.mxu0 0.0
    %2991 = vmatpush1.msra.mxu0 %v1715
    %2992 = vmatprep.subr.mxu0 0.0
    %2993 = vmatpush1.msra.mxu0 %v1716
    %2994 = vmatprep.subr.mxu0 0.0
    %2995 = vmatpush1.msra.mxu0 %v1717
    %2996 = vmatprep.subr.mxu0 0.0
    %2997 = vmatpush1.msra.mxu0 0.0
    %2998 = vmatprep.subr.mxu0 0.0
    %2999 = vmatpush1.msra.mxu0 0.0
    %3000 = vmatprep.subr.mxu0 0.0
    %3001 = vmatpush1.msra.mxu0 0.0
    %3002 = vmatprep.subr.mxu0 0.0
    %3003 = vmatpush1.msra.mxu0 0.0
    %3004 = vmatprep.subr.mxu0 0.0
    %3005 = vmatpush1.msra.mxu0 0.0
    %3006 = vmatprep.subr.mxu0 0.0
    %3007 = vmatpush1.msra.mxu0 0.0
    %3008 = vmatprep.subr.mxu0 0.0
    %3009 = vmatpush1.msra.mxu0 0.0
    %3010 = vmatprep.subr.mxu0 0.0
    %3011 = vmatpush1.msra.mxu0 0.0
    %3012 = vmatprep.subr.mxu0 0.0
    %3013 = vmatpush1.msra.mxu0 0.0
    %3014 = vmatprep.subr.mxu0 0.0
    %3015 = vmatpush1.msra.mxu0 0.0
    %3016 = vmatprep.subr.mxu0 0.0
    %3017 = vmatpush1.msra.mxu0 0.0
    %3018 = vmatprep.subr.mxu0 0.0
    %3019 = vmatpush1.msra.mxu0 0.0
    %3020 = vmatprep.subr.mxu0 0.0
    %3021 = vmatpush1.msra.mxu0 0.0
    %3022 = vmatprep.subr.mxu0 0.0
    %3023 = vmatpush1.msra.mxu0 0.0
    %3024 = vmatprep.subr.mxu0 0.0
    %3025 = vmatpush1.msra.mxu0 0.0
    %3026 = vmatprep.subr.mxu0 0.0
    %3027 = vmatpush1.msra.mxu0 0.0
    %3028 = vmatprep.subr.mxu0 0.0
    %3029 = vmatpush1.msra.mxu0 0.0
    %3030 = vmatprep.subr.mxu0 0.0
    %3031 = vmatpush1.msra.mxu0 0.0
    %3032 = vmatprep.subr.mxu0 0.0
    %3033 = vmatpush1.msra.mxu0 0.0
    %3034 = vmatprep.subr.mxu0 0.0
    %3035 = vmatpush1.msra.mxu0 0.0
    %3036 = vmatprep.subr.mxu0 0.0
    %3037 = vmatpush1.msra.mxu0 0.0
    %3038 = vmatprep.subr.mxu0 0.0
    %3039 = vmatpush1.msra.mxu0 0.0
    %3040 = vmatprep.subr.mxu0 0.0
    %3041 = vmatpush1.msra.mxu0 0.0
    %3042 = vmatprep.subr.mxu0 0.0
    %3043 = vmatpush1.msra.mxu0 0.0
    %3044 = vmatprep.mubr.f32.mxu0 0.0
    %3045 = vmatmul.mubr.f32.gmra.mrb[0].mxu0 %v2978
    %v3046 = vpop.f32.mrb[0].mxu0
    %v3047 = vadd.f32 %v1723, %v3046
    %v3048 = vpop.f32.mrb[0].mxu0
    %3049 = vdwg.mxu0
    %v3050 = vxor.u32 %v3047, 2147483648
    %v3051 = vmul.f32 %v3050, 1.442695
    %v3052 = vpow.pop %v3051
    %v3053 = vadd.f32 %v3052, 1.0
    %v3054 = vrcp.pop %v3053
    %v3055 = vmul.f32 1.0, %v3054
    %v3056 = vtanh.pop %v3047
    %v3057 = vmul.f32 %v3055, %v2856
    %3059 = vrot.lane.b32.xlu0 %v3056, 64
    %v3060 = vpop.permute.xlu0 %3059
    %v3062 = vmul.f32 %v3055, %v3060
    %3064 = vrot.lane.b32.xlu0 %v3062, 32
    %v3065 = vpop.permute.xlu0 %3064
    %v3067 = vadd.f32 %v3057, %v3065
    %v3068 = vtanh.pop %v3067
    %3070 = vrot.lane.b32.xlu0 %v3068, 64
    %v3071 = vpop.permute.xlu0 %3070
    %v3073 = vmul.f32 %v3055, %v3071
    %v3074 = vrot.slane %v2965, 2
    %3075 = vrot.lane.b32.xlu0 %v3074, 32
    %v3076 = vpop.permute.xlu0 %3075
    %v3077 = vsel %vm66, %v3076, 0
    %3079 = vmatprep.subr.mxu0 0.0
    %3080 = vmatpush1.msra.mxu0 %v1706
    %3081 = vmatprep.subr.mxu0 0.0
    %3082 = vmatpush1.msra.mxu0 %v1707
    %3083 = vmatprep.subr.mxu0 0.0
    %3084 = vmatpush1.msra.mxu0 %v1708
    %3085 = vmatprep.subr.mxu0 0.0
    %3086 = vmatpush1.msra.mxu0 %v1709
    %3087 = vmatprep.subr.mxu0 0.0
    %3088 = vmatpush1.msra.mxu0 0.0
    %3089 = vmatprep.subr.mxu0 0.0
    %3090 = vmatpush1.msra.mxu0 0.0
    %3091 = vmatprep.subr.mxu0 0.0
    %3092 = vmatpush1.msra.mxu0 0.0
    %3093 = vmatprep.subr.mxu0 0.0
    %3094 = vmatpush1.msra.mxu0 0.0
    %3095 = vmatprep.subr.mxu0 0.0
    %3096 = vmatpush1.msra.mxu0 0.0
    %3097 = vmatprep.subr.mxu0 0.0
    %3098 = vmatpush1.msra.mxu0 0.0
    %3099 = vmatprep.subr.mxu0 0.0
    %3100 = vmatpush1.msra.mxu0 0.0
    %3101 = vmatprep.subr.mxu0 0.0
    %3102 = vmatpush1.msra.mxu0 0.0
    %3103 = vmatprep.subr.mxu0 0.0
    %3104 = vmatpush1.msra.mxu0 0.0
    %3105 = vmatprep.subr.mxu0 0.0
    %3106 = vmatpush1.msra.mxu0 0.0
    %3107 = vmatprep.subr.mxu0 0.0
    %3108 = vmatpush1.msra.mxu0 0.0
    %3109 = vmatprep.subr.mxu0 0.0
    %3110 = vmatpush1.msra.mxu0 0.0
    %3111 = vmatprep.subr.mxu0 0.0
    %3112 = vmatpush1.msra.mxu0 0.0
    %3113 = vmatprep.subr.mxu0 0.0
    %3114 = vmatpush1.msra.mxu0 0.0
    %3115 = vmatprep.subr.mxu0 0.0
    %3116 = vmatpush1.msra.mxu0 0.0
    %3117 = vmatprep.subr.mxu0 0.0
    %3118 = vmatpush1.msra.mxu0 0.0
    %3119 = vmatprep.subr.mxu0 0.0
    %3120 = vmatpush1.msra.mxu0 0.0
    %3121 = vmatprep.subr.mxu0 0.0
    %3122 = vmatpush1.msra.mxu0 0.0
    %3123 = vmatprep.subr.mxu0 0.0
    %3124 = vmatpush1.msra.mxu0 0.0
    %3125 = vmatprep.subr.mxu0 0.0
    %3126 = vmatpush1.msra.mxu0 0.0
    %3127 = vmatprep.subr.mxu0 0.0
    %3128 = vmatpush1.msra.mxu0 0.0
    %3129 = vmatprep.subr.mxu0 0.0
    %3130 = vmatpush1.msra.mxu0 0.0
    %3131 = vmatprep.subr.mxu0 0.0
    %3132 = vmatpush1.msra.mxu0 0.0
    %3133 = vmatprep.subr.mxu0 0.0
    %3134 = vmatpush1.msra.mxu0 0.0
    %3135 = vmatprep.subr.mxu0 0.0
    %3136 = vmatpush1.msra.mxu0 0.0
    %3137 = vmatprep.subr.mxu0 0.0
    %3138 = vmatpush1.msra.mxu0 0.0
    %3139 = vmatprep.subr.mxu0 0.0
    %3140 = vmatpush1.msra.mxu0 0.0
    %3141 = vmatprep.subr.mxu0 0.0
    %3142 = vmatpush1.msra.mxu0 0.0
    %3143 = vmatprep.mubr.f32.mxu0 0.0
    %3144 = vmatmul.mubr.f32.gmra.mrb[0].mxu0 %v3077
    %v3145 = vpop.f32.mrb[0].mxu0
    %v3146 = vadd.f32 0.0, %v3145
    %v3147 = vpop.f32.mrb[0].mxu0
    %3148 = vdwg.mxu0
    %v3150 = vrot.slane %v3146, 4
    %v3152 = vadd.f32 %v1811, %v3150
    %v3153 = vxor.u32 %v3152, 2147483648
    %v3154 = vmul.f32 %v3153, 1.442695
    %v3155 = vpow.pop %v3154
    %v3156 = vadd.f32 %v3155, 1.0
    %v3157 = vrcp.pop %v3156
    %v3158 = vmul.f32 1.0, %v3157
    %v3159 = vtanh.pop %v3152
    %v3161 = vrot.slane %v2959, 6
    %v3163 = vmul.f32 %v3158, %v3161
    %3165 = vrot.lane.b32.xlu0 %v3159, 64
    %v3166 = vpop.permute.xlu0 %3165
    %v3168 = vmul.f32 %v3158, %v3166
    %3170 = vrot.lane.b32.xlu0 %v3168, 32
    %v3171 = vpop.permute.xlu0 %3170
    %v3173 = vadd.f32 %v3163, %v3171
    %v3174 = vtanh.pop %v3173
    %3176 = vrot.lane.b32.xlu0 %v3174, 64
    %v3177 = vpop.permute.xlu0 %3176
    %v3179 = vmul.f32 %v3158, %v3177
    %3181 = vrot.lane.b32.xlu0 %v3179, 32
    %v3182 = vpop.permute.xlu0 %3181
    %v3185 = vrot.slane %v3073, 4
    %3186 = vrot.lane.b32.xlu0 %v3185, 64
    %v3187 = vpop.permute.xlu0 %3186
    %v3189 = vsel %vm66, %v3182, %v3187
    %v3191 = vrot.slane %v3189, 4
    %v3192 = vsel %vm1917, %v3191, 0
    %3194 = vmatprep.subr.mxu0 0.0
    %3195 = vmatpush1.msra.mxu0 %v1710
    %3196 = vmatprep.subr.mxu0 0.0
    %3197 = vmatpush1.msra.mxu0 %v1711
    %3198 = vmatprep.subr.mxu0 0.0
    %3199 = vmatpush1.msra.mxu0 %v1712
    %3200 = vmatprep.subr.mxu0 0.0
    %3201 = vmatpush1.msra.mxu0 %v1713
    %3202 = vmatprep.subr.mxu0 0.0
    %3203 = vmatpush1.msra.mxu0 %v1714
    %3204 = vmatprep.subr.mxu0 0.0
    %3205 = vmatpush1.msra.mxu0 %v1715
    %3206 = vmatprep.subr.mxu0 0.0
    %3207 = vmatpush1.msra.mxu0 %v1716
    %3208 = vmatprep.subr.mxu0 0.0
    %3209 = vmatpush1.msra.mxu0 %v1717
    %3210 = vmatprep.subr.mxu0 0.0
    %3211 = vmatpush1.msra.mxu0 0.0
    %3212 = vmatprep.subr.mxu0 0.0
    %3213 = vmatpush1.msra.mxu0 0.0
    %3214 = vmatprep.subr.mxu0 0.0
    %3215 = vmatpush1.msra.mxu0 0.0
    %3216 = vmatprep.subr.mxu0 0.0
    %3217 = vmatpush1.msra.mxu0 0.0
    %3218 = vmatprep.subr.mxu0 0.0
    %3219 = vmatpush1.msra.mxu0 0.0
    %3220 = vmatprep.subr.mxu0 0.0
    %3221 = vmatpush1.msra.mxu0 0.0
    %3222 = vmatprep.subr.mxu0 0.0
    %3223 = vmatpush1.msra.mxu0 0.0
    %3224 = vmatprep.subr.mxu0 0.0
    %3225 = vmatpush1.msra.mxu0 0.0
    %3226 = vmatprep.subr.mxu0 0.0
    %3227 = vmatpush1.msra.mxu0 0.0
    %3228 = vmatprep.subr.mxu0 0.0
    %3229 = vmatpush1.msra.mxu0 0.0
    %3230 = vmatprep.subr.mxu0 0.0
    %3231 = vmatpush1.msra.mxu0 0.0
    %3232 = vmatprep.subr.mxu0 0.0
    %3233 = vmatpush1.msra.mxu0 0.0
    %3234 = vmatprep.subr.mxu0 0.0
    %3235 = vmatpush1.msra.mxu0 0.0
    %3236 = vmatprep.subr.mxu0 0.0
    %3237 = vmatpush1.msra.mxu0 0.0
    %3238 = vmatprep.subr.mxu0 0.0
    %3239 = vmatpush1.msra.mxu0 0.0
    %3240 = vmatprep.subr.mxu0 0.0
    %3241 = vmatpush1.msra.mxu0 0.0
    %3242 = vmatprep.subr.mxu0 0.0
    %3243 = vmatpush1.msra.mxu0 0.0
    %3244 = vmatprep.subr.mxu0 0.0
    %3245 = vmatpush1.msra.mxu0 0.0
    %3246 = vmatprep.subr.mxu0 0.0
    %3247 = vmatpush1.msra.mxu0 0.0
    %3248 = vmatprep.subr.mxu0 0.0
    %3249 = vmatpush1.msra.mxu0 0.0
    %3250 = vmatprep.subr.mxu0 0.0
    %3251 = vmatpush1.msra.mxu0 0.0
    %3252 = vmatprep.subr.mxu0 0.0
    %3253 = vmatpush1.msra.mxu0 0.0
    %3254 = vmatprep.subr.mxu0 0.0
    %3255 = vmatpush1.msra.mxu0 0.0
    %3256 = vmatprep.subr.mxu0 0.0
    %3257 = vmatpush1.msra.mxu0 0.0
    %3258 = vmatprep.mubr.f32.mxu0 0.0
    %3259 = vmatmul.mubr.f32.gmra.mrb[0].mxu0 %v3192
    %v3260 = vpop.f32.mrb[0].mxu0
    %v3261 = vadd.f32 %v1723, %v3260
    %v3262 = vpop.f32.mrb[0].mxu0
    %3263 = vdwg.mxu0
    %v3264 = vxor.u32 %v3261, 2147483648
    %v3265 = vmul.f32 %v3264, 1.442695
    %v3266 = vpow.pop %v3265
    %v3267 = vadd.f32 %v3266, 1.0
    %v3268 = vrcp.pop %v3267
    %v3269 = vmul.f32 1.0, %v3268
    %v3270 = vtanh.pop %v3261
    %v3271 = vmul.f32 %v3269, %v3067
    %3273 = vrot.lane.b32.xlu0 %v3270, 64
    %v3274 = vpop.permute.xlu0 %3273
    %v3276 = vmul.f32 %v3269, %v3274
    %3278 = vrot.lane.b32.xlu0 %v3276, 32
    %v3279 = vpop.permute.xlu0 %3278
    %v3281 = vadd.f32 %v3271, %v3279
    %v3282 = vtanh.pop %v3281
    %3284 = vrot.lane.b32.xlu0 %v3282, 64
    %v3285 = vpop.permute.xlu0 %3284
    %v3287 = vmul.f32 %v3269, %v3285
    %v3288 = vrot.slane %v3179, 4
    %3289 = vrot.lane.b32.xlu0 %v3288, 32
    %v3290 = vpop.permute.xlu0 %3289
    %v3291 = vsel %vm66, %v3290, 0
    %3293 = vmatprep.subr.mxu0 0.0
    %3294 = vmatpush1.msra.mxu0 %v1706
    %3295 = vmatprep.subr.mxu0 0.0
    %3296 = vmatpush1.msra.mxu0 %v1707
    %3297 = vmatprep.subr.mxu0 0.0
    %3298 = vmatpush1.msra.mxu0 %v1708
    %3299 = vmatprep.subr.mxu0 0.0
    %3300 = vmatpush1.msra.mxu0 %v1709
    %3301 = vmatprep.subr.mxu0 0.0
    %3302 = vmatpush1.msra.mxu0 0.0
    %3303 = vmatprep.subr.mxu0 0.0
    %3304 = vmatpush1.msra.mxu0 0.0
    %3305 = vmatprep.subr.mxu0 0.0
    %3306 = vmatpush1.msra.mxu0 0.0
    %3307 = vmatprep.subr.mxu0 0.0
    %3308 = vmatpush1.msra.mxu0 0.0
    %3309 = vmatprep.subr.mxu0 0.0
    %3310 = vmatpush1.msra.mxu0 0.0
    %3311 = vmatprep.subr.mxu0 0.0
    %3312 = vmatpush1.msra.mxu0 0.0
    %3313 = vmatprep.subr.mxu0 0.0
    %3314 = vmatpush1.msra.mxu0 0.0
    %3315 = vmatprep.subr.mxu0 0.0
    %3316 = vmatpush1.msra.mxu0 0.0
    %3317 = vmatprep.subr.mxu0 0.0
    %3318 = vmatpush1.msra.mxu0 0.0
    %3319 = vmatprep.subr.mxu0 0.0
    %3320 = vmatpush1.msra.mxu0 0.0
    %3321 = vmatprep.subr.mxu0 0.0
    %3322 = vmatpush1.msra.mxu0 0.0
    %3323 = vmatprep.subr.mxu0 0.0
    %3324 = vmatpush1.msra.mxu0 0.0
    %3325 = vmatprep.subr.mxu0 0.0
    %3326 = vmatpush1.msra.mxu0 0.0
    %3327 = vmatprep.subr.mxu0 0.0
    %3328 = vmatpush1.msra.mxu0 0.0
    %3329 = vmatprep.subr.mxu0 0.0
    %3330 = vmatpush1.msra.mxu0 0.0
    %3331 = vmatprep.subr.mxu0 0.0
    %3332 = vmatpush1.msra.mxu0 0.0
    %3333 = vmatprep.subr.mxu0 0.0
    %3334 = vmatpush1.msra.mxu0 0.0
    %3335 = vmatprep.subr.mxu0 0.0
    %3336 = vmatpush1.msra.mxu0 0.0
    %3337 = vmatprep.subr.mxu0 0.0
    %3338 = vmatpush1.msra.mxu0 0.0
    %3339 = vmatprep.subr.mxu0 0.0
    %3340 = vmatpush1.msra.mxu0 0.0
    %3341 = vmatprep.subr.mxu0 0.0
    %3342 = vmatpush1.msra.mxu0 0.0
    %3343 = vmatprep.subr.mxu0 0.0
    %3344 = vmatpush1.msra.mxu0 0.0
    %3345 = vmatprep.subr.mxu0 0.0
    %3346 = vmatpush1.msra.mxu0 0.0
    %3347 = vmatprep.subr.mxu0 0.0
    %3348 = vmatpush1.msra.mxu0 0.0
    %3349 = vmatprep.subr.mxu0 0.0
    %3350 = vmatpush1.msra.mxu0 0.0
    %3351 = vmatprep.subr.mxu0 0.0
    %3352 = vmatpush1.msra.mxu0 0.0
    %3353 = vmatprep.subr.mxu0 0.0
    %3354 = vmatpush1.msra.mxu0 0.0
    %3355 = vmatprep.subr.mxu0 0.0
    %3356 = vmatpush1.msra.mxu0 0.0
    %3357 = vmatprep.mubr.f32.mxu0 0.0
    %3358 = vmatmul.mubr.f32.gmra.mrb[0].mxu0 %v3291
    %v3359 = vpop.f32.mrb[0].mxu0
    %v3360 = vadd.f32 0.0, %v3359
    %v3361 = vpop.f32.mrb[0].mxu0
    %3362 = vdwg.mxu0
    %v3364 = vrot.slane %v3360, 2
    %v3366 = vadd.f32 %v1811, %v3364
    %v3367 = vxor.u32 %v3366, 2147483648
    %v3368 = vmul.f32 %v3367, 1.442695
    %v3369 = vpow.pop %v3368
    %v3370 = vadd.f32 %v3369, 1.0
    %v3371 = vrcp.pop %v3370
    %v3372 = vmul.f32 1.0, %v3371
    %v3373 = vtanh.pop %v3366
    %v3375 = vrot.slane %v3173, 6
    %v3377 = vmul.f32 %v3372, %v3375
    %3379 = vrot.lane.b32.xlu0 %v3373, 64
    %v3380 = vpop.permute.xlu0 %3379
    %v3382 = vmul.f32 %v3372, %v3380
    %3384 = vrot.lane.b32.xlu0 %v3382, 32
    %v3385 = vpop.permute.xlu0 %3384
    %v3387 = vadd.f32 %v3377, %v3385
    %v3388 = vtanh.pop %v3387
    %3390 = vrot.lane.b32.xlu0 %v3388, 64
    %v3391 = vpop.permute.xlu0 %3390
    %v3393 = vmul.f32 %v3372, %v3391
    %3395 = vrot.lane.b32.xlu0 %v3393, 32
    %v3396 = vpop.permute.xlu0 %3395
    %v3399 = vrot.slane %v3287, 2
    %3400 = vrot.lane.b32.xlu0 %v3399, 64
    %v3401 = vpop.permute.xlu0 %3400
    %v3403 = vsel %vm66, %v3396, %v3401
    %v3405 = vrot.slane %v3403, 6
    %v3406 = vsel %vm1917, %v3405, 0
    %3408 = vmatprep.subr.mxu0 0.0
    %3409 = vmatpush1.msra.mxu0 %v1710
    %3410 = vmatprep.subr.mxu0 0.0
    %3411 = vmatpush1.msra.mxu0 %v1711
    %3412 = vmatprep.subr.mxu0 0.0
    %3413 = vmatpush1.msra.mxu0 %v1712
    %3414 = vmatprep.subr.mxu0 0.0
    %3415 = vmatpush1.msra.mxu0 %v1713
    %3416 = vmatprep.subr.mxu0 0.0
    %3417 = vmatpush1.msra.mxu0 %v1714
    %3418 = vmatprep.subr.mxu0 0.0
    %3419 = vmatpush1.msra.mxu0 %v1715
    %3420 = vmatprep.subr.mxu0 0.0
    %3421 = vmatpush1.msra.mxu0 %v1716
    %3422 = vmatprep.subr.mxu0 0.0
    %3423 = vmatpush1.msra.mxu0 %v1717
    %3424 = vmatprep.subr.mxu0 0.0
    %3425 = vmatpush1.msra.mxu0 0.0
    %3426 = vmatprep.subr.mxu0 0.0
    %3427 = vmatpush1.msra.mxu0 0.0
    %3428 = vmatprep.subr.mxu0 0.0
    %3429 = vmatpush1.msra.mxu0 0.0
    %3430 = vmatprep.subr.mxu0 0.0
    %3431 = vmatpush1.msra.mxu0 0.0
    %3432 = vmatprep.subr.mxu0 0.0
    %3433 = vmatpush1.msra.mxu0 0.0
    %3434 = vmatprep.subr.mxu0 0.0
    %3435 = vmatpush1.msra.mxu0 0.0
    %3436 = vmatprep.subr.mxu0 0.0
    %3437 = vmatpush1.msra.mxu0 0.0
    %3438 = vmatprep.subr.mxu0 0.0
    %3439 = vmatpush1.msra.mxu0 0.0
    %3440 = vmatprep.subr.mxu0 0.0
    %3441 = vmatpush1.msra.mxu0 0.0
    %3442 = vmatprep.subr.mxu0 0.0
    %3443 = vmatpush1.msra.mxu0 0.0
    %3444 = vmatprep.subr.mxu0 0.0
    %3445 = vmatpush1.msra.mxu0 0.0
    %3446 = vmatprep.subr.mxu0 0.0
    %3447 = vmatpush1.msra.mxu0 0.0
    %3448 = vmatprep.subr.mxu0 0.0
    %3449 = vmatpush1.msra.mxu0 0.0
    %3450 = vmatprep.subr.mxu0 0.0
    %3451 = vmatpush1.msra.mxu0 0.0
    %3452 = vmatprep.subr.mxu0 0.0
    %3453 = vmatpush1.msra.mxu0 0.0
    %3454 = vmatprep.subr.mxu0 0.0
    %3455 = vmatpush1.msra.mxu0 0.0
    %3456 = vmatprep.subr.mxu0 0.0
    %3457 = vmatpush1.msra.mxu0 0.0
    %3458 = vmatprep.subr.mxu0 0.0
    %3459 = vmatpush1.msra.mxu0 0.0
    %3460 = vmatprep.subr.mxu0 0.0
    %3461 = vmatpush1.msra.mxu0 0.0
    %3462 = vmatprep.subr.mxu0 0.0
    %3463 = vmatpush1.msra.mxu0 0.0
    %3464 = vmatprep.subr.mxu0 0.0
    %3465 = vmatpush1.msra.mxu0 0.0
    %3466 = vmatprep.subr.mxu0 0.0
    %3467 = vmatpush1.msra.mxu0 0.0
    %3468 = vmatprep.subr.mxu0 0.0
    %3469 = vmatpush1.msra.mxu0 0.0
    %3470 = vmatprep.subr.mxu0 0.0
    %3471 = vmatpush1.msra.mxu0 0.0
    %3472 = vmatprep.mubr.f32.mxu0 0.0
    %3473 = vmatmul.mubr.f32.gmra.mrb[0].mxu0 %v3406
    %v3474 = vpop.f32.mrb[0].mxu0
    %v3475 = vadd.f32 %v1723, %v3474
    %v3476 = vpop.f32.mrb[0].mxu0
    %3477 = vdwg.mxu0
    %v3478 = vxor.u32 %v3475, 2147483648
    %v3479 = vmul.f32 %v3478, 1.442695
    %v3480 = vpow.pop %v3479
    %v3481 = vadd.f32 %v3480, 1.0
    %v3482 = vrcp.pop %v3481
    %v3483 = vmul.f32 1.0, %v3482
    %v3484 = vtanh.pop %v3475
    %v3485 = vmul.f32 %v3483, %v3281
    %3487 = vrot.lane.b32.xlu0 %v3484, 64
    %v3488 = vpop.permute.xlu0 %3487
    %v3490 = vmul.f32 %v3483, %v3488
    %3492 = vrot.lane.b32.xlu0 %v3490, 32
    %v3493 = vpop.permute.xlu0 %3492
    %v3495 = vadd.f32 %v3485, %v3493
    %v3496 = vtanh.pop %v3495
    %3498 = vrot.lane.b32.xlu0 %v3496, 64
    %v3499 = vpop.permute.xlu0 %3498
    %v3501 = vmul.f32 %v3483, %v3499
    %v3502 = vrot.slane %v2225, 6
    %v3504 = vrot.slane %v2439, 4
    %v3506 = vrot.slane %v2653, 2
    %v3508 = vrot.slane %v3073, 6
    %v3510 = vrot.slane %v3287, 4
    %v3513 = vrot.slane %v3501, 2
    %vm3515 = vcmask 1041408
    %v3516 = vsel %vm3515, %v2014, %v3502
    %vm3517 = vcmask 1043456
    %v3518 = vsel %vm3517, %v3516, %v3504
    %vm3519 = vcmask 1045504
    %v3520 = vsel %vm3519, %v3518, %v3506
    %v3521 = vsel %vm3515, %v2862, %v3508
    %v3522 = vsel %vm3517, %v3521, %v3510
    %v3523 = vsel %vm3519, %v3522, %v3513
    %v3524 = vlaneseq
    %v3525 = vshrl.u32 %v3524, 7
    %v3526 = vsub.s32 0, %v3525
    %v3527 = vrot.slane %v1728, %v3526
    %3530 = vrot.lane.b32.xlu0 %v3520, 32
    %v3531 = vpop.permute.xlu0 %3530
    %3532 = vrot.lane.b32.xlu0 %v3523, 32
    %v3533 = vpop.permute.xlu0 %3532
    %v3534 = vsel %vm66, %v3531, 0
    %v3536 = vsel %vm66, %v3533, 0
    %3538 = vmatprep.subr.mxu0 0.0
    %3539 = vmatpush1.msra.mxu0 %v1724
    %3540 = vmatprep.subr.mxu0 0.0
    %3541 = vmatpush1.msra.mxu0 %v1725
    %3542 = vmatprep.subr.mxu0 0.0
    %3543 = vmatpush1.msra.mxu0 %v1726
    %3544 = vmatprep.subr.mxu0 0.0
    %3545 = vmatpush1.msra.mxu0 %v1727
    %3546 = vmatprep.subr.mxu0 0.0
    %3547 = vmatpush1.msra.mxu0 0.0
    %3548 = vmatprep.subr.mxu0 0.0
    %3549 = vmatpush1.msra.mxu0 0.0
    %3550 = vmatprep.subr.mxu0 0.0
    %3551 = vmatpush1.msra.mxu0 0.0
    %3552 = vmatprep.subr.mxu0 0.0
    %3553 = vmatpush1.msra.mxu0 0.0
    %3554 = vmatprep.subr.mxu0 0.0
    %3555 = vmatpush1.msra.mxu0 0.0
    %3556 = vmatprep.subr.mxu0 0.0
    %3557 = vmatpush1.msra.mxu0 0.0
    %3558 = vmatprep.subr.mxu0 0.0
    %3559 = vmatpush1.msra.mxu0 0.0
    %3560 = vmatprep.subr.mxu0 0.0
    %3561 = vmatpush1.msra.mxu0 0.0
    %3562 = vmatprep.subr.mxu0 0.0
    %3563 = vmatpush1.msra.mxu0 0.0
    %3564 = vmatprep.subr.mxu0 0.0
    %3565 = vmatpush1.msra.mxu0 0.0
    %3566 = vmatprep.subr.mxu0 0.0
    %3567 = vmatpush1.msra.mxu0 0.0
    %3568 = vmatprep.subr.mxu0 0.0
    %3569 = vmatpush1.msra.mxu0 0.0
    %3570 = vmatprep.subr.mxu0 0.0
    %3571 = vmatpush1.msra.mxu0 0.0
    %3572 = vmatprep.subr.mxu0 0.0
    %3573 = vmatpush1.msra.mxu0 0.0
    %3574 = vmatprep.subr.mxu0 0.0
    %3575 = vmatpush1.msra.mxu0 0.0
    %3576 = vmatprep.subr.mxu0 0.0
    %3577 = vmatpush1.msra.mxu0 0.0
    %3578 = vmatprep.subr.mxu0 0.0
    %3579 = vmatpush1.msra.mxu0 0.0
    %3580 = vmatprep.subr.mxu0 0.0
    %3581 = vmatpush1.msra.mxu0 0.0
    %3582 = vmatprep.subr.mxu0 0.0
    %3583 = vmatpush1.msra.mxu0 0.0
    %3584 = vmatprep.subr.mxu0 0.0
    %3585 = vmatpush1.msra.mxu0 0.0
    %3586 = vmatprep.subr.mxu0 0.0
    %3587 = vmatpush1.msra.mxu0 0.0
    %3588 = vmatprep.subr.mxu0 0.0
    %3589 = vmatpush1.msra.mxu0 0.0
    %3590 = vmatprep.subr.mxu0 0.0
    %3591 = vmatpush1.msra.mxu0 0.0
    %3592 = vmatprep.subr.mxu0 0.0
    %3593 = vmatpush1.msra.mxu0 0.0
    %3594 = vmatprep.subr.mxu0 0.0
    %3595 = vmatpush1.msra.mxu0 0.0
    %3596 = vmatprep.subr.mxu0 0.0
    %3597 = vmatpush1.msra.mxu0 0.0
    %3598 = vmatprep.subr.mxu0 0.0
    %3599 = vmatpush1.msra.mxu0 0.0
    %3600 = vmatprep.subr.mxu0 0.0
    %3601 = vmatpush1.msra.mxu0 0.0
    %3602 = vmatprep.mubr.f32.mxu0 0.0
    %3603 = vmatmul.mubr.f32.gmra.mrb[0].mxu0 %v3534
    %v3604 = vpop.f32.mrb[0].mxu0
    %v3605 = vadd.f32 %v3527, %v3604
    %v3606 = vpop.f32.mrb[0].mxu0
    %3607 = vmatprep.mubr.f32.mxu0 0.0
    %3608 = vmatmul.mubr.f32.gmra.mrb[0].mxu0 %v3536
    %v3609 = vpop.f32.mrb[0].mxu0
    %v3610 = vadd.f32 %v3527, %v3609
    %v3611 = vpop.f32.mrb[0].mxu0
    %3612 = vdwg.mxu0
    %3613 = vst [vmem:[#allocation4] sm:$0xff] %v3605
    %3614 = vst [vmem:[#allocation4 + $0x8] sm:$0xff] %v3610
    // Predicated region
    $region14: #{tpu_custom_call.1} parent=1 // pred_check
      _
    $region15: #{tpu_custom_call.1} parent=1 // pred_check_branch
      %3616 = sbr.rel (0) target = $region17
    $region16: #{tpu_custom_call.1} parent=1 // pred_region
      %s3618 = ssub.s32 256, 256
      %3619 = vsyncadd [#allocation3], %s3618
      %s3620 = sshll.u32 [#allocation2], 4
      %s3621 = int_to_ptr.vmem [resolvable:$true] %s3620
      %3626 = dma.vmem_to_hbm [thread:$0]  %s3621, 256, %s3, [#allocation3], 128, 128, 8
    $region17: #{tpu_custom_call.1} parent=1 // pred_fallthru
      _
    // Predicated region
    $region18: #{tpu_custom_call.1} parent=1 // pred_check
      _
    $region19: #{tpu_custom_call.1} parent=1 // pred_check_branch
      %3628 = sbr.rel (0) target = $region21
    $region20: #{tpu_custom_call.1} parent=1 // pred_region
      %s3630 = ssub.s32 256, 256
      %3631 = vsyncadd [#allocation5], %s3630
      %s3632 = sshll.u32 [#allocation4], 4
      %s3633 = int_to_ptr.vmem [resolvable:$true] %s3632
      %3638 = dma.vmem_to_hbm [thread:$0]  %s3633, 256, %s4, [#allocation5], 128, 128, 8
    $region21: #{tpu_custom_call.1} parent=1 // pred_fallthru
      _
    // Predicated region
    $region22: #{tpu_custom_call.1} parent=1 // pred_check
      _
    $region23: #{tpu_custom_call.1} parent=1 // pred_check_branch
      %3640 = sbr.rel (0) target = $region25
    $region24: #{tpu_custom_call.1} parent=1 // pred_region
      %3641 = dma.done [#allocation3], 256
    $region25: #{tpu_custom_call.1} parent=1 // pred_fallthru
      _
    // Predicated region
    $region26: #{tpu_custom_call.1} parent=1 // pred_check
      _
    $region27: #{tpu_custom_call.1} parent=1 // pred_check_branch
      %3643 = sbr.rel (0) target = $region29
    $region28: #{tpu_custom_call.1} parent=1 // pred_region
      %3644 = dma.done [#allocation5], 256
    $region29: #{tpu_custom_call.1} parent=1 // pred_fallthru
      _
    %3645 = vsyncpa [#allocation3], 1
    %3646 = vsyncpa [#allocation5], 1

</llo_original>
